<compile_context>
chip_gen: v6e
topology: v6e:2x2x1
jax: 0.10.0
libtpu: 0.0.40
codegen_flags: <defaults>
</compile_context>

<pallas_src>
import functools
import math

import jax
import jax.numpy as jnp
from jax.experimental import pallas as pl
from jax.experimental.pallas import tpu as pltpu


_PARALLEL = pltpu.CompilerParams(dimension_semantics=("parallel",))


def _row2(v):
    """(N,) vector -> (1, N) row for clean VMEM layout."""
    return v.reshape(1, -1)


def _full_spec(arr):
    """Whole-array block replicated across the grid."""
    nd = arr.ndim
    return pl.BlockSpec(arr.shape, lambda i: (0,) * nd)


# ----------------------------- Pallas kernels -------------------------------

def _linear_kernel(x_ref, w_ref, b_ref, o_ref, *, activation):
    x = x_ref[...].astype(w_ref.dtype)                     # bf16 MXU operands
    y = jnp.dot(x, w_ref[...], preferred_element_type=jnp.float32) + b_ref[...]
    if activation == "relu":
        y = jnp.maximum(y, 0.0)
    o_ref[...] = y.astype(o_ref.dtype)


def linear(x, w, b, activation=None):
    """y = act(x @ w + b); shapes here are tiny -> single full-VMEM block."""
    M = x.shape[0]
    N = w.shape[1]
    return pl.pallas_call(
        functools.partial(_linear_kernel, activation=activation),
        out_shape=jax.ShapeDtypeStruct((M, N), jnp.float32),
    )(x, w, _row2(b))


def _sub_pe_kernel(x_ref, w_ref, b_ref, pe_ref, o_ref, *, scale, t_valid):
    """Subsampling output Linear fused with x*sqrt(d)+pe and time padding."""
    y = jnp.dot(x_ref[0].astype(w_ref.dtype), w_ref[...],
                preferred_element_type=jnp.float32) + b_ref[...]   # (T2, D)
    y = y * scale + pe_ref[...]
    o_ref[0, :t_valid, :] = y
    t_pad, d = o_ref.shape[1], o_ref.shape[2]
    if t_valid < t_pad:
        o_ref[0, t_valid:, :] = jnp.zeros((t_pad - t_valid, d), o_ref.dtype)


def subsample_out_posenc(x, w, b, pe, t_pad):
    """x: (B, T2, F2*d) -> linear -> *sqrt(d) + pe -> zero-padded (B, t_pad, d)."""
    B, T, K = x.shape
    D = w.shape[1]
    b2 = _row2(b)
    return pl.pallas_call(
        functools.partial(_sub_pe_kernel, scale=math.sqrt(D), t_valid=T),
        grid=(B,),
        in_specs=[pl.BlockSpec((1, T, K), lambda i: (i, 0, 0)),
                  _full_spec(w), _full_spec(b2), _full_spec(pe)],
        out_specs=pl.BlockSpec((1, t_pad, D), lambda i: (i, 0, 0)),
        out_shape=jax.ShapeDtypeStruct((B, t_pad, D), jnp.float32),
        compiler_params=_PARALLEL,
    )(x, w, b2, pe)


def _block_kernel(x_ref, m_ref, ln1g_ref, ln1b_ref, qkvw_ref, qkvb_ref,
                  ow_ref, ob_ref, ln2g_ref, ln2b_ref, f1w_ref, f1b_ref,
                  f2w_ref, f2b_ref, o_ref, qkv_ref, *, n_heads, eps):
    """One full transformer block, resident in VMEM."""
    x = x_ref[0]                                   # (T, D) f32
    T, D = x.shape
    dk = D // n_heads
    scale = 1.0 / math.sqrt(dk)
    valid = m_ref[0] > 0.5                         # (1, T) key-padding mask

    def ln(z, g, b):
        mu = jnp.mean(z, axis=-1, keepdims=True)
        zc = z - mu
        var = jnp.mean(zc * zc, axis=-1, keepdims=True)
        return zc * jax.lax.rsqrt(var + eps) * g + b

    # ---- pre-LN multi-head self-attention with ONE fused QKV matmul ----
    xn = ln(x, ln1g_ref[...], ln1b_ref[...])
    qkv_ref[...] = (jnp.dot(xn.astype(qkvw_ref.dtype), qkvw_ref[...],
                            preferred_element_type=jnp.float32)
                    + qkvb_ref[...])               # (T, 3D) scratch

    proj = jnp.zeros((T, D), jnp.float32)
    for h in range(n_heads):                       # static unroll over heads
        q = qkv_ref[:, h * dk:(h + 1) * dk]
        k = qkv_ref[:, D + h * dk:D + (h + 1) * dk]
        v = qkv_ref[:, 2 * D + h * dk:2 * D + (h + 1) * dk]
        s = jnp.einsum("qd,kd->qk", q.astype(jnp.bfloat16),
                       k.astype(jnp.bfloat16),
                       preferred_element_type=jnp.float32) * scale     # (T, T)
        s = jnp.where(valid, s, -1e30)
        s = s - jnp.max(s, axis=-1, keepdims=True)
        e = jnp.exp(s)
        p = e * pl.reciprocal(jnp.sum(e, axis=-1, keepdims=True), approx=True)
        p = jnp.where(valid, p, 0.0)               # matches wenet masked_fill(0.)
        oh = jnp.dot(p.astype(jnp.bfloat16), v.astype(jnp.bfloat16),
                     preferred_element_type=jnp.float32)               # (T, dk)
        # concat-free output projection:  att @ Wo == sum_h oh @ Wo[h]
        proj = proj + jnp.dot(oh.astype(ow_ref.dtype), ow_ref[h],
                              preferred_element_type=jnp.float32)
    x1 = x + proj + ob_ref[...]

    # ---- pre-LN position-wise feed-forward ----
    xn2 = ln(x1, ln2g_ref[...], ln2b_ref[...])
    hmid = jnp.dot(xn2.astype(f1w_ref.dtype), f1w_ref[...],
                   preferred_element_type=jnp.float32) + f1b_ref[...]
    hmid = jnp.maximum(hmid, 0.0)
    ff = jnp.dot(hmid.astype(f2w_ref.dtype), f2w_ref[...],
                 preferred_element_type=jnp.float32) + f2b_ref[...]
    o_ref[0] = x1 + ff


def transformer_block(x, mask_f, blk, n_heads, eps=1e-5):
    """x: (B, T_pad, D) f32;  mask_f: (B, 1, T_pad) f32 (1=valid, 0=pad)."""
    B, T, D = x.shape
    args = (x, mask_f,
            _row2(blk["ln1_g"]), _row2(blk["ln1_b"]),
            blk["qkv_w"], _row2(blk["qkv_b"]),
            blk["o_w"], _row2(blk["o_b"]),
            _row2(blk["ln2_g"]), _row2(blk["ln2_b"]),
            blk["ff1_w"], _row2(blk["ff1_b"]),
            blk["ff2_w"], _row2(blk["ff2_b"]))
    in_specs = [pl.BlockSpec((1, T, D), lambda i: (i, 0, 0)),
                pl.BlockSpec((1, 1, T), lambda i: (i, 0, 0))]
    in_specs += [_full_spec(a) for a in args[2:]]
    return pl.pallas_call(
        functools.partial(_block_kernel, n_heads=n_heads, eps=eps),
        grid=(B,),
        in_specs=in_specs,
        out_specs=pl.BlockSpec((1, T, D), lambda i: (i, 0, 0)),
        out_shape=jax.ShapeDtypeStruct((B, T, D), jnp.float32),
        scratch_shapes=[pltpu.VMEM((T, 3 * D), jnp.float32)],
        compiler_params=_PARALLEL,
    )(*args)


def _head_kernel(x_ref, g_ref, b_ref, w_ref, cb_ref,
                 enc_ref, lp_ref, bv_ref, bi_ref, *, beam, eps):
    """Final LayerNorm + CTC linear + log_softmax + iterative top-k."""
    x = x_ref[0]                                   # (T, D)
    mu = jnp.mean(x, axis=-1, keepdims=True)
    xc = x - mu
    var = jnp.mean(xc * xc, axis=-1, keepdims=True)
    xn = xc * jax.lax.rsqrt(var + eps) * g_ref[...] + b_ref[...]
    enc_ref[0] = xn

    logits = jnp.dot(xn.astype(w_ref.dtype), w_ref[...],
                     preferred_element_type=jnp.float32) + cb_ref[...]  # (T, V)
    T, V = logits.shape
    mx = jnp.max(logits, axis=-1, keepdims=True)
    lse = jnp.log(jnp.sum(jnp.exp(logits - mx), axis=-1, keepdims=True)) + mx
    lp = logits - lse
    lp_ref[0] = lp

    vid = jax.lax.broadcasted_iota(jnp.int32, (T, V), 1)
    col = jax.lax.broadcasted_iota(jnp.int32, (T, beam), 1)
    bv = jnp.full((T, beam), -jnp.inf, jnp.float32)
    bi = jnp.zeros((T, beam), jnp.int32)
    work = lp
    for kk in range(beam):                         # static unroll: iterative top-k
        vmax = jnp.max(work, axis=-1, keepdims=True)
        imax = jnp.min(jnp.where(work >= vmax, vid, V), axis=-1, keepdims=True)
        bv = jnp.where(col == kk, vmax, bv)
        bi = jnp.where(col == kk, imax, bi)
        work = jnp.where(vid == imax, -jnp.inf, work)
    bv_ref[0] = bv
    bi_ref[0] = bi


def final_norm_ctc_topk(x, g, b, ctc_w, ctc_b, beam, eps=1e-5):
    B, T, D = x.shape
    V = ctc_w.shape[1]
    assert beam <= V, "beam_size must not exceed vocab size"
    args = (x, _row2(g), _row2(b), ctc_w, _row2(ctc_b))
    in_specs = [pl.BlockSpec((1, T, D), lambda i: (i, 0, 0))]
    in_specs += [_full_spec(a) for a in args[1:]]

    def blk3(n):
        return pl.BlockSpec((1, T, n), lambda i: (i, 0, 0))

    return pl.pallas_call(
        functools.partial(_head_kernel, beam=beam, eps=eps),
        grid=(B,),
        in_specs=in_specs,
        out_specs=(blk3(D), blk3(V), blk3(beam), blk3(beam)),
        out_shape=(jax.ShapeDtypeStruct((B, T, D), jnp.float32),
                   jax.ShapeDtypeStruct((B, T, V), jnp.float32),
                   jax.ShapeDtypeStruct((B, T, beam), jnp.float32),
                   jax.ShapeDtypeStruct((B, T, beam), jnp.int32)),
        compiler_params=_PARALLEL,
    )(*args)


# ------------------------------ JAX glue ------------------------------------
# TODO(synk): the 3x3/stride-2 patch gather (im2col) stays in XLA; at real
# WeNet sizes fold it into the conv-matmul kernel's index_map or use lax.conv.

def im2col_3x3_s2_nhwc(x):
    """x: (B, H, W, C) -> (B*Ho*Wo, 9*C) patches for a valid 3x3 stride-2 conv."""
    B, H, W, C = x.shape
    Ho = (H - 3) // 2 + 1
    Wo = (W - 3) // 2 + 1
    cols = []
    for kh in range(3):
        for kw in range(3):
            cols.append(x[:, kh:kh + 2 * Ho:2, kw:kw + 2 * Wo:2, :])
    p = jnp.concatenate(cols, axis=-1)             # (B, Ho, Wo, 9*C)
    return p.reshape(B * Ho * Wo, 9 * C), Ho, Wo


def sinusoid_pe(length, d_model):
    pos = jnp.arange(length, dtype=jnp.float32)[:, None]
    div = jnp.exp(jnp.arange(0, d_model, 2, dtype=jnp.float32)
                  * (-math.log(10000.0) / d_model))
    pe = jnp.zeros((length, d_model), jnp.float32)
    pe = pe.at[:, 0::2].set(jnp.sin(pos * div))
    pe = pe.at[:, 1::2].set(jnp.cos(pos * div))
    return pe


def init_params(key, d_model, n_heads, ffn, vocab, num_blocks, idim):
    keys = iter(jax.random.split(key, 64))
    dk = d_model // n_heads

    def w(shape, scale=0.05, dtype=jnp.bfloat16):
        return (scale * jax.random.normal(next(keys), shape,
                                          dtype=jnp.float32)).astype(dtype)

    f1 = (idim - 3) // 2 + 1
    f2 = (f1 - 3) // 2 + 1
    params = dict(
        conv1_w=w((9 * 1, d_model)), conv1_b=w((d_model,), dtype=jnp.float32),
        conv2_w=w((9 * d_model, d_model)), conv2_b=w((d_model,), dtype=jnp.float32),
        sub_w=w((f2 * d_model, d_model)), sub_b=w((d_model,), dtype=jnp.float32),
        after_g=jnp.ones((d_model,), jnp.float32),
        after_b=jnp.zeros((d_model,), jnp.float32),
        ctc_w=w((d_model, vocab)), ctc_b=w((vocab,), dtype=jnp.float32),
        blocks=[],
    )
    for _ in range(num_blocks):
        params["blocks"].append(dict(
            ln1_g=jnp.ones((d_model,), jnp.float32),
            ln1_b=jnp.zeros((d_model,), jnp.float32),
            qkv_w=w((d_model, 3 * d_model)),              # fused Q|K|V
            qkv_b=w((3 * d_model,), dtype=jnp.float32),
            o_w=w((n_heads, dk, d_model)),                # per-head Wo slices
            o_b=w((d_model,), dtype=jnp.float32),
            ln2_g=jnp.ones((d_model,), jnp.float32),
            ln2_b=jnp.zeros((d_model,), jnp.float32),
            ff1_w=w((d_model, ffn)), ff1_b=w((ffn,), dtype=jnp.float32),
            ff2_w=w((ffn, d_model)), ff2_b=w((d_model,), dtype=jnp.float32),
        ))
    return params


@functools.partial(jax.jit, static_argnames=("beam_size", "n_heads"))
def encoder_forward(params, speech, speech_lengths, beam_size, n_heads):
    B, L, _ = speech.shape
    d_model = params["conv1_w"].shape[1]

    # ---- Conv2dSubsampling4: two 3x3 stride-2 convs + ReLU (im2col + MXU) ----
    cols1, T1, F1 = im2col_3x3_s2_nhwc(speech[:, :, :, None])     # NHWC, C=1
    h1 = linear(cols1, params["conv1_w"], params["conv1_b"], activation="relu")
    cols2, T2, F2 = im2col_3x3_s2_nhwc(h1.reshape(B, T1, F1, d_model))
    h2 = linear(cols2, params["conv2_w"], params["conv2_b"], activation="relu")
    xt = h2.reshape(B, T2, F2 * d_model)                          # (B,T2,F2*d)

    # ---- subsampling output Linear fused with x*sqrt(d)+pe, padded to T_pad ----
    T_pad = ((T2 + 7) // 8) * 8                                   # sublane multiple
    pe = sinusoid_pe(T2, d_model)
    xf = subsample_out_posenc(xt, params["sub_w"], params["sub_b"], pe, T_pad)

    # ---- padding mask, subsampled exactly as Conv2dSubsampling4 does ----
    mask = (jnp.arange(L)[None, :] < speech_lengths[:, None])[:, None, :]
    sub_mask = mask[:, :, 2::2][:, :, 2::2]                       # (B,1,T2) bool
    mask_f = jnp.pad(sub_mask.astype(jnp.float32),
                     ((0, 0), (0, 0), (0, T_pad - T2)))           # (B,1,T_pad)

    # ---- fused transformer blocks: ONE pallas_call per block ----
    for blk in params["blocks"]:
        xf = transformer_block(xf, mask_f, blk, n_heads)

    # ---- fused final LayerNorm + CTC linear + log_softmax + top-k ----
    enc_p, lp_p, bv_p, bi_p = final_norm_ctc_topk(
        xf, params["after_g"], params["after_b"],
        params["ctc_w"], params["ctc_b"], beam_size)

    encoder_out = enc_p[:, :T2, :]
    ctc_log_probs = lp_p[:, :T2, :]
    beam_log_probs = bv_p[:, :T2, :]
    # TODO(synk): torch.topk returns int64 indices; int32 used here.
    beam_log_probs_idx = bi_p[:, :T2, :]
    encoder_out_lens = jnp.sum(sub_mask[:, 0, :], axis=1).astype(jnp.int32)
    return (encoder_out, encoder_out_lens, ctc_log_probs,
            beam_log_probs, beam_log_probs_idx)


if __name__ == "__main__":
    key = jax.random.PRNGKey(0)
    B, L, IDIM = 2, 64, 16
    D_MODEL, N_HEADS, FFN, VOCAB, NUM_BLOCKS, BEAM = 32, 4, 64, 32, 2, 10

    pkey, skey = jax.random.split(key)
    params = init_params(pkey, D_MODEL, N_HEADS, FFN, VOCAB, NUM_BLOCKS, IDIM)
    speech = jax.random.normal(skey, (B, L, IDIM), dtype=jnp.float32)
    speech_lengths = jnp.array([L, 48], dtype=jnp.int32)

    outs = encoder_forward(params, speech, speech_lengths,
                           beam_size=BEAM, n_heads=N_HEADS)
    jax.block_until_ready(outs)
    enc, lens, ctc_lp, beam_lp, beam_idx = outs
    T2 = 15
    assert enc.shape == (B, T2, D_MODEL)
    assert lens.shape == (B,)
    assert ctc_lp.shape == (B, T2, VOCAB)
    assert beam_lp.shape == (B, T2, BEAM)
    assert beam_idx.shape == (B, T2, BEAM)
    assert bool(jnp.all(jnp.isfinite(enc)))
    assert bool(jnp.all(jnp.isfinite(ctc_lp)))
    print("KERNEL_OK")
</pallas_src>

<mosaic_0001>
module attributes {stable_mosaic.version = 11 : i64} {
  func.func @_linear_kernel(%arg0: memref<434x9xf32, #tpu.memory_space<vmem>>, %arg1: memref<9x32xbf16, #tpu.memory_space<vmem>>, %arg2: memref<1x32xf32, #tpu.memory_space<vmem>>, %arg3: memref<434x32xf32, #tpu.memory_space<vmem>>) attributes {dimension_semantics = [], scalar_prefetch = 0 : i64, scratch_operands = 0 : i64, tpu.core_type = #tpu.core_type<tc>} {
    %c0 = arith.constant 0 : index
    %c0_0 = arith.constant 0 : index
    %0 = vector.load %arg0[%c0, %c0_0] : memref<434x9xf32, #tpu.memory_space<vmem>>, vector<434x9xf32>
    %1 = arith.truncf %0 : vector<434x9xf32> to vector<434x9xbf16>
    %c0_1 = arith.constant 0 : index
    %c0_2 = arith.constant 0 : index
    %2 = vector.load %arg1[%c0_1, %c0_2] : memref<9x32xbf16, #tpu.memory_space<vmem>>, vector<9x32xbf16>
    %cst = arith.constant dense<0.000000e+00> : vector<434x32xf32>
    %3 = tpu.matmul %1, %2, %cst {dimension_numbers = #tpu.dot_dimension_numbers<[1], [0], [0], [1], [0, 0, 1, 1], [], []>} : vector<434x9xbf16>, vector<9x32xbf16>, vector<434x32xf32> -> vector<434x32xf32>
    %c0_3 = arith.constant 0 : index
    %c0_4 = arith.constant 0 : index
    %4 = vector.load %arg2[%c0_3, %c0_4] : memref<1x32xf32, #tpu.memory_space<vmem>>, vector<1x32xf32>
    %5 = vector.broadcast %4 : vector<1x32xf32> to vector<434x32xf32>
    %6 = arith.addf %3, %5 : vector<434x32xf32>
    %cst_5 = arith.constant 0.000000e+00 : f32
    %7 = vector.broadcast %cst_5 : f32 to vector<434x32xf32>
    %8 = arith.maximumf %6, %7 : vector<434x32xf32>
    %c0_6 = arith.constant 0 : index
    %c0_7 = arith.constant 0 : index
    %9 = vector.load %arg3[%c0_6, %c0_7] : memref<434x32xf32, #tpu.memory_space<vmem>>, vector<434x32xf32>
    tpu.vector_store %arg3[%c0_6, %c0_7], %8 {strides = array<i32>} : memref<434x32xf32, #tpu.memory_space<vmem>>, vector<434x32xf32>,
    return
  }
}

module attributes {stable_mosaic.version = 11 : i64} {
  func.func @_linear_kernel(%arg0: memref<90x288xf32, #tpu.memory_space<vmem>>, %arg1: memref<288x32xbf16, #tpu.memory_space<vmem>>, %arg2: memref<1x32xf32, #tpu.memory_space<vmem>>, %arg3: memref<90x32xf32, #tpu.memory_space<vmem>>) attributes {dimension_semantics = [], scalar_prefetch = 0 : i64, scratch_operands = 0 : i64, tpu.core_type = #tpu.core_type<tc>} {
    %c0 = arith.constant 0 : index
    %c0_0 = arith.constant 0 : index
    %0 = vector.load %arg0[%c0, %c0_0] : memref<90x288xf32, #tpu.memory_space<vmem>>, vector<90x288xf32>
    %1 = arith.truncf %0 : vector<90x288xf32> to vector<90x288xbf16>
    %c0_1 = arith.constant 0 : index
    %c0_2 = arith.constant 0 : index
    %2 = vector.load %arg1[%c0_1, %c0_2] : memref<288x32xbf16, #tpu.memory_space<vmem>>, vector<288x32xbf16>
    %cst = arith.constant dense<0.000000e+00> : vector<90x32xf32>
    %3 = tpu.matmul %1, %2, %cst {dimension_numbers = #tpu.dot_dimension_numbers<[1], [0], [0], [1], [0, 0, 1, 1], [], []>} : vector<90x288xbf16>, vector<288x32xbf16>, vector<90x32xf32> -> vector<90x32xf32>
    %c0_3 = arith.constant 0 : index
    %c0_4 = arith.constant 0 : index
    %4 = vector.load %arg2[%c0_3, %c0_4] : memref<1x32xf32, #tpu.memory_space<vmem>>, vector<1x32xf32>
    %5 = vector.broadcast %4 : vector<1x32xf32> to vector<90x32xf32>
    %6 = arith.addf %3, %5 : vector<90x32xf32>
    %cst_5 = arith.constant 0.000000e+00 : f32
    %7 = vector.broadcast %cst_5 : f32 to vector<90x32xf32>
    %8 = arith.maximumf %6, %7 : vector<90x32xf32>
    %c0_6 = arith.constant 0 : index
    %c0_7 = arith.constant 0 : index
    %9 = vector.load %arg3[%c0_6, %c0_7] : memref<90x32xf32, #tpu.memory_space<vmem>>, vector<90x32xf32>
    tpu.vector_store %arg3[%c0_6, %c0_7], %8 {strides = array<i32>} : memref<90x32xf32, #tpu.memory_space<vmem>>, vector<90x32xf32>,
    return
  }
}

module attributes {stable_mosaic.version = 11 : i64} {
  func.func @_sub_pe_kernel(%arg0: i32, %arg1: memref<1x15x96xf32, #tpu.memory_space<vmem>>, %arg2: memref<96x32xbf16, #tpu.memory_space<vmem>>, %arg3: memref<1x32xf32, #tpu.memory_space<vmem>>, %arg4: memref<15x32xf32, #tpu.memory_space<vmem>>, %arg5: memref<1x16x32xf32, #tpu.memory_space<vmem>>) attributes {dimension_semantics = [#tpu.dimension_semantics<parallel>], iteration_bounds = array<i64: 2>, scalar_prefetch = 0 : i64, scratch_operands = 0 : i64, tpu.core_type = #tpu.core_type<tc>, window_params = [{transform_indices = @transform_0, window_bounds = array<i64: 1, 15, 96>}, {pipeline_mode = #tpu.pipeline_mode<synchronous>, transform_indices = @transform_1, window_bounds = array<i64: 96, 32>}, {pipeline_mode = #tpu.pipeline_mode<synchronous>, transform_indices = @transform_2, window_bounds = array<i64: 1, 32>}, {pipeline_mode = #tpu.pipeline_mode<synchronous>, transform_indices = @transform_3, window_bounds = array<i64: 15, 32>}, {transform_indices = @transform_4, window_bounds = array<i64: 1, 16, 32>}]} {
    %c0 = arith.constant 0 : index
    %c0_0 = arith.constant 0 : index
    %c0_1 = arith.constant 0 : index
    %0 = vector.load %arg1[%c0, %c0_0, %c0_1] : memref<1x15x96xf32, #tpu.memory_space<vmem>>, vector<1x15x96xf32>
    %1 = vector.shape_cast %0 : vector<1x15x96xf32> to vector<15x96xf32>
    %2 = arith.truncf %1 : vector<15x96xf32> to vector<15x96xbf16>
    %c0_2 = arith.constant 0 : index
    %c0_3 = arith.constant 0 : index
    %3 = vector.load %arg2[%c0_2, %c0_3] : memref<96x32xbf16, #tpu.memory_space<vmem>>, vector<96x32xbf16>
    %cst = arith.constant dense<0.000000e+00> : vector<15x32xf32>
    %4 = tpu.matmul %2, %3, %cst {dimension_numbers = #tpu.dot_dimension_numbers<[1], [0], [0], [1], [0, 0, 1, 1], [], []>} : vector<15x96xbf16>, vector<96x32xbf16>, vector<15x32xf32> -> vector<15x32xf32>
    %c0_4 = arith.constant 0 : index
    %c0_5 = arith.constant 0 : index
    %5 = vector.load %arg3[%c0_4, %c0_5] : memref<1x32xf32, #tpu.memory_space<vmem>>, vector<1x32xf32>
    %6 = vector.broadcast %5 : vector<1x32xf32> to vector<15x32xf32>
    %7 = arith.addf %4, %6 : vector<15x32xf32>
    %cst_6 = arith.constant 5.65685415 : f32
    %8 = vector.broadcast %cst_6 : f32 to vector<15x32xf32>
    %9 = arith.mulf %7, %8 : vector<15x32xf32>
    %c0_7 = arith.constant 0 : index
    %c0_8 = arith.constant 0 : index
    %10 = vector.load %arg4[%c0_7, %c0_8] : memref<15x32xf32, #tpu.memory_space<vmem>>, vector<15x32xf32>
    %11 = arith.addf %9, %10 : vector<15x32xf32>
    %c0_9 = arith.constant 0 : index
    %c0_10 = arith.constant 0 : index
    %c0_11 = arith.constant 0 : index
    %12 = vector.load %arg5[%c0_9, %c0_10, %c0_11] : memref<1x16x32xf32, #tpu.memory_space<vmem>>, vector<1x15x32xf32>
    %13 = vector.shape_cast %12 : vector<1x15x32xf32> to vector<15x32xf32>
    %14 = vector.shape_cast %11 : vector<15x32xf32> to vector<1x15x32xf32>
    tpu.vector_store %arg5[%c0_9, %c0_10, %c0_11], %14 {strides = array<i32>} : memref<1x16x32xf32, #tpu.memory_space<vmem>>, vector<1x15x32xf32>,
    %cst_12 = arith.constant 0.000000e+00 : f32
    %15 = vector.broadcast %cst_12 : f32 to vector<1x32xf32>
    %c0_13 = arith.constant 0 : index
    %c15 = arith.constant 15 : index
    %c0_14 = arith.constant 0 : index
    %16 = vector.load %arg5[%c0_13, %c15, %c0_14] : memref<1x16x32xf32, #tpu.memory_space<vmem>>, vector<1x1x32xf32>
    %17 = vector.shape_cast %16 : vector<1x1x32xf32> to vector<1x32xf32>
    %18 = vector.shape_cast %15 : vector<1x32xf32> to vector<1x1x32xf32>
    tpu.vector_store %arg5[%c0_13, %c15, %c0_14], %18 {strides = array<i32>} : memref<1x16x32xf32, #tpu.memory_space<vmem>>, vector<1x1x32xf32>,
    return
  }
  func.func @transform_0(%arg0: i32) -> (i32, i32, i32) {
    %c0_i32 = arith.constant 0 : i32
    %c0_i32_0 = arith.constant 0 : i32
    %c0_i32_1 = arith.constant 0 : i32
    return %arg0, %c0_i32, %c0_i32_0 : i32, i32, i32
  }
  func.func @transform_1(%arg0: i32) -> (i32, i32) {
    %c0_i32 = arith.constant 0 : i32
    %c0_i32_0 = arith.constant 0 : i32
    %c0_i32_1 = arith.constant 0 : i32
    return %c0_i32, %c0_i32_0 : i32, i32
  }
  func.func @transform_2(%arg0: i32) -> (i32, i32) {
    %c0_i32 = arith.constant 0 : i32
    %c0_i32_0 = arith.constant 0 : i32
    %c0_i32_1 = arith.constant 0 : i32
    return %c0_i32, %c0_i32_0 : i32, i32
  }
  func.func @transform_3(%arg0: i32) -> (i32, i32) {
    %c0_i32 = arith.constant 0 : i32
    %c0_i32_0 = arith.constant 0 : i32
    %c0_i32_1 = arith.constant 0 : i32
    return %c0_i32, %c0_i32_0 : i32, i32
  }
  func.func @transform_4(%arg0: i32) -> (i32, i32, i32) {
    %c0_i32 = arith.constant 0 : i32
    %c0_i32_0 = arith.constant 0 : i32
    %c0_i32_1 = arith.constant 0 : i32
    return %arg0, %c0_i32, %c0_i32_0 : i32, i32, i32
  }
}

module attributes {stable_mosaic.version = 11 : i64} {
  func.func @_head_kernel(%arg0: i32, %arg1: memref<1x16x32xf32, #tpu.memory_space<vmem>>, %arg2: memref<1x32xf32, #tpu.memory_space<vmem>>, %arg3: memref<1x32xf32, #tpu.memory_space<vmem>>, %arg4: memref<32x32xbf16, #tpu.memory_space<vmem>>, %arg5: memref<1x32xf32, #tpu.memory_space<vmem>>, %arg6: memref<1x16x32xf32, #tpu.memory_space<vmem>>, %arg7: memref<1x16x32xf32, #tpu.memory_space<vmem>>, %arg8: memref<1x16x10xf32, #tpu.memory_space<vmem>>, %arg9: memref<1x16x10xi32, #tpu.memory_space<vmem>>) attributes {dimension_semantics = [#tpu.dimension_semantics<parallel>], iteration_bounds = array<i64: 2>, scalar_prefetch = 0 : i64, scratch_operands = 0 : i64, tpu.core_type = #tpu.core_type<tc>, window_params = [{transform_indices = @transform_0, window_bounds = array<i64: 1, 16, 32>}, {pipeline_mode = #tpu.pipeline_mode<synchronous>, transform_indices = @transform_1, window_bounds = array<i64: 1, 32>}, {pipeline_mode = #tpu.pipeline_mode<synchronous>, transform_indices = @transform_2, window_bounds = array<i64: 1, 32>}, {pipeline_mode = #tpu.pipeline_mode<synchronous>, transform_indices = @transform_3, window_bounds = array<i64: 32, 32>}, {pipeline_mode = #tpu.pipeline_mode<synchronous>, transform_indices = @transform_4, window_bounds = array<i64: 1, 32>}, {transform_indices = @transform_5, window_bounds = array<i64: 1, 16, 32>}, {transform_indices = @transform_6, window_bounds = array<i64: 1, 16, 32>}, {transform_indices = @transform_7, window_bounds = array<i64: 1, 16, 10>}, {transform_indices = @transform_8, window_bounds = array<i64: 1, 16, 10>}]} {
    %c0 = arith.constant 0 : index
    %c0_0 = arith.constant 0 : index
    %c0_1 = arith.constant 0 : index
    %0 = vector.load %arg1[%c0, %c0_0, %c0_1] : memref<1x16x32xf32, #tpu.memory_space<vmem>>, vector<1x16x32xf32>
    %1 = vector.shape_cast %0 : vector<1x16x32xf32> to vector<16x32xf32>
    %cst = arith.constant dense<0.000000e+00> : vector<16xf32>
    %2 = vector.multi_reduction <add>, %1, %cst [1] : vector<16x32xf32> to vector<16xf32>
    %3 = vector.shape_cast %2 : vector<16xf32> to vector<16x1xf32>
    %cst_2 = arith.constant 3.200000e+01 : f32
    %4 = vector.broadcast %cst_2 : f32 to vector<16x1xf32>
    %5 = arith.divf %3, %4 : vector<16x1xf32>
    %6 = vector.broadcast %5 : vector<16x1xf32> to vector<16x32xf32>
    %7 = arith.subf %1, %6 : vector<16x32xf32>
    %8 = arith.mulf %7, %7 : vector<16x32xf32>
    %cst_3 = arith.constant dense<0.000000e+00> : vector<16xf32>
    %9 = vector.multi_reduction <add>, %8, %cst_3 [1] : vector<16x32xf32> to vector<16xf32>
    %10 = vector.shape_cast %9 : vector<16xf32> to vector<16x1xf32>
    %cst_4 = arith.constant 3.200000e+01 : f32
    %11 = vector.broadcast %cst_4 : f32 to vector<16x1xf32>
    %12 = arith.divf %10, %11 : vector<16x1xf32>
    %cst_5 = arith.constant 9.99999974E-6 : f32
    %13 = vector.broadcast %cst_5 : f32 to vector<16x1xf32>
    %14 = arith.addf %12, %13 : vector<16x1xf32>
    %15 = math.rsqrt %14 : vector<16x1xf32>
    %16 = vector.broadcast %15 : vector<16x1xf32> to vector<16x32xf32>
    %17 = arith.mulf %7, %16 : vector<16x32xf32>
    %c0_6 = arith.constant 0 : index
    %c0_7 = arith.constant 0 : index
    %18 = vector.load %arg2[%c0_6, %c0_7] : memref<1x32xf32, #tpu.memory_space<vmem>>, vector<1x32xf32>
    %19 = vector.broadcast %18 : vector<1x32xf32> to vector<16x32xf32>
    %20 = arith.mulf %17, %19 : vector<16x32xf32>
    %c0_8 = arith.constant 0 : index
    %c0_9 = arith.constant 0 : index
    %21 = vector.load %arg3[%c0_8, %c0_9] : memref<1x32xf32, #tpu.memory_space<vmem>>, vector<1x32xf32>
    %22 = vector.broadcast %21 : vector<1x32xf32> to vector<16x32xf32>
    %23 = arith.addf %20, %22 : vector<16x32xf32>
    %c0_10 = arith.constant 0 : index
    %c0_11 = arith.constant 0 : index
    %c0_12 = arith.constant 0 : index
    %24 = vector.load %arg6[%c0_10, %c0_11, %c0_12] : memref<1x16x32xf32, #tpu.memory_space<vmem>>, vector<1x16x32xf32>
    %25 = vector.shape_cast %24 : vector<1x16x32xf32> to vector<16x32xf32>
    %26 = vector.shape_cast %23 : vector<16x32xf32> to vector<1x16x32xf32>
    tpu.vector_store %arg6[%c0_10, %c0_11, %c0_12], %26 {strides = array<i32>} : memref<1x16x32xf32, #tpu.memory_space<vmem>>, vector<1x16x32xf32>,
    %27 = arith.truncf %23 : vector<16x32xf32> to vector<16x32xbf16>
    %c0_13 = arith.constant 0 : index
    %c0_14 = arith.constant 0 : index
    %28 = vector.load %arg4[%c0_13, %c0_14] : memref<32x32xbf16, #tpu.memory_space<vmem>>, vector<32x32xbf16>
    %cst_15 = arith.constant dense<0.000000e+00> : vector<16x32xf32>
    %29 = tpu.matmul %27, %28, %cst_15 {dimension_numbers = #tpu.dot_dimension_numbers<[1], [0], [0], [1], [0, 0, 1, 1], [], []>} : vector<16x32xbf16>, vector<32x32xbf16>, vector<16x32xf32> -> vector<16x32xf32>
    %c0_16 = arith.constant 0 : index
    %c0_17 = arith.constant 0 : index
    %30 = vector.load %arg5[%c0_16, %c0_17] : memref<1x32xf32, #tpu.memory_space<vmem>>, vector<1x32xf32>
    %31 = vector.broadcast %30 : vector<1x32xf32> to vector<16x32xf32>
    %32 = arith.addf %29, %31 : vector<16x32xf32>
    %cst_18 = arith.constant dense<0xFF800000> : vector<16xf32>
    %33 = vector.multi_reduction <maximumf>, %32, %cst_18 [1] : vector<16x32xf32> to vector<16xf32>
    %34 = vector.shape_cast %33 : vector<16xf32> to vector<16x1xf32>
    %35 = vector.broadcast %34 : vector<16x1xf32> to vector<16x32xf32>
    %36 = arith.subf %32, %35 : vector<16x32xf32>
    %37 = math.exp %36 : vector<16x32xf32>
    %cst_19 = arith.constant dense<0.000000e+00> : vector<16xf32>
    %38 = vector.multi_reduction <add>, %37, %cst_19 [1] : vector<16x32xf32> to vector<16xf32>
    %39 = vector.shape_cast %38 : vector<16xf32> to vector<16x1xf32>
    %40 = math.log %39 : vector<16x1xf32>
    %41 = arith.addf %40, %34 : vector<16x1xf32>
    %42 = vector.broadcast %41 : vector<16x1xf32> to vector<16x32xf32>
    %43 = arith.subf %32, %42 : vector<16x32xf32>
    %c0_20 = arith.constant 0 : index
    %c0_21 = arith.constant 0 : index
    %c0_22 = arith.constant 0 : index
    %44 = vector.load %arg7[%c0_20, %c0_21, %c0_22] : memref<1x16x32xf32, #tpu.memory_space<vmem>>, vector<1x16x32xf32>
    %45 = vector.shape_cast %44 : vector<1x16x32xf32> to vector<16x32xf32>
    %46 = vector.shape_cast %43 : vector<16x32xf32> to vector<1x16x32xf32>
    tpu.vector_store %arg7[%c0_20, %c0_21, %c0_22], %46 {strides = array<i32>} : memref<1x16x32xf32, #tpu.memory_space<vmem>>, vector<1x16x32xf32>,
    %47 = tpu.iota {dimensions = array<i32: 1>} : vector<16x32xi32>
    %48 = tpu.iota {dimensions = array<i32: 1>} : vector<16x10xi32>
    %cst_23 = arith.constant 0xFF800000 : f32
    %49 = vector.broadcast %cst_23 : f32 to vector<16x10xf32>
    %c0_i32 = arith.constant 0 : i32
    %50 = vector.broadcast %c0_i32 : i32 to vector<16x10xi32>
    %cst_24 = arith.constant dense<0xFF800000> : vector<16xf32>
    %51 = vector.multi_reduction <maximumf>, %43, %cst_24 [1] : vector<16x32xf32> to vector<16xf32>
    %52 = vector.shape_cast %51 : vector<16xf32> to vector<16x1xf32>
    %53 = vector.broadcast %52 : vector<16x1xf32> to vector<16x32xf32>
    %54 = arith.cmpf oge, %43, %53 : vector<16x32xf32>
    %c32_i32 = arith.constant 32 : i32
    %55 = vector.broadcast %c32_i32 : i32 to vector<16x32xi32>
    %56 = arith.select %54, %47, %55 : vector<16x32xi1>, vector<16x32xi32>
    %cst_25 = arith.constant dense<2147483647> : vector<16xi32>
    %57 = vector.multi_reduction <minsi>, %56, %cst_25 [1] : vector<16x32xi32> to vector<16xi32>
    %58 = vector.shape_cast %57 : vector<16xi32> to vector<16x1xi32>
    %c0_i32_26 = arith.constant 0 : i32
    %59 = vector.broadcast %c0_i32_26 : i32 to vector<16x10xi32>
    %60 = arith.cmpi eq, %48, %59 : vector<16x10xi32>
    %61 = vector.shape_cast %52 : vector<16x1xf32> to vector<16x1xf32>
    %62 = vector.broadcast %61 : vector<16x1xf32> to vector<16x10xf32>
    %63 = arith.select %60, %62, %49 : vector<16x10xi1>, vector<16x10xf32>
    %c0_i32_27 = arith.constant 0 : i32
    %64 = vector.broadcast %c0_i32_27 : i32 to vector<16x10xi32>
    %65 = arith.cmpi eq, %48, %64 : vector<16x10xi32>
    %66 = vector.shape_cast %58 : vector<16x1xi32> to vector<16x1xi32>
    %67 = vector.broadcast %66 : vector<16x1xi32> to vector<16x10xi32>
    %68 = arith.select %65, %67, %50 : vector<16x10xi1>, vector<16x10xi32>
    %69 = vector.broadcast %58 : vector<16x1xi32> to vector<16x32xi32>
    %70 = arith.cmpi eq, %47, %69 : vector<16x32xi32>
    %cst_28 = arith.constant 0xFF800000 : f32
    %71 = vector.broadcast %cst_28 : f32 to vector<16x32xf32>
    %72 = arith.select %70, %71, %43 : vector<16x32xi1>, vector<16x32xf32>
    %cst_29 = arith.constant dense<0xFF800000> : vector<16xf32>
    %73 = vector.multi_reduction <maximumf>, %72, %cst_29 [1] : vector<16x32xf32> to vector<16xf32>
    %74 = vector.shape_cast %73 : vector<16xf32> to vector<16x1xf32>
    %75 = vector.broadcast %74 : vector<16x1xf32> to vector<16x32xf32>
    %76 = arith.cmpf oge, %72, %75 : vector<16x32xf32>
    %c32_i32_30 = arith.constant 32 : i32
    %77 = vector.broadcast %c32_i32_30 : i32 to vector<16x32xi32>
    %78 = arith.select %76, %47, %77 : vector<16x32xi1>, vector<16x32xi32>
    %cst_31 = arith.constant dense<2147483647> : vector<16xi32>
    %79 = vector.multi_reduction <minsi>, %78, %cst_31 [1] : vector<16x32xi32> to vector<16xi32>
    %80 = vector.shape_cast %79 : vector<16xi32> to vector<16x1xi32>
    %c1_i32 = arith.constant 1 : i32
    %81 = vector.broadcast %c1_i32 : i32 to vector<16x10xi32>
    %82 = arith.cmpi eq, %48, %81 : vector<16x10xi32>
    %83 = vector.shape_cast %74 : vector<16x1xf32> to vector<16x1xf32>
    %84 = vector.broadcast %83 : vector<16x1xf32> to vector<16x10xf32>
    %85 = arith.select %82, %84, %63 : vector<16x10xi1>, vector<16x10xf32>
    %c1_i32_32 = arith.constant 1 : i32
    %86 = vector.broadcast %c1_i32_32 : i32 to vector<16x10xi32>
    %87 = arith.cmpi eq, %48, %86 : vector<16x10xi32>
    %88 = vector.shape_cast %80 : vector<16x1xi32> to vector<16x1xi32>
    %89 = vector.broadcast %88 : vector<16x1xi32> to vector<16x10xi32>
    %90 = arith.select %87, %89, %68 : vector<16x10xi1>, vector<16x10xi32>
    %91 = vector.broadcast %80 : vector<16x1xi32> to vector<16x32xi32>
    %92 = arith.cmpi eq, %47, %91 : vector<16x32xi32>
    %cst_33 = arith.constant 0xFF800000 : f32
    %93 = vector.broadcast %cst_33 : f32 to vector<16x32xf32>
    %94 = arith.select %92, %93, %72 : vector<16x32xi1>, vector<16x32xf32>
    %cst_34 = arith.constant dense<0xFF800000> : vector<16xf32>
    %95 = vector.multi_reduction <maximumf>, %94, %cst_34 [1] : vector<16x32xf32> to vector<16xf32>
    %96 = vector.shape_cast %95 : vector<16xf32> to vector<16x1xf32>
    %97 = vector.broadcast %96 : vector<16x1xf32> to vector<16x32xf32>
    %98 = arith.cmpf oge, %94, %97 : vector<16x32xf32>
    %c32_i32_35 = arith.constant 32 : i32
    %99 = vector.broadcast %c32_i32_35 : i32 to vector<16x32xi32>
    %100 = arith.select %98, %47, %99 : vector<16x32xi1>, vector<16x32xi32>
    %cst_36 = arith.constant dense<2147483647> : vector<16xi32>
    %101 = vector.multi_reduction <minsi>, %100, %cst_36 [1] : vector<16x32xi32> to vector<16xi32>
    %102 = vector.shape_cast %101 : vector<16xi32> to vector<16x1xi32>
    %c2_i32 = arith.constant 2 : i32
    %103 = vector.broadcast %c2_i32 : i32 to vector<16x10xi32>
    %104 = arith.cmpi eq, %48, %103 : vector<16x10xi32>
    %105 = vector.shape_cast %96 : vector<16x1xf32> to vector<16x1xf32>
    %106 = vector.broadcast %105 : vector<16x1xf32> to vector<16x10xf32>
    %107 = arith.select %104, %106, %85 : vector<16x10xi1>, vector<16x10xf32>
    %c2_i32_37 = arith.constant 2 : i32
    %108 = vector.broadcast %c2_i32_37 : i32 to vector<16x10xi32>
    %109 = arith.cmpi eq, %48, %108 : vector<16x10xi32>
    %110 = vector.shape_cast %102 : vector<16x1xi32> to vector<16x1xi32>
    %111 = vector.broadcast %110 : vector<16x1xi32> to vector<16x10xi32>
    %112 = arith.select %109, %111, %90 : vector<16x10xi1>, vector<16x10xi32>
    %113 = vector.broadcast %102 : vector<16x1xi32> to vector<16x32xi32>
    %114 = arith.cmpi eq, %47, %113 : vector<16x32xi32>
    %cst_38 = arith.constant 0xFF800000 : f32
    %115 = vector.broadcast %cst_38 : f32 to vector<16x32xf32>
    %116 = arith.select %114, %115, %94 : vector<16x32xi1>, vector<16x32xf32>
    %cst_39 = arith.constant dense<0xFF800000> : vector<16xf32>
    %117 = vector.multi_reduction <maximumf>, %116, %cst_39 [1] : vector<16x32xf32> to vector<16xf32>
    %118 = vector.shape_cast %117 : vector<16xf32> to vector<16x1xf32>
    %119 = vector.broadcast %118 : vector<16x1xf32> to vector<16x32xf32>
    %120 = arith.cmpf oge, %116, %119 : vector<16x32xf32>
    %c32_i32_40 = arith.constant 32 : i32
    %121 = vector.broadcast %c32_i32_40 : i32 to vector<16x32xi32>
    %122 = arith.select %120, %47, %121 : vector<16x32xi1>, vector<16x32xi32>
    %cst_41 = arith.constant dense<2147483647> : vector<16xi32>
    %123 = vector.multi_reduction <minsi>, %122, %cst_41 [1] : vector<16x32xi32> to vector<16xi32>
    %124 = vector.shape_cast %123 : vector<16xi32> to vector<16x1xi32>
    %c3_i32 = arith.constant 3 : i32
    %125 = vector.broadcast %c3_i32 : i32 to vector<16x10xi32>
    %126 = arith.cmpi eq, %48, %125 : vector<16x10xi32>
    %127 = vector.shape_cast %118 : vector<16x1xf32> to vector<16x1xf32>
    %128 = vector.broadcast %127 : vector<16x1xf32> to vector<16x10xf32>
    %129 = arith.select %126, %128, %107 : vector<16x10xi1>, vector<16x10xf32>
    %c3_i32_42 = arith.constant 3 : i32
    %130 = vector.broadcast %c3_i32_42 : i32 to vector<16x10xi32>
    %131 = arith.cmpi eq, %48, %130 : vector<16x10xi32>
    %132 = vector.shape_cast %124 : vector<16x1xi32> to vector<16x1xi32>
    %133 = vector.broadcast %132 : vector<16x1xi32> to vector<16x10xi32>
    %134 = arith.select %131, %133, %112 : vector<16x10xi1>, vector<16x10xi32>
    %135 = vector.broadcast %124 : vector<16x1xi32> to vector<16x32xi32>
    %136 = arith.cmpi eq, %47, %135 : vector<16x32xi32>
    %cst_43 = arith.constant 0xFF800000 : f32
    %137 = vector.broadcast %cst_43 : f32 to vector<16x32xf32>
    %138 = arith.select %136, %137, %116 : vector<16x32xi1>, vector<16x32xf32>
    %cst_44 = arith.constant dense<0xFF800000> : vector<16xf32>
    %139 = vector.multi_reduction <maximumf>, %138, %cst_44 [1] : vector<16x32xf32> to vector<16xf32>
    %140 = vector.shape_cast %139 : vector<16xf32> to vector<16x1xf32>
    %141 = vector.broadcast %140 : vector<16x1xf32> to vector<16x32xf32>
    %142 = arith.cmpf oge, %138, %141 : vector<16x32xf32>
    %c32_i32_45 = arith.constant 32 : i32
    %143 = vector.broadcast %c32_i32_45 : i32 to vector<16x32xi32>
    %144 = arith.select %142, %47, %143 : vector<16x32xi1>, vector<16x32xi32>
    %cst_46 = arith.constant dense<2147483647> : vector<16xi32>
    %145 = vector.multi_reduction <minsi>, %144, %cst_46 [1] : vector<16x32xi32> to vector<16xi32>
    %146 = vector.shape_cast %145 : vector<16xi32> to vector<16x1xi32>
    %c4_i32 = arith.constant 4 : i32
    %147 = vector.broadcast %c4_i32 : i32 to vector<16x10xi32>
    %148 = arith.cmpi eq, %48, %147 : vector<16x10xi32>
    %149 = vector.shape_cast %140 : vector<16x1xf32> to vector<16x1xf32>
    %150 = vector.broadcast %149 : vector<16x1xf32> to vector<16x10xf32>
    %151 = arith.select %148, %150, %129 : vector<16x10xi1>, vector<16x10xf32>
    %c4_i32_47 = arith.constant 4 : i32
    %152 = vector.broadcast %c4_i32_47 : i32 to vector<16x10xi32>
    %153 = arith.cmpi eq, %48, %152 : vector<16x10xi32>
    %154 = vector.shape_cast %146 : vector<16x1xi32> to vector<16x1xi32>
    %155 = vector.broadcast %154 : vector<16x1xi32> to vector<16x10xi32>
    %156 = arith.select %153, %155, %134 : vector<16x10xi1>, vector<16x10xi32>
    %157 = vector.broadcast %146 : vector<16x1xi32> to vector<16x32xi32>
    %158 = arith.cmpi eq, %47, %157 : vector<16x32xi32>
    %cst_48 = arith.constant 0xFF800000 : f32
    %159 = vector.broadcast %cst_48 : f32 to vector<16x32xf32>
    %160 = arith.select %158, %159, %138 : vector<16x32xi1>, vector<16x32xf32>
    %cst_49 = arith.constant dense<0xFF800000> : vector<16xf32>
    %161 = vector.multi_reduction <maximumf>, %160, %cst_49 [1] : vector<16x32xf32> to vector<16xf32>
    %162 = vector.shape_cast %161 : vector<16xf32> to vector<16x1xf32>
    %163 = vector.broadcast %162 : vector<16x1xf32> to vector<16x32xf32>
    %164 = arith.cmpf oge, %160, %163 : vector<16x32xf32>
    %c32_i32_50 = arith.constant 32 : i32
    %165 = vector.broadcast %c32_i32_50 : i32 to vector<16x32xi32>
    %166 = arith.select %164, %47, %165 : vector<16x32xi1>, vector<16x32xi32>
    %cst_51 = arith.constant dense<2147483647> : vector<16xi32>
    %167 = vector.multi_reduction <minsi>, %166, %cst_51 [1] : vector<16x32xi32> to vector<16xi32>
    %168 = vector.shape_cast %167 : vector<16xi32> to vector<16x1xi32>
    %c5_i32 = arith.constant 5 : i32
    %169 = vector.broadcast %c5_i32 : i32 to vector<16x10xi32>
    %170 = arith.cmpi eq, %48, %169 : vector<16x10xi32>
    %171 = vector.shape_cast %162 : vector<16x1xf32> to vector<16x1xf32>
    %172 = vector.broadcast %171 : vector<16x1xf32> to vector<16x10xf32>
    %173 = arith.select %170, %172, %151 : vector<16x10xi1>, vector<16x10xf32>
    %c5_i32_52 = arith.constant 5 : i32
    %174 = vector.broadcast %c5_i32_52 : i32 to vector<16x10xi32>
    %175 = arith.cmpi eq, %48, %174 : vector<16x10xi32>
    %176 = vector.shape_cast %168 : vector<16x1xi32> to vector<16x1xi32>
    %177 = vector.broadcast %176 : vector<16x1xi32> to vector<16x10xi32>
    %178 = arith.select %175, %177, %156 : vector<16x10xi1>, vector<16x10xi32>
    %179 = vector.broadcast %168 : vector<16x1xi32> to vector<16x32xi32>
    %180 = arith.cmpi eq, %47, %179 : vector<16x32xi32>
    %cst_53 = arith.constant 0xFF800000 : f32
    %181 = vector.broadcast %cst_53 : f32 to vector<16x32xf32>
    %182 = arith.select %180, %181, %160 : vector<16x32xi1>, vector<16x32xf32>
    %cst_54 = arith.constant dense<0xFF800000> : vector<16xf32>
    %183 = vector.multi_reduction <maximumf>, %182, %cst_54 [1] : vector<16x32xf32> to vector<16xf32>
    %184 = vector.shape_cast %183 : vector<16xf32> to vector<16x1xf32>
    %185 = vector.broadcast %184 : vector<16x1xf32> to vector<16x32xf32>
    %186 = arith.cmpf oge, %182, %185 : vector<16x32xf32>
    %c32_i32_55 = arith.constant 32 : i32
    %187 = vector.broadcast %c32_i32_55 : i32 to vector<16x32xi32>
    %188 = arith.select %186, %47, %187 : vector<16x32xi1>, vector<16x32xi32>
    %cst_56 = arith.constant dense<2147483647> : vector<16xi32>
    %189 = vector.multi_reduction <minsi>, %188, %cst_56 [1] : vector<16x32xi32> to vector<16xi32>
    %190 = vector.shape_cast %189 : vector<16xi32> to vector<16x1xi32>
    %c6_i32 = arith.constant 6 : i32
    %191 = vector.broadcast %c6_i32 : i32 to vector<16x10xi32>
    %192 = arith.cmpi eq, %48, %191 : vector<16x10xi32>
    %193 = vector.shape_cast %184 : vector<16x1xf32> to vector<16x1xf32>
    %194 = vector.broadcast %193 : vector<16x1xf32> to vector<16x10xf32>
    %195 = arith.select %192, %194, %173 : vector<16x10xi1>, vector<16x10xf32>
    %c6_i32_57 = arith.constant 6 : i32
    %196 = vector.broadcast %c6_i32_57 : i32 to vector<16x10xi32>
    %197 = arith.cmpi eq, %48, %196 : vector<16x10xi32>
    %198 = vector.shape_cast %190 : vector<16x1xi32> to vector<16x1xi32>
    %199 = vector.broadcast %198 : vector<16x1xi32> to vector<16x10xi32>
    %200 = arith.select %197, %199, %178 : vector<16x10xi1>, vector<16x10xi32>
    %201 = vector.broadcast %190 : vector<16x1xi32> to vector<16x32xi32>
    %202 = arith.cmpi eq, %47, %201 : vector<16x32xi32>
    %cst_58 = arith.constant 0xFF800000 : f32
    %203 = vector.broadcast %cst_58 : f32 to vector<16x32xf32>
    %204 = arith.select %202, %203, %182 : vector<16x32xi1>, vector<16x32xf32>
    %cst_59 = arith.constant dense<0xFF800000> : vector<16xf32>
    %205 = vector.multi_reduction <maximumf>, %204, %cst_59 [1] : vector<16x32xf32> to vector<16xf32>
    %206 = vector.shape_cast %205 : vector<16xf32> to vector<16x1xf32>
    %207 = vector.broadcast %206 : vector<16x1xf32> to vector<16x32xf32>
    %208 = arith.cmpf oge, %204, %207 : vector<16x32xf32>
    %c32_i32_60 = arith.constant 32 : i32
    %209 = vector.broadcast %c32_i32_60 : i32 to vector<16x32xi32>
    %210 = arith.select %208, %47, %209 : vector<16x32xi1>, vector<16x32xi32>
    %cst_61 = arith.constant dense<2147483647> : vector<16xi32>
    %211 = vector.multi_reduction <minsi>, %210, %cst_61 [1] : vector<16x32xi32> to vector<16xi32>
    %212 = vector.shape_cast %211 : vector<16xi32> to vector<16x1xi32>
    %c7_i32 = arith.constant 7 : i32
    %213 = vector.broadcast %c7_i32 : i32 to vector<16x10xi32>
    %214 = arith.cmpi eq, %48, %213 : vector<16x10xi32>
    %215 = vector.shape_cast %206 : vector<16x1xf32> to vector<16x1xf32>
    %216 = vector.broadcast %215 : vector<16x1xf32> to vector<16x10xf32>
    %217 = arith.select %214, %216, %195 : vector<16x10xi1>, vector<16x10xf32>
    %c7_i32_62 = arith.constant 7 : i32
    %218 = vector.broadcast %c7_i32_62 : i32 to vector<16x10xi32>
    %219 = arith.cmpi eq, %48, %218 : vector<16x10xi32>
    %220 = vector.shape_cast %212 : vector<16x1xi32> to vector<16x1xi32>
    %221 = vector.broadcast %220 : vector<16x1xi32> to vector<16x10xi32>
    %222 = arith.select %219, %221, %200 : vector<16x10xi1>, vector<16x10xi32>
    %223 = vector.broadcast %212 : vector<16x1xi32> to vector<16x32xi32>
    %224 = arith.cmpi eq, %47, %223 : vector<16x32xi32>
    %cst_63 = arith.constant 0xFF800000 : f32
    %225 = vector.broadcast %cst_63 : f32 to vector<16x32xf32>
    %226 = arith.select %224, %225, %204 : vector<16x32xi1>, vector<16x32xf32>
    %cst_64 = arith.constant dense<0xFF800000> : vector<16xf32>
    %227 = vector.multi_reduction <maximumf>, %226, %cst_64 [1] : vector<16x32xf32> to vector<16xf32>
    %228 = vector.shape_cast %227 : vector<16xf32> to vector<16x1xf32>
    %229 = vector.broadcast %228 : vector<16x1xf32> to vector<16x32xf32>
    %230 = arith.cmpf oge, %226, %229 : vector<16x32xf32>
    %c32_i32_65 = arith.constant 32 : i32
    %231 = vector.broadcast %c32_i32_65 : i32 to vector<16x32xi32>
    %232 = arith.select %230, %47, %231 : vector<16x32xi1>, vector<16x32xi32>
    %cst_66 = arith.constant dense<2147483647> : vector<16xi32>
    %233 = vector.multi_reduction <minsi>, %232, %cst_66 [1] : vector<16x32xi32> to vector<16xi32>
    %234 = vector.shape_cast %233 : vector<16xi32> to vector<16x1xi32>
    %c8_i32 = arith.constant 8 : i32
    %235 = vector.broadcast %c8_i32 : i32 to vector<16x10xi32>
    %236 = arith.cmpi eq, %48, %235 : vector<16x10xi32>
    %237 = vector.shape_cast %228 : vector<16x1xf32> to vector<16x1xf32>
    %238 = vector.broadcast %237 : vector<16x1xf32> to vector<16x10xf32>
    %239 = arith.select %236, %238, %217 : vector<16x10xi1>, vector<16x10xf32>
    %c8_i32_67 = arith.constant 8 : i32
    %240 = vector.broadcast %c8_i32_67 : i32 to vector<16x10xi32>
    %241 = arith.cmpi eq, %48, %240 : vector<16x10xi32>
    %242 = vector.shape_cast %234 : vector<16x1xi32> to vector<16x1xi32>
    %243 = vector.broadcast %242 : vector<16x1xi32> to vector<16x10xi32>
    %244 = arith.select %241, %243, %222 : vector<16x10xi1>, vector<16x10xi32>
    %245 = vector.broadcast %234 : vector<16x1xi32> to vector<16x32xi32>
    %246 = arith.cmpi eq, %47, %245 : vector<16x32xi32>
    %cst_68 = arith.constant 0xFF800000 : f32
    %247 = vector.broadcast %cst_68 : f32 to vector<16x32xf32>
    %248 = arith.select %246, %247, %226 : vector<16x32xi1>, vector<16x32xf32>
    %cst_69 = arith.constant dense<0xFF800000> : vector<16xf32>
    %249 = vector.multi_reduction <maximumf>, %248, %cst_69 [1] : vector<16x32xf32> to vector<16xf32>
    %250 = vector.shape_cast %249 : vector<16xf32> to vector<16x1xf32>
    %251 = vector.broadcast %250 : vector<16x1xf32> to vector<16x32xf32>
    %252 = arith.cmpf oge, %248, %251 : vector<16x32xf32>
    %c32_i32_70 = arith.constant 32 : i32
    %253 = vector.broadcast %c32_i32_70 : i32 to vector<16x32xi32>
    %254 = arith.select %252, %47, %253 : vector<16x32xi1>, vector<16x32xi32>
    %cst_71 = arith.constant dense<2147483647> : vector<16xi32>
    %255 = vector.multi_reduction <minsi>, %254, %cst_71 [1] : vector<16x32xi32> to vector<16xi32>
    %256 = vector.shape_cast %255 : vector<16xi32> to vector<16x1xi32>
    %c9_i32 = arith.constant 9 : i32
    %257 = vector.broadcast %c9_i32 : i32 to vector<16x10xi32>
    %258 = arith.cmpi eq, %48, %257 : vector<16x10xi32>
    %259 = vector.shape_cast %250 : vector<16x1xf32> to vector<16x1xf32>
    %260 = vector.broadcast %259 : vector<16x1xf32> to vector<16x10xf32>
    %261 = arith.select %258, %260, %239 : vector<16x10xi1>, vector<16x10xf32>
    %c9_i32_72 = arith.constant 9 : i32
    %262 = vector.broadcast %c9_i32_72 : i32 to vector<16x10xi32>
    %263 = arith.cmpi eq, %48, %262 : vector<16x10xi32>
    %264 = vector.shape_cast %256 : vector<16x1xi32> to vector<16x1xi32>
    %265 = vector.broadcast %264 : vector<16x1xi32> to vector<16x10xi32>
    %266 = arith.select %263, %265, %244 : vector<16x10xi1>, vector<16x10xi32>
    %c0_73 = arith.constant 0 : index
    %c0_74 = arith.constant 0 : index
    %c0_75 = arith.constant 0 : index
    %267 = vector.load %arg8[%c0_73, %c0_74, %c0_75] : memref<1x16x10xf32, #tpu.memory_space<vmem>>, vector<1x16x10xf32>
    %268 = vector.shape_cast %267 : vector<1x16x10xf32> to vector<16x10xf32>
    %269 = vector.shape_cast %261 : vector<16x10xf32> to vector<1x16x10xf32>
    tpu.vector_store %arg8[%c0_73, %c0_74, %c0_75], %269 {strides = array<i32>} : memref<1x16x10xf32, #tpu.memory_space<vmem>>, vector<1x16x10xf32>,
    %c0_76 = arith.constant 0 : index
    %c0_77 = arith.constant 0 : index
    %c0_78 = arith.constant 0 : index
    %270 = vector.load %arg9[%c0_76, %c0_77, %c0_78] : memref<1x16x10xi32, #tpu.memory_space<vmem>>, vector<1x16x10xi32>
    %271 = vector.shape_cast %270 : vector<1x16x10xi32> to vector<16x10xi32>
    %272 = vector.shape_cast %266 : vector<16x10xi32> to vector<1x16x10xi32>
    tpu.vector_store %arg9[%c0_76, %c0_77, %c0_78], %272 {strides = array<i32>} : memref<1x16x10xi32, #tpu.memory_space<vmem>>, vector<1x16x10xi32>,
    return
  }
  func.func @transform_0(%arg0: i32) -> (i32, i32, i32) {
    %c0_i32 = arith.constant 0 : i32
    %c0_i32_0 = arith.constant 0 : i32
    %c0_i32_1 = arith.constant 0 : i32
    return %arg0, %c0_i32, %c0_i32_0 : i32, i32, i32
  }
  func.func @transform_1(%arg0: i32) -> (i32, i32) {
    %c0_i32 = arith.constant 0 : i32
    %c0_i32_0 = arith.constant 0 : i32
    %c0_i32_1 = arith.constant 0 : i32
    return %c0_i32, %c0_i32_0 : i32, i32
  }
  func.func @transform_2(%arg0: i32) -> (i32, i32) {
    %c0_i32 = arith.constant 0 : i32
    %c0_i32_0 = arith.constant 0 : i32
    %c0_i32_1 = arith.constant 0 : i32
    return %c0_i32, %c0_i32_0 : i32, i32
  }
  func.func @transform_3(%arg0: i32) -> (i32, i32) {
    %c0_i32 = arith.constant 0 : i32
    %c0_i32_0 = arith.constant 0 : i32
    %c0_i32_1 = arith.constant 0 : i32
    return %c0_i32, %c0_i32_0 : i32, i32
  }
  func.func @transform_4(%arg0: i32) -> (i32, i32) {
    %c0_i32 = arith.constant 0 : i32
    %c0_i32_0 = arith.constant 0 : i32
    %c0_i32_1 = arith.constant 0 : i32
    return %c0_i32, %c0_i32_0 : i32, i32
  }
  func.func @transform_5(%arg0: i32) -> (i32, i32, i32) {
    %c0_i32 = arith.constant 0 : i32
    %c0_i32_0 = arith.constant 0 : i32
    %c0_i32_1 = arith.constant 0 : i32
    return %arg0, %c0_i32, %c0_i32_0 : i32, i32, i32
  }
  func.func @transform_6(%arg0: i32) -> (i32, i32, i32) {
    %c0_i32 = arith.constant 0 : i32
    %c0_i32_0 = arith.constant 0 : i32
    %c0_i32_1 = arith.constant 0 : i32
    return %arg0, %c0_i32, %c0_i32_0 : i32, i32, i32
  }
  func.func @transform_7(%arg0: i32) -> (i32, i32, i32) {
    %c0_i32 = arith.constant 0 : i32
    %c0_i32_0 = arith.constant 0 : i32
    %c0_i32_1 = arith.constant 0 : i32
    return %arg0, %c0_i32, %c0_i32_0 : i32, i32, i32
  }
  func.func @transform_8(%arg0: i32) -> (i32, i32, i32) {
    %c0_i32 = arith.constant 0 : i32
    %c0_i32_0 = arith.constant 0 : i32
    %c0_i32_1 = arith.constant 0 : i32
    return %arg0, %c0_i32, %c0_i32_0 : i32, i32, i32
  }
}

module attributes {stable_mosaic.version = 11 : i64} {
  func.func @_block_kernel(%arg0: i32, %arg1: memref<1x16x32xf32, #tpu.memory_space<vmem>>, %arg2: memref<1x1x16xf32, #tpu.memory_space<vmem>>, %arg3: memref<1x32xf32, #tpu.memory_space<vmem>>, %arg4: memref<1x32xf32, #tpu.memory_space<vmem>>, %arg5: memref<32x96xbf16, #tpu.memory_space<vmem>>, %arg6: memref<1x96xf32, #tpu.memory_space<vmem>>, %arg7: memref<4x8x32xbf16, #tpu.memory_space<vmem>>, %arg8: memref<1x32xf32, #tpu.memory_space<vmem>>, %arg9: memref<1x32xf32, #tpu.memory_space<vmem>>, %arg10: memref<1x32xf32, #tpu.memory_space<vmem>>, %arg11: memref<32x64xbf16, #tpu.memory_space<vmem>>, %arg12: memref<1x64xf32, #tpu.memory_space<vmem>>, %arg13: memref<64x32xbf16, #tpu.memory_space<vmem>>, %arg14: memref<1x32xf32, #tpu.memory_space<vmem>>, %arg15: memref<1x16x32xf32, #tpu.memory_space<vmem>>, %arg16: memref<16x96xf32, #tpu.memory_space<vmem>>) attributes {dimension_semantics = [#tpu.dimension_semantics<parallel>], iteration_bounds = array<i64: 2>, scalar_prefetch = 0 : i64, scratch_operands = 1 : i64, tpu.core_type = #tpu.core_type<tc>, window_params = [{transform_indices = @transform_0, window_bounds = array<i64: 1, 16, 32>}, {transform_indices = @transform_1, window_bounds = array<i64: 1, 1, 16>}, {pipeline_mode = #tpu.pipeline_mode<synchronous>, transform_indices = @transform_2, window_bounds = array<i64: 1, 32>}, {pipeline_mode = #tpu.pipeline_mode<synchronous>, transform_indices = @transform_3, window_bounds = array<i64: 1, 32>}, {pipeline_mode = #tpu.pipeline_mode<synchronous>, transform_indices = @transform_4, window_bounds = array<i64: 32, 96>}, {pipeline_mode = #tpu.pipeline_mode<synchronous>, transform_indices = @transform_5, window_bounds = array<i64: 1, 96>}, {pipeline_mode = #tpu.pipeline_mode<synchronous>, transform_indices = @transform_6, window_bounds = array<i64: 4, 8, 32>}, {pipeline_mode = #tpu.pipeline_mode<synchronous>, transform_indices = @transform_7, window_bounds = array<i64: 1, 32>}, {pipeline_mode = #tpu.pipeline_mode<synchronous>, transform_indices = @transform_8, window_bounds = array<i64: 1, 32>}, {pipeline_mode = #tpu.pipeline_mode<synchronous>, transform_indices = @transform_9, window_bounds = array<i64: 1, 32>}, {pipeline_mode = #tpu.pipeline_mode<synchronous>, transform_indices = @transform_10, window_bounds = array<i64: 32, 64>}, {pipeline_mode = #tpu.pipeline_mode<synchronous>, transform_indices = @transform_11, window_bounds = array<i64: 1, 64>}, {pipeline_mode = #tpu.pipeline_mode<synchronous>, transform_indices = @transform_12, window_bounds = array<i64: 64, 32>}, {pipeline_mode = #tpu.pipeline_mode<synchronous>, transform_indices = @transform_13, window_bounds = array<i64: 1, 32>}, {transform_indices = @transform_14, window_bounds = array<i64: 1, 16, 32>}]} {
    %c0 = arith.constant 0 : index
    %c0_0 = arith.constant 0 : index
    %c0_1 = arith.constant 0 : index
    %0 = vector.load %arg1[%c0, %c0_0, %c0_1] : memref<1x16x32xf32, #tpu.memory_space<vmem>>, vector<1x16x32xf32>
    %1 = vector.shape_cast %0 : vector<1x16x32xf32> to vector<16x32xf32>
    %c0_2 = arith.constant 0 : index
    %c0_3 = arith.constant 0 : index
    %c0_4 = arith.constant 0 : index
    %2 = vector.load %arg2[%c0_2, %c0_3, %c0_4] : memref<1x1x16xf32, #tpu.memory_space<vmem>>, vector<1x1x16xf32>
    %3 = vector.shape_cast %2 : vector<1x1x16xf32> to vector<1x16xf32>
    %cst = arith.constant 5.000000e-01 : f32
    %4 = vector.broadcast %cst : f32 to vector<1x16xf32>
    %5 = arith.cmpf ogt, %3, %4 : vector<1x16xf32>
    %c0_5 = arith.constant 0 : index
    %c0_6 = arith.constant 0 : index
    %6 = vector.load %arg3[%c0_5, %c0_6] : memref<1x32xf32, #tpu.memory_space<vmem>>, vector<1x32xf32>
    %c0_7 = arith.constant 0 : index
    %c0_8 = arith.constant 0 : index
    %7 = vector.load %arg4[%c0_7, %c0_8] : memref<1x32xf32, #tpu.memory_space<vmem>>, vector<1x32xf32>
    %cst_9 = arith.constant dense<0.000000e+00> : vector<16xf32>
    %8 = vector.multi_reduction <add>, %1, %cst_9 [1] : vector<16x32xf32> to vector<16xf32>
    %9 = vector.shape_cast %8 : vector<16xf32> to vector<16x1xf32>
    %cst_10 = arith.constant 3.200000e+01 : f32
    %10 = vector.broadcast %cst_10 : f32 to vector<16x1xf32>
    %11 = arith.divf %9, %10 : vector<16x1xf32>
    %12 = vector.broadcast %11 : vector<16x1xf32> to vector<16x32xf32>
    %13 = arith.subf %1, %12 : vector<16x32xf32>
    %14 = arith.mulf %13, %13 : vector<16x32xf32>
    %cst_11 = arith.constant dense<0.000000e+00> : vector<16xf32>
    %15 = vector.multi_reduction <add>, %14, %cst_11 [1] : vector<16x32xf32> to vector<16xf32>
    %16 = vector.shape_cast %15 : vector<16xf32> to vector<16x1xf32>
    %cst_12 = arith.constant 3.200000e+01 : f32
    %17 = vector.broadcast %cst_12 : f32 to vector<16x1xf32>
    %18 = arith.divf %16, %17 : vector<16x1xf32>
    %cst_13 = arith.constant 9.99999974E-6 : f32
    %19 = vector.broadcast %cst_13 : f32 to vector<16x1xf32>
    %20 = arith.addf %18, %19 : vector<16x1xf32>
    %21 = math.rsqrt %20 : vector<16x1xf32>
    %22 = vector.broadcast %21 : vector<16x1xf32> to vector<16x32xf32>
    %23 = arith.mulf %13, %22 : vector<16x32xf32>
    %24 = vector.broadcast %6 : vector<1x32xf32> to vector<16x32xf32>
    %25 = arith.mulf %23, %24 : vector<16x32xf32>
    %26 = vector.broadcast %7 : vector<1x32xf32> to vector<16x32xf32>
    %27 = arith.addf %25, %26 : vector<16x32xf32>
    %28 = arith.truncf %27 : vector<16x32xf32> to vector<16x32xbf16>
    %c0_14 = arith.constant 0 : index
    %c0_15 = arith.constant 0 : index
    %29 = vector.load %arg5[%c0_14, %c0_15] : memref<32x96xbf16, #tpu.memory_space<vmem>>, vector<32x96xbf16>
    %cst_16 = arith.constant dense<0.000000e+00> : vector<16x96xf32>
    %30 = tpu.matmul %28, %29, %cst_16 {dimension_numbers = #tpu.dot_dimension_numbers<[1], [0], [0], [1], [0, 0, 1, 1], [], []>} : vector<16x32xbf16>, vector<32x96xbf16>, vector<16x96xf32> -> vector<16x96xf32>
    %c0_17 = arith.constant 0 : index
    %c0_18 = arith.constant 0 : index
    %31 = vector.load %arg6[%c0_17, %c0_18] : memref<1x96xf32, #tpu.memory_space<vmem>>, vector<1x96xf32>
    %32 = vector.broadcast %31 : vector<1x96xf32> to vector<16x96xf32>
    %33 = arith.addf %30, %32 : vector<16x96xf32>
    %c0_19 = arith.constant 0 : index
    %c0_20 = arith.constant 0 : index
    %34 = vector.load %arg16[%c0_19, %c0_20] : memref<16x96xf32, #tpu.memory_space<vmem>>, vector<16x96xf32>
    tpu.vector_store %arg16[%c0_19, %c0_20], %33 {strides = array<i32>} : memref<16x96xf32, #tpu.memory_space<vmem>>, vector<16x96xf32>,
    %cst_21 = arith.constant 0.000000e+00 : f32
    %35 = vector.broadcast %cst_21 : f32 to vector<16x32xf32>
    %c0_22 = arith.constant 0 : index
    %c0_23 = arith.constant 0 : index
    %36 = vector.load %arg16[%c0_22, %c0_23] : memref<16x96xf32, #tpu.memory_space<vmem>>, vector<16x8xf32>
    %c0_24 = arith.constant 0 : index
    %c32 = arith.constant 32 : index
    %37 = vector.load %arg16[%c0_24, %c32] : memref<16x96xf32, #tpu.memory_space<vmem>>, vector<16x8xf32>
    %c0_25 = arith.constant 0 : index
    %c64 = arith.constant 64 : index
    %38 = vector.load %arg16[%c0_25, %c64] : memref<16x96xf32, #tpu.memory_space<vmem>>, vector<16x8xf32>
    %39 = arith.truncf %36 : vector<16x8xf32> to vector<16x8xbf16>
    %40 = arith.truncf %37 : vector<16x8xf32> to vector<16x8xbf16>
    "tpu.trace_start"() <{level = 10 : i32, message = "qd,kd->qk"}> : () -> ()
    %cst_26 = arith.constant dense<0.000000e+00> : vector<16x16xf32>
    %41 = tpu.matmul %39, %40, %cst_26 {dimension_numbers = #tpu.dot_dimension_numbers<[1], [1], [0], [0], [0, 0, 1, 0], [], []>} : vector<16x8xbf16>, vector<16x8xbf16>, vector<16x16xf32> -> vector<16x16xf32>
    "tpu.trace_stop"() : () -> ()
    %cst_27 = arith.constant 0.353553385 : f32
    %42 = vector.broadcast %cst_27 : f32 to vector<16x16xf32>
    %43 = arith.mulf %41, %42 : vector<16x16xf32>
    %cst_28 = arith.constant -1.000000e+30 : f32
    %44 = vector.shape_cast %5 : vector<1x16xi1> to vector<1x16xi1>
    %45 = vector.broadcast %44 : vector<1x16xi1> to vector<16x16xi1>
    %46 = vector.broadcast %cst_28 : f32 to vector<16x16xf32>
    %47 = arith.select %45, %43, %46 : vector<16x16xi1>, vector<16x16xf32>
    %cst_29 = arith.constant dense<0xFF800000> : vector<16xf32>
    %48 = vector.multi_reduction <maximumf>, %47, %cst_29 [1] : vector<16x16xf32> to vector<16xf32>
    %49 = vector.shape_cast %48 : vector<16xf32> to vector<16x1xf32>
    %50 = vector.broadcast %49 : vector<16x1xf32> to vector<16x16xf32>
    %51 = arith.subf %47, %50 : vector<16x16xf32>
    %52 = math.exp %51 : vector<16x16xf32>
    %cst_30 = arith.constant dense<0.000000e+00> : vector<16xf32>
    %53 = vector.multi_reduction <add>, %52, %cst_30 [1] : vector<16x16xf32> to vector<16xf32>
    %54 = vector.shape_cast %53 : vector<16xf32> to vector<16x1xf32>
    %55 = tpu.reciprocal %54 {approx = true} : vector<16x1xf32> -> vector<16x1xf32>
    %56 = vector.broadcast %55 : vector<16x1xf32> to vector<16x16xf32>
    %57 = arith.mulf %52, %56 : vector<16x16xf32>
    %cst_31 = arith.constant 0.000000e+00 : f32
    %58 = vector.shape_cast %5 : vector<1x16xi1> to vector<1x16xi1>
    %59 = vector.broadcast %58 : vector<1x16xi1> to vector<16x16xi1>
    %60 = vector.broadcast %cst_31 : f32 to vector<16x16xf32>
    %61 = arith.select %59, %57, %60 : vector<16x16xi1>, vector<16x16xf32>
    %62 = arith.truncf %61 : vector<16x16xf32> to vector<16x16xbf16>
    %63 = arith.truncf %38 : vector<16x8xf32> to vector<16x8xbf16>
    %cst_32 = arith.constant dense<0.000000e+00> : vector<16x8xf32>
    %64 = tpu.matmul %62, %63, %cst_32 {dimension_numbers = #tpu.dot_dimension_numbers<[1], [0], [0], [1], [0, 0, 1, 1], [], []>} : vector<16x16xbf16>, vector<16x8xbf16>, vector<16x8xf32> -> vector<16x8xf32>
    %65 = arith.truncf %64 : vector<16x8xf32> to vector<16x8xbf16>
    %c0_33 = arith.constant 0 : index
    %c0_34 = arith.constant 0 : index
    %c0_35 = arith.constant 0 : index
    %66 = vector.load %arg7[%c0_33, %c0_34, %c0_35] : memref<4x8x32xbf16, #tpu.memory_space<vmem>>, vector<1x8x32xbf16>
    %67 = vector.shape_cast %66 : vector<1x8x32xbf16> to vector<8x32xbf16>
    %cst_36 = arith.constant dense<0.000000e+00> : vector<16x32xf32>
    %68 = tpu.matmul %65, %67, %cst_36 {dimension_numbers = #tpu.dot_dimension_numbers<[1], [0], [0], [1], [0, 0, 1, 1], [], []>} : vector<16x8xbf16>, vector<8x32xbf16>, vector<16x32xf32> -> vector<16x32xf32>
    %69 = arith.addf %35, %68 : vector<16x32xf32>
    %c0_37 = arith.constant 0 : index
    %c8 = arith.constant 8 : index
    %70 = vector.load %arg16[%c0_37, %c8] : memref<16x96xf32, #tpu.memory_space<vmem>>, vector<16x8xf32>
    %c0_38 = arith.constant 0 : index
    %c40 = arith.constant 40 : index
    %71 = vector.load %arg16[%c0_38, %c40] : memref<16x96xf32, #tpu.memory_space<vmem>>, vector<16x8xf32>
    %c0_39 = arith.constant 0 : index
    %c72 = arith.constant 72 : index
    %72 = vector.load %arg16[%c0_39, %c72] : memref<16x96xf32, #tpu.memory_space<vmem>>, vector<16x8xf32>
    %73 = arith.truncf %70 : vector<16x8xf32> to vector<16x8xbf16>
    %74 = arith.truncf %71 : vector<16x8xf32> to vector<16x8xbf16>
    "tpu.trace_start"() <{level = 10 : i32, message = "qd,kd->qk"}> : () -> ()
    %cst_40 = arith.constant dense<0.000000e+00> : vector<16x16xf32>
    %75 = tpu.matmul %73, %74, %cst_40 {dimension_numbers = #tpu.dot_dimension_numbers<[1], [1], [0], [0], [0, 0, 1, 0], [], []>} : vector<16x8xbf16>, vector<16x8xbf16>, vector<16x16xf32> -> vector<16x16xf32>
    "tpu.trace_stop"() : () -> ()
    %cst_41 = arith.constant 0.353553385 : f32
    %76 = vector.broadcast %cst_41 : f32 to vector<16x16xf32>
    %77 = arith.mulf %75, %76 : vector<16x16xf32>
    %cst_42 = arith.constant -1.000000e+30 : f32
    %78 = vector.shape_cast %5 : vector<1x16xi1> to vector<1x16xi1>
    %79 = vector.broadcast %78 : vector<1x16xi1> to vector<16x16xi1>
    %80 = vector.broadcast %cst_42 : f32 to vector<16x16xf32>
    %81 = arith.select %79, %77, %80 : vector<16x16xi1>, vector<16x16xf32>
    %cst_43 = arith.constant dense<0xFF800000> : vector<16xf32>
    %82 = vector.multi_reduction <maximumf>, %81, %cst_43 [1] : vector<16x16xf32> to vector<16xf32>
    %83 = vector.shape_cast %82 : vector<16xf32> to vector<16x1xf32>
    %84 = vector.broadcast %83 : vector<16x1xf32> to vector<16x16xf32>
    %85 = arith.subf %81, %84 : vector<16x16xf32>
    %86 = math.exp %85 : vector<16x16xf32>
    %cst_44 = arith.constant dense<0.000000e+00> : vector<16xf32>
    %87 = vector.multi_reduction <add>, %86, %cst_44 [1] : vector<16x16xf32> to vector<16xf32>
    %88 = vector.shape_cast %87 : vector<16xf32> to vector<16x1xf32>
    %89 = tpu.reciprocal %88 {approx = true} : vector<16x1xf32> -> vector<16x1xf32>
    %90 = vector.broadcast %89 : vector<16x1xf32> to vector<16x16xf32>
    %91 = arith.mulf %86, %90 : vector<16x16xf32>
    %cst_45 = arith.constant 0.000000e+00 : f32
    %92 = vector.shape_cast %5 : vector<1x16xi1> to vector<1x16xi1>
    %93 = vector.broadcast %92 : vector<1x16xi1> to vector<16x16xi1>
    %94 = vector.broadcast %cst_45 : f32 to vector<16x16xf32>
    %95 = arith.select %93, %91, %94 : vector<16x16xi1>, vector<16x16xf32>
    %96 = arith.truncf %95 : vector<16x16xf32> to vector<16x16xbf16>
    %97 = arith.truncf %72 : vector<16x8xf32> to vector<16x8xbf16>
    %cst_46 = arith.constant dense<0.000000e+00> : vector<16x8xf32>
    %98 = tpu.matmul %96, %97, %cst_46 {dimension_numbers = #tpu.dot_dimension_numbers<[1], [0], [0], [1], [0, 0, 1, 1], [], []>} : vector<16x16xbf16>, vector<16x8xbf16>, vector<16x8xf32> -> vector<16x8xf32>
    %99 = arith.truncf %98 : vector<16x8xf32> to vector<16x8xbf16>
    %c1 = arith.constant 1 : index
    %c0_47 = arith.constant 0 : index
    %c0_48 = arith.constant 0 : index
    %100 = vector.load %arg7[%c1, %c0_47, %c0_48] : memref<4x8x32xbf16, #tpu.memory_space<vmem>>, vector<1x8x32xbf16>
    %101 = vector.shape_cast %100 : vector<1x8x32xbf16> to vector<8x32xbf16>
    %cst_49 = arith.constant dense<0.000000e+00> : vector<16x32xf32>
    %102 = tpu.matmul %99, %101, %cst_49 {dimension_numbers = #tpu.dot_dimension_numbers<[1], [0], [0], [1], [0, 0, 1, 1], [], []>} : vector<16x8xbf16>, vector<8x32xbf16>, vector<16x32xf32> -> vector<16x32xf32>
    %103 = arith.addf %69, %102 : vector<16x32xf32>
    %c0_50 = arith.constant 0 : index
    %c16 = arith.constant 16 : index
    %104 = vector.load %arg16[%c0_50, %c16] : memref<16x96xf32, #tpu.memory_space<vmem>>, vector<16x8xf32>
    %c0_51 = arith.constant 0 : index
    %c48 = arith.constant 48 : index
    %105 = vector.load %arg16[%c0_51, %c48] : memref<16x96xf32, #tpu.memory_space<vmem>>, vector<16x8xf32>
    %c0_52 = arith.constant 0 : index
    %c80 = arith.constant 80 : index
    %106 = vector.load %arg16[%c0_52, %c80] : memref<16x96xf32, #tpu.memory_space<vmem>>, vector<16x8xf32>
    %107 = arith.truncf %104 : vector<16x8xf32> to vector<16x8xbf16>
    %108 = arith.truncf %105 : vector<16x8xf32> to vector<16x8xbf16>
    "tpu.trace_start"() <{level = 10 : i32, message = "qd,kd->qk"}> : () -> ()
    %cst_53 = arith.constant dense<0.000000e+00> : vector<16x16xf32>
    %109 = tpu.matmul %107, %108, %cst_53 {dimension_numbers = #tpu.dot_dimension_numbers<[1], [1], [0], [0], [0, 0, 1, 0], [], []>} : vector<16x8xbf16>, vector<16x8xbf16>, vector<16x16xf32> -> vector<16x16xf32>
    "tpu.trace_stop"() : () -> ()
    %cst_54 = arith.constant 0.353553385 : f32
    %110 = vector.broadcast %cst_54 : f32 to vector<16x16xf32>
    %111 = arith.mulf %109, %110 : vector<16x16xf32>
    %cst_55 = arith.constant -1.000000e+30 : f32
    %112 = vector.shape_cast %5 : vector<1x16xi1> to vector<1x16xi1>
    %113 = vector.broadcast %112 : vector<1x16xi1> to vector<16x16xi1>
    %114 = vector.broadcast %cst_55 : f32 to vector<16x16xf32>
    %115 = arith.select %113, %111, %114 : vector<16x16xi1>, vector<16x16xf32>
    %cst_56 = arith.constant dense<0xFF800000> : vector<16xf32>
    %116 = vector.multi_reduction <maximumf>, %115, %cst_56 [1] : vector<16x16xf32> to vector<16xf32>
    %117 = vector.shape_cast %116 : vector<16xf32> to vector<16x1xf32>
    %118 = vector.broadcast %117 : vector<16x1xf32> to vector<16x16xf32>
    %119 = arith.subf %115, %118 : vector<16x16xf32>
    %120 = math.exp %119 : vector<16x16xf32>
    %cst_57 = arith.constant dense<0.000000e+00> : vector<16xf32>
    %121 = vector.multi_reduction <add>, %120, %cst_57 [1] : vector<16x16xf32> to vector<16xf32>
    %122 = vector.shape_cast %121 : vector<16xf32> to vector<16x1xf32>
    %123 = tpu.reciprocal %122 {approx = true} : vector<16x1xf32> -> vector<16x1xf32>
    %124 = vector.broadcast %123 : vector<16x1xf32> to vector<16x16xf32>
    %125 = arith.mulf %120, %124 : vector<16x16xf32>
    %cst_58 = arith.constant 0.000000e+00 : f32
    %126 = vector.shape_cast %5 : vector<1x16xi1> to vector<1x16xi1>
    %127 = vector.broadcast %126 : vector<1x16xi1> to vector<16x16xi1>
    %128 = vector.broadcast %cst_58 : f32 to vector<16x16xf32>
    %129 = arith.select %127, %125, %128 : vector<16x16xi1>, vector<16x16xf32>
    %130 = arith.truncf %129 : vector<16x16xf32> to vector<16x16xbf16>
    %131 = arith.truncf %106 : vector<16x8xf32> to vector<16x8xbf16>
    %cst_59 = arith.constant dense<0.000000e+00> : vector<16x8xf32>
    %132 = tpu.matmul %130, %131, %cst_59 {dimension_numbers = #tpu.dot_dimension_numbers<[1], [0], [0], [1], [0, 0, 1, 1], [], []>} : vector<16x16xbf16>, vector<16x8xbf16>, vector<16x8xf32> -> vector<16x8xf32>
    %133 = arith.truncf %132 : vector<16x8xf32> to vector<16x8xbf16>
    %c2 = arith.constant 2 : index
    %c0_60 = arith.constant 0 : index
    %c0_61 = arith.constant 0 : index
    %134 = vector.load %arg7[%c2, %c0_60, %c0_61] : memref<4x8x32xbf16, #tpu.memory_space<vmem>>, vector<1x8x32xbf16>
    %135 = vector.shape_cast %134 : vector<1x8x32xbf16> to vector<8x32xbf16>
    %cst_62 = arith.constant dense<0.000000e+00> : vector<16x32xf32>
    %136 = tpu.matmul %133, %135, %cst_62 {dimension_numbers = #tpu.dot_dimension_numbers<[1], [0], [0], [1], [0, 0, 1, 1], [], []>} : vector<16x8xbf16>, vector<8x32xbf16>, vector<16x32xf32> -> vector<16x32xf32>
    %137 = arith.addf %103, %136 : vector<16x32xf32>
    %c0_63 = arith.constant 0 : index
    %c24 = arith.constant 24 : index
    %138 = vector.load %arg16[%c0_63, %c24] : memref<16x96xf32, #tpu.memory_space<vmem>>, vector<16x8xf32>
    %c0_64 = arith.constant 0 : index
    %c56 = arith.constant 56 : index
    %139 = vector.load %arg16[%c0_64, %c56] : memref<16x96xf32, #tpu.memory_space<vmem>>, vector<16x8xf32>
    %c0_65 = arith.constant 0 : index
    %c88 = arith.constant 88 : index
    %140 = vector.load %arg16[%c0_65, %c88] : memref<16x96xf32, #tpu.memory_space<vmem>>, vector<16x8xf32>
    %141 = arith.truncf %138 : vector<16x8xf32> to vector<16x8xbf16>
    %142 = arith.truncf %139 : vector<16x8xf32> to vector<16x8xbf16>
    "tpu.trace_start"() <{level = 10 : i32, message = "qd,kd->qk"}> : () -> ()
    %cst_66 = arith.constant dense<0.000000e+00> : vector<16x16xf32>
    %143 = tpu.matmul %141, %142, %cst_66 {dimension_numbers = #tpu.dot_dimension_numbers<[1], [1], [0], [0], [0, 0, 1, 0], [], []>} : vector<16x8xbf16>, vector<16x8xbf16>, vector<16x16xf32> -> vector<16x16xf32>
    "tpu.trace_stop"() : () -> ()
    %cst_67 = arith.constant 0.353553385 : f32
    %144 = vector.broadcast %cst_67 : f32 to vector<16x16xf32>
    %145 = arith.mulf %143, %144 : vector<16x16xf32>
    %cst_68 = arith.constant -1.000000e+30 : f32
    %146 = vector.shape_cast %5 : vector<1x16xi1> to vector<1x16xi1>
    %147 = vector.broadcast %146 : vector<1x16xi1> to vector<16x16xi1>
    %148 = vector.broadcast %cst_68 : f32 to vector<16x16xf32>
    %149 = arith.select %147, %145, %148 : vector<16x16xi1>, vector<16x16xf32>
    %cst_69 = arith.constant dense<0xFF800000> : vector<16xf32>
    %150 = vector.multi_reduction <maximumf>, %149, %cst_69 [1] : vector<16x16xf32> to vector<16xf32>
    %151 = vector.shape_cast %150 : vector<16xf32> to vector<16x1xf32>
    %152 = vector.broadcast %151 : vector<16x1xf32> to vector<16x16xf32>
    %153 = arith.subf %149, %152 : vector<16x16xf32>
    %154 = math.exp %153 : vector<16x16xf32>
    %cst_70 = arith.constant dense<0.000000e+00> : vector<16xf32>
    %155 = vector.multi_reduction <add>, %154, %cst_70 [1] : vector<16x16xf32> to vector<16xf32>
    %156 = vector.shape_cast %155 : vector<16xf32> to vector<16x1xf32>
    %157 = tpu.reciprocal %156 {approx = true} : vector<16x1xf32> -> vector<16x1xf32>
    %158 = vector.broadcast %157 : vector<16x1xf32> to vector<16x16xf32>
    %159 = arith.mulf %154, %158 : vector<16x16xf32>
    %cst_71 = arith.constant 0.000000e+00 : f32
    %160 = vector.shape_cast %5 : vector<1x16xi1> to vector<1x16xi1>
    %161 = vector.broadcast %160 : vector<1x16xi1> to vector<16x16xi1>
    %162 = vector.broadcast %cst_71 : f32 to vector<16x16xf32>
    %163 = arith.select %161, %159, %162 : vector<16x16xi1>, vector<16x16xf32>
    %164 = arith.truncf %163 : vector<16x16xf32> to vector<16x16xbf16>
    %165 = arith.truncf %140 : vector<16x8xf32> to vector<16x8xbf16>
    %cst_72 = arith.constant dense<0.000000e+00> : vector<16x8xf32>
    %166 = tpu.matmul %164, %165, %cst_72 {dimension_numbers = #tpu.dot_dimension_numbers<[1], [0], [0], [1], [0, 0, 1, 1], [], []>} : vector<16x16xbf16>, vector<16x8xbf16>, vector<16x8xf32> -> vector<16x8xf32>
    %167 = arith.truncf %166 : vector<16x8xf32> to vector<16x8xbf16>
    %c3 = arith.constant 3 : index
    %c0_73 = arith.constant 0 : index
    %c0_74 = arith.constant 0 : index
    %168 = vector.load %arg7[%c3, %c0_73, %c0_74] : memref<4x8x32xbf16, #tpu.memory_space<vmem>>, vector<1x8x32xbf16>
    %169 = vector.shape_cast %168 : vector<1x8x32xbf16> to vector<8x32xbf16>
    %cst_75 = arith.constant dense<0.000000e+00> : vector<16x32xf32>
    %170 = tpu.matmul %167, %169, %cst_75 {dimension_numbers = #tpu.dot_dimension_numbers<[1], [0], [0], [1], [0, 0, 1, 1], [], []>} : vector<16x8xbf16>, vector<8x32xbf16>, vector<16x32xf32> -> vector<16x32xf32>
    %171 = arith.addf %137, %170 : vector<16x32xf32>
    %172 = arith.addf %1, %171 : vector<16x32xf32>
    %c0_76 = arith.constant 0 : index
    %c0_77 = arith.constant 0 : index
    %173 = vector.load %arg8[%c0_76, %c0_77] : memref<1x32xf32, #tpu.memory_space<vmem>>, vector<1x32xf32>
    %174 = vector.broadcast %173 : vector<1x32xf32> to vector<16x32xf32>
    %175 = arith.addf %172, %174 : vector<16x32xf32>
    %c0_78 = arith.constant 0 : index
    %c0_79 = arith.constant 0 : index
    %176 = vector.load %arg9[%c0_78, %c0_79] : memref<1x32xf32, #tpu.memory_space<vmem>>, vector<1x32xf32>
    %c0_80 = arith.constant 0 : index
    %c0_81 = arith.constant 0 : index
    %177 = vector.load %arg10[%c0_80, %c0_81] : memref<1x32xf32, #tpu.memory_space<vmem>>, vector<1x32xf32>
    %cst_82 = arith.constant dense<0.000000e+00> : vector<16xf32>
    %178 = vector.multi_reduction <add>, %175, %cst_82 [1] : vector<16x32xf32> to vector<16xf32>
    %179 = vector.shape_cast %178 : vector<16xf32> to vector<16x1xf32>
    %cst_83 = arith.constant 3.200000e+01 : f32
    %180 = vector.broadcast %cst_83 : f32 to vector<16x1xf32>
    %181 = arith.divf %179, %180 : vector<16x1xf32>
    %182 = vector.broadcast %181 : vector<16x1xf32> to vector<16x32xf32>
    %183 = arith.subf %175, %182 : vector<16x32xf32>
    %184 = arith.mulf %183, %183 : vector<16x32xf32>
    %cst_84 = arith.constant dense<0.000000e+00> : vector<16xf32>
    %185 = vector.multi_reduction <add>, %184, %cst_84 [1] : vector<16x32xf32> to vector<16xf32>
    %186 = vector.shape_cast %185 : vector<16xf32> to vector<16x1xf32>
    %cst_85 = arith.constant 3.200000e+01 : f32
    %187 = vector.broadcast %cst_85 : f32 to vector<16x1xf32>
    %188 = arith.divf %186, %187 : vector<16x1xf32>
    %cst_86 = arith.constant 9.99999974E-6 : f32
    %189 = vector.broadcast %cst_86 : f32 to vector<16x1xf32>
    %190 = arith.addf %188, %189 : vector<16x1xf32>
    %191 = math.rsqrt %190 : vector<16x1xf32>
    %192 = vector.broadcast %191 : vector<16x1xf32> to vector<16x32xf32>
    %193 = arith.mulf %183, %192 : vector<16x32xf32>
    %194 = vector.broadcast %176 : vector<1x32xf32> to vector<16x32xf32>
    %195 = arith.mulf %193, %194 : vector<16x32xf32>
    %196 = vector.broadcast %177 : vector<1x32xf32> to vector<16x32xf32>
    %197 = arith.addf %195, %196 : vector<16x32xf32>
    %198 = arith.truncf %197 : vector<16x32xf32> to vector<16x32xbf16>
    %c0_87 = arith.constant 0 : index
    %c0_88 = arith.constant 0 : index
    %199 = vector.load %arg11[%c0_87, %c0_88] : memref<32x64xbf16, #tpu.memory_space<vmem>>, vector<32x64xbf16>
    %cst_89 = arith.constant dense<0.000000e+00> : vector<16x64xf32>
    %200 = tpu.matmul %198, %199, %cst_89 {dimension_numbers = #tpu.dot_dimension_numbers<[1], [0], [0], [1], [0, 0, 1, 1], [], []>} : vector<16x32xbf16>, vector<32x64xbf16>, vector<16x64xf32> -> vector<16x64xf32>
    %c0_90 = arith.constant 0 : index
    %c0_91 = arith.constant 0 : index
    %201 = vector.load %arg12[%c0_90, %c0_91] : memref<1x64xf32, #tpu.memory_space<vmem>>, vector<1x64xf32>
    %202 = vector.broadcast %201 : vector<1x64xf32> to vector<16x64xf32>
    %203 = arith.addf %200, %202 : vector<16x64xf32>
    %cst_92 = arith.constant 0.000000e+00 : f32
    %204 = vector.broadcast %cst_92 : f32 to vector<16x64xf32>
    %205 = arith.maximumf %203, %204 : vector<16x64xf32>
    %206 = arith.truncf %205 : vector<16x64xf32> to vector<16x64xbf16>
    %c0_93 = arith.constant 0 : index
    %c0_94 = arith.constant 0 : index
    %207 = vector.load %arg13[%c0_93, %c0_94] : memref<64x32xbf16, #tpu.memory_space<vmem>>, vector<64x32xbf16>
    %cst_95 = arith.constant dense<0.000000e+00> : vector<16x32xf32>
    %208 = tpu.matmul %206, %207, %cst_95 {dimension_numbers = #tpu.dot_dimension_numbers<[1], [0], [0], [1], [0, 0, 1, 1], [], []>} : vector<16x64xbf16>, vector<64x32xbf16>, vector<16x32xf32> -> vector<16x32xf32>
    %c0_96 = arith.constant 0 : index
    %c0_97 = arith.constant 0 : index
    %209 = vector.load %arg14[%c0_96, %c0_97] : memref<1x32xf32, #tpu.memory_space<vmem>>, vector<1x32xf32>
    %210 = vector.broadcast %209 : vector<1x32xf32> to vector<16x32xf32>
    %211 = arith.addf %208, %210 : vector<16x32xf32>
    %212 = arith.addf %175, %211 : vector<16x32xf32>
    %c0_98 = arith.constant 0 : index
    %c0_99 = arith.constant 0 : index
    %c0_100 = arith.constant 0 : index
    %213 = vector.load %arg15[%c0_98, %c0_99, %c0_100] : memref<1x16x32xf32, #tpu.memory_space<vmem>>, vector<1x16x32xf32>
    %214 = vector.shape_cast %213 : vector<1x16x32xf32> to vector<16x32xf32>
    %215 = vector.shape_cast %212 : vector<16x32xf32> to vector<1x16x32xf32>
    tpu.vector_store %arg15[%c0_98, %c0_99, %c0_100], %215 {strides = array<i32>} : memref<1x16x32xf32, #tpu.memory_space<vmem>>, vector<1x16x32xf32>,
    return
  }
  func.func @transform_0(%arg0: i32) -> (i32, i32, i32) {
    %c0_i32 = arith.constant 0 : i32
    %c0_i32_0 = arith.constant 0 : i32
    %c0_i32_1 = arith.constant 0 : i32
    return %arg0, %c0_i32, %c0_i32_0 : i32, i32, i32
  }
  func.func @transform_1(%arg0: i32) -> (i32, i32, i32) {
    %c0_i32 = arith.constant 0 : i32
    %c0_i32_0 = arith.constant 0 : i32
    %c0_i32_1 = arith.constant 0 : i32
    return %arg0, %c0_i32, %c0_i32_0 : i32, i32, i32
  }
  func.func @transform_2(%arg0: i32) -> (i32, i32) {
    %c0_i32 = arith.constant 0 : i32
    %c0_i32_0 = arith.constant 0 : i32
    %c0_i32_1 = arith.constant 0 : i32
    return %c0_i32, %c0_i32_0 : i32, i32
  }
  func.func @transform_3(%arg0: i32) -> (i32, i32) {
    %c0_i32 = arith.constant 0 : i32
    %c0_i32_0 = arith.constant 0 : i32
    %c0_i32_1 = arith.constant 0 : i32
    return %c0_i32, %c0_i32_0 : i32, i32
  }
  func.func @transform_4(%arg0: i32) -> (i32, i32) {
    %c0_i32 = arith.constant 0 : i32
    %c0_i32_0 = arith.constant 0 : i32
    %c0_i32_1 = arith.constant 0 : i32
    return %c0_i32, %c0_i32_0 : i32, i32
  }
  func.func @transform_5(%arg0: i32) -> (i32, i32) {
    %c0_i32 = arith.constant 0 : i32
    %c0_i32_0 = arith.constant 0 : i32
    %c0_i32_1 = arith.constant 0 : i32
    return %c0_i32, %c0_i32_0 : i32, i32
  }
  func.func @transform_6(%arg0: i32) -> (i32, i32, i32) {
    %c0_i32 = arith.constant 0 : i32
    %c0_i32_0 = arith.constant 0 : i32
    %c0_i32_1 = arith.constant 0 : i32
    %c0_i32_2 = arith.constant 0 : i32
    return %c0_i32, %c0_i32_0, %c0_i32_1 : i32, i32, i32
  }
  func.func @transform_7(%arg0: i32) -> (i32, i32) {
    %c0_i32 = arith.constant 0 : i32
    %c0_i32_0 = arith.constant 0 : i32
    %c0_i32_1 = arith.constant 0 : i32
    return %c0_i32, %c0_i32_0 : i32, i32
  }
  func.func @transform_8(%arg0: i32) -> (i32, i32) {
    %c0_i32 = arith.constant 0 : i32
    %c0_i32_0 = arith.constant 0 : i32
    %c0_i32_1 = arith.constant 0 : i32
    return %c0_i32, %c0_i32_0 : i32, i32
  }
  func.func @transform_9(%arg0: i32) -> (i32, i32) {
    %c0_i32 = arith.constant 0 : i32
    %c0_i32_0 = arith.constant 0 : i32
    %c0_i32_1 = arith.constant 0 : i32
    return %c0_i32, %c0_i32_0 : i32, i32
  }
  func.func @transform_10(%arg0: i32) -> (i32, i32) {
    %c0_i32 = arith.constant 0 : i32
    %c0_i32_0 = arith.constant 0 : i32
    %c0_i32_1 = arith.constant 0 : i32
    return %c0_i32, %c0_i32_0 : i32, i32
  }
  func.func @transform_11(%arg0: i32) -> (i32, i32) {
    %c0_i32 = arith.constant 0 : i32
    %c0_i32_0 = arith.constant 0 : i32
    %c0_i32_1 = arith.constant 0 : i32
    return %c0_i32, %c0_i32_0 : i32, i32
  }
  func.func @transform_12(%arg0: i32) -> (i32, i32) {
    %c0_i32 = arith.constant 0 : i32
    %c0_i32_0 = arith.constant 0 : i32
    %c0_i32_1 = arith.constant 0 : i32
    return %c0_i32, %c0_i32_0 : i32, i32
  }
  func.func @transform_13(%arg0: i32) -> (i32, i32) {
    %c0_i32 = arith.constant 0 : i32
    %c0_i32_0 = arith.constant 0 : i32
    %c0_i32_1 = arith.constant 0 : i32
    return %c0_i32, %c0_i32_0 : i32, i32
  }
  func.func @transform_14(%arg0: i32) -> (i32, i32, i32) {
    %c0_i32 = arith.constant 0 : i32
    %c0_i32_0 = arith.constant 0 : i32
    %c0_i32_1 = arith.constant 0 : i32
    return %arg0, %c0_i32, %c0_i32_0 : i32, i32, i32
  }
}

</mosaic_0001>

<llo_original>
// kernel: encoder_forward.6
$region0: #{encoder_forward.6}
  #allocation0 [shape = 'u32[]', space=smem, size = 0x4, offset = 0x4, fixed_abs, tag = 'smem constant byte address 0x4 - core index']
  #allocation1 [shape = 'u32[144,128]{1,0:T(1,128)}', space=vmem, size = 0x12000, scoped, tag = 'internal scratch']
  %s0 = inlined_call_operand.vmem [shape: f32[434,9], index: 0, kind: input, shape index: {}]
  %s1 = inlined_call_operand.vmem [shape: bf16[9,32], index: 1, kind: input, shape index: {}]
  %s2 = inlined_call_operand.vmem [shape: f32[1,32], index: 2, kind: input, shape index: {}]
  %s3 = inlined_call_operand.vmem [shape: f32[434,32], index: 3, kind: output, shape index: {}]
  %s4 = sld [smem:[#allocation0]]
  $region22: #{encoder_forward.6} parent=0
    _
  %s6 = ssub.s32 1, %s4
  %s7 = scalar_select 0, %s6, %s4
  // Predicated region
  $region2: #{encoder_forward.6} parent=0 // pred_check
    _
  $region3: #{encoder_forward.6} parent=0 // pred_check_branch
    %9 = sbr.rel (0) target = $region5
  $region4: #{encoder_forward.6} parent=0 // pred_region
    _
  $region5: #{encoder_forward.6} parent=0 // pred_fallthru
    _
  // Predicated region
  $region6: #{encoder_forward.6} parent=0 // pred_check
    _
  $region7: #{encoder_forward.6} parent=0 // pred_check_branch
    %11 = sbr.rel (0) target = $region9
  $region8: #{encoder_forward.6} parent=0 // pred_region
    _
  $region9: #{encoder_forward.6} parent=0 // pred_fallthru
    _
  // Predicated region
  $region10: #{encoder_forward.6} parent=0 // pred_check
    _
  $region11: #{encoder_forward.6} parent=0 // pred_check_branch
    %13 = sbr.rel (0) target = $region13
  $region12: #{encoder_forward.6} parent=0 // pred_region
    _
  $region13: #{encoder_forward.6} parent=0 // pred_fallthru
    _
  %v15 = vld [vmem:[%s0] sm:$0xff]
  %v16 = vld [vmem:[%s0 + $0x8] sm:$0xff]
  %v17 = vld [vmem:[%s0 + $0x10] sm:$0xff]
  %v18 = vld [vmem:[%s0 + $0x18] sm:$0xff]
  %v19 = vld [vmem:[%s0 + $0x20] sm:$0xff]
  %v20 = vld [vmem:[%s0 + $0x28] sm:$0xff]
  %v21 = vld [vmem:[%s0 + $0x30] sm:$0xff]
  %v22 = vld [vmem:[%s0 + $0x38] sm:$0xff]
  %v23 = vld [vmem:[%s0 + $0x40] sm:$0xff]
  %v24 = vld [vmem:[%s0 + $0x48] sm:$0xff]
  %v25 = vld [vmem:[%s0 + $0x50] sm:$0xff]
  %v26 = vld [vmem:[%s0 + $0x58] sm:$0xff]
  %v27 = vld [vmem:[%s0 + $0x60] sm:$0xff]
  %v28 = vld [vmem:[%s0 + $0x68] sm:$0xff]
  %v29 = vld [vmem:[%s0 + $0x70] sm:$0xff]
  %v30 = vld [vmem:[%s0 + $0x78] sm:$0xff]
  %v31 = vld [vmem:[%s0 + $0x80] sm:$0xff]
  %v32 = vld [vmem:[%s0 + $0x88] sm:$0xff]
  %v33 = vld [vmem:[%s0 + $0x90] sm:$0xff]
  %v34 = vld [vmem:[%s0 + $0x98] sm:$0xff]
  %v35 = vld [vmem:[%s0 + $0xa0] sm:$0xff]
  %v36 = vld [vmem:[%s0 + $0xa8] sm:$0xff]
  %v37 = vld [vmem:[%s0 + $0xb0] sm:$0xff]
  %v38 = vld [vmem:[%s0 + $0xb8] sm:$0xff]
  %v39 = vld [vmem:[%s0 + $0xc0] sm:$0xff]
  %v40 = vld [vmem:[%s0 + $0xc8] sm:$0xff]
  %v41 = vld [vmem:[%s0 + $0xd0] sm:$0xff]
  %v42 = vld [vmem:[%s0 + $0xd8] sm:$0xff]
  %v43 = vld [vmem:[%s0 + $0xe0] sm:$0xff]
  %v44 = vld [vmem:[%s0 + $0xe8] sm:$0xff]
  %v45 = vld [vmem:[%s0 + $0xf0] sm:$0xff]
  %v46 = vld [vmem:[%s0 + $0xf8] sm:$0xff]
  %v47 = vld [vmem:[%s0 + $0x100] sm:$0xff]
  %v48 = vld [vmem:[%s0 + $0x108] sm:$0xff]
  %v49 = vld [vmem:[%s0 + $0x110] sm:$0xff]
  %v50 = vld [vmem:[%s0 + $0x118] sm:$0xff]
  %v51 = vld [vmem:[%s0 + $0x120] sm:$0xff]
  %v52 = vld [vmem:[%s0 + $0x128] sm:$0xff]
  %v53 = vld [vmem:[%s0 + $0x130] sm:$0xff]
  %v54 = vld [vmem:[%s0 + $0x138] sm:$0xff]
  %v55 = vld [vmem:[%s0 + $0x140] sm:$0xff]
  %v56 = vld [vmem:[%s0 + $0x148] sm:$0xff]
  %v57 = vld [vmem:[%s0 + $0x150] sm:$0xff]
  %v58 = vld [vmem:[%s0 + $0x158] sm:$0xff]
  %v59 = vld [vmem:[%s0 + $0x160] sm:$0xff]
  %v60 = vld [vmem:[%s0 + $0x168] sm:$0xff]
  %v61 = vld [vmem:[%s0 + $0x170] sm:$0xff]
  %v62 = vld [vmem:[%s0 + $0x178] sm:$0xff]
  %v63 = vld [vmem:[%s0 + $0x180] sm:$0xff]
  %v64 = vld [vmem:[%s0 + $0x188] sm:$0xff]
  %v65 = vld [vmem:[%s0 + $0x190] sm:$0xff]
  %v66 = vld [vmem:[%s0 + $0x198] sm:$0xff]
  %v67 = vld [vmem:[%s0 + $0x1a0] sm:$0xff]
  %v68 = vld [vmem:[%s0 + $0x1a8] sm:$0xff]
  %v69 = vld [vmem:[%s0 + $0x1b0] sm:$0x3]
  %v70 = vpack.c.bf16 %v16, %v15
  %v71 = vpack.c.bf16 %v18, %v17
  %v72 = vpack.c.bf16 %v20, %v19
  %v73 = vpack.c.bf16 %v22, %v21
  %v74 = vpack.c.bf16 %v24, %v23
  %v75 = vpack.c.bf16 %v26, %v25
  %v76 = vpack.c.bf16 %v28, %v27
  %v77 = vpack.c.bf16 %v30, %v29
  %v78 = vpack.c.bf16 %v32, %v31
  %v79 = vpack.c.bf16 %v34, %v33
  %v80 = vpack.c.bf16 %v36, %v35
  %v81 = vpack.c.bf16 %v38, %v37
  %v82 = vpack.c.bf16 %v40, %v39
  %v83 = vpack.c.bf16 %v42, %v41
  %v84 = vpack.c.bf16 %v44, %v43
  %v85 = vpack.c.bf16 %v46, %v45
  %v86 = vpack.c.bf16 %v48, %v47
  %v87 = vpack.c.bf16 %v50, %v49
  %v88 = vpack.c.bf16 %v52, %v51
  %v89 = vpack.c.bf16 %v54, %v53
  %v90 = vpack.c.bf16 %v56, %v55
  %v91 = vpack.c.bf16 %v58, %v57
  %v92 = vpack.c.bf16 %v60, %v59
  %v93 = vpack.c.bf16 %v62, %v61
  %v94 = vpack.c.bf16 %v64, %v63
  %v95 = vpack.c.bf16 %v66, %v65
  %v96 = vpack.c.bf16 %v68, %v67
  %v97 = vpack.c.bf16 %v69, %v69
  %v98 = vld [vmem:[%s1] sm:$0xf]
  %v99 = vld [vmem:[%s1 + $0x4] sm:$0x1]
  %v100 = vld [vmem:[%s2] sm:$0x1]
  %v102 = vlaneseq
  %v103 = vshrl.u32 %v102, 7
  %v104 = vsub.s32 0, %v103
  %v105 = vrot.slane %v100, %v104
  %v109 = vunpack.c.l.b16 %v98
  %v110 = vunpack.c.l.b16 %v99
  %v111 = vpack.c.b16 %v110, %v109
  %vm112 = vcmask 72704
  %v114 = vsel %vm112, %v70, 0
  %v117 = vsel %vm112, %v71, 0
  %v120 = vsel %vm112, %v72, 0
  %v123 = vsel %vm112, %v73, 0
  %v126 = vsel %vm112, %v74, 0
  %v129 = vsel %vm112, %v75, 0
  %v132 = vsel %vm112, %v76, 0
  %v135 = vsel %vm112, %v77, 0
  %v138 = vsel %vm112, %v78, 0
  %v141 = vsel %vm112, %v79, 0
  %v144 = vsel %vm112, %v80, 0
  %v147 = vsel %vm112, %v81, 0
  %v150 = vsel %vm112, %v82, 0
  %v153 = vsel %vm112, %v83, 0
  %v156 = vsel %vm112, %v84, 0
  %v159 = vsel %vm112, %v85, 0
  %v162 = vsel %vm112, %v86, 0
  %v165 = vsel %vm112, %v87, 0
  %v168 = vsel %vm112, %v88, 0
  %v171 = vsel %vm112, %v89, 0
  %v174 = vsel %vm112, %v90, 0
  %v177 = vsel %vm112, %v91, 0
  %v180 = vsel %vm112, %v92, 0
  %v183 = vsel %vm112, %v93, 0
  %v186 = vsel %vm112, %v94, 0
  %v189 = vsel %vm112, %v95, 0
  %v192 = vsel %vm112, %v96, 0
  %v195 = vsel %vm112, %v97, 0
  %vm197 = vcmask 1043456
  %vm198 = vcmask 1044480
  %v199 = vsel %vm197, 4294967295, 65535
  %v200 = vsel %vm198, %v199, 0
  %v202 = vand.u32 %v111, %v200
  %204 = vmatprep.subr.bf16.mxu0 0
  %205 = vmatpush1.bf16.msra.mxu0 0
  %206 = vmatprep.subr.bf16.mxu0 0
  %207 = vmatpush1.bf16.msra.mxu0 0
  %208 = vmatprep.subr.bf16.mxu0 0
  %209 = vmatpush1.bf16.msra.mxu0 0
  %210 = vmatprep.subr.bf16.mxu0 0
  %211 = vmatpush1.bf16.msra.mxu0 0
  %212 = vmatprep.subr.bf16.mxu0 0
  %213 = vmatpush1.bf16.msra.mxu0 0
  %214 = vmatprep.subr.bf16.mxu0 0
  %215 = vmatpush1.bf16.msra.mxu0 0
  %216 = vmatprep.subr.bf16.mxu0 0
  %217 = vmatpush1.bf16.msra.mxu0 0
  %218 = vmatprep.subr.bf16.mxu0 0
  %219 = vmatpush1.bf16.msra.mxu0 %v202
  %220 = vmatprep.subr.bf16.mxu0 0
  %221 = vmatpush2.bf16.msra.mxu0 0
  %222 = vmatprep.subr.bf16.mxu0 0
  %223 = vmatpush2.bf16.msra.mxu0 0
  %224 = vmatprep.subr.bf16.mxu0 0
  %225 = vmatpush2.bf16.msra.mxu0 0
  %226 = vmatprep.subr.bf16.mxu0 0
  %227 = vmatpush2.bf16.msra.mxu0 0
  %228 = vmatprep.subr.bf16.mxu0 0
  %229 = vmatpush2.bf16.msra.mxu0 0
  %230 = vmatprep.subr.bf16.mxu0 0
  %231 = vmatpush2.bf16.msra.mxu0 0
  %232 = vmatprep.subr.bf16.mxu0 0
  %233 = vmatpush2.bf16.msra.mxu0 0
  %234 = vmatprep.subr.bf16.mxu0 0
  %235 = vmatpush2.bf16.msra.mxu0 0
  %236 = vmatprep.mubr.bf16.mxu0 0
  %237 = vmatmul.mubr.bf16.gmra.mxu0 %v114
  %v238 = vpop.f32.mrf.mxu0
  %v239 = vadd.f32 %v105, %v238
  %v240 = vpop.f32.mrf.mxu0
  %v241 = vpop.f32.mrf.mxu0
  %v242 = vadd.f32 %v105, %v241
  %v243 = vpop.f32.mrf.mxu0
  %244 = vmatprep.mubr.bf16.mxu0 0
  %245 = vmatmul.mubr.bf16.gmra.mxu0 %v117
  %v246 = vpop.f32.mrf.mxu0
  %v247 = vadd.f32 %v105, %v246
  %v248 = vpop.f32.mrf.mxu0
  %v249 = vpop.f32.mrf.mxu0
  %v250 = vadd.f32 %v105, %v249
  %v251 = vpop.f32.mrf.mxu0
  %252 = vmatprep.mubr.bf16.mxu0 0
  %253 = vmatmul.mubr.bf16.gmra.mxu0 %v120
  %v254 = vpop.f32.mrf.mxu0
  %v255 = vadd.f32 %v105, %v254
  %v256 = vpop.f32.mrf.mxu0
  %v257 = vpop.f32.mrf.mxu0
  %v258 = vadd.f32 %v105, %v257
  %v259 = vpop.f32.mrf.mxu0
  %260 = vmatprep.mubr.bf16.mxu0 0
  %261 = vmatmul.mubr.bf16.gmra.mxu0 %v123
  %v262 = vpop.f32.mrf.mxu0
  %v263 = vadd.f32 %v105, %v262
  %v264 = vpop.f32.mrf.mxu0
  %v265 = vpop.f32.mrf.mxu0
  %v266 = vadd.f32 %v105, %v265
  %v267 = vpop.f32.mrf.mxu0
  %268 = vmatprep.mubr.bf16.mxu0 0
  %269 = vmatmul.mubr.bf16.gmra.mxu0 %v126
  %v270 = vpop.f32.mrf.mxu0
  %v271 = vadd.f32 %v105, %v270
  %v272 = vpop.f32.mrf.mxu0
  %v273 = vpop.f32.mrf.mxu0
  %v274 = vadd.f32 %v105, %v273
  %v275 = vpop.f32.mrf.mxu0
  %276 = vmatprep.mubr.bf16.mxu0 0
  %277 = vmatmul.mubr.bf16.gmra.mxu0 %v129
  %v278 = vpop.f32.mrf.mxu0
  %v279 = vadd.f32 %v105, %v278
  %v280 = vpop.f32.mrf.mxu0
  %v281 = vpop.f32.mrf.mxu0
  %v282 = vadd.f32 %v105, %v281
  %v283 = vpop.f32.mrf.mxu0
  %284 = vmatprep.mubr.bf16.mxu0 0
  %285 = vmatmul.mubr.bf16.gmra.mxu0 %v132
  %v286 = vpop.f32.mrf.mxu0
  %v287 = vadd.f32 %v105, %v286
  %v288 = vpop.f32.mrf.mxu0
  %v289 = vpop.f32.mrf.mxu0
  %v290 = vadd.f32 %v105, %v289
  %v291 = vpop.f32.mrf.mxu0
  %292 = vmatprep.mubr.bf16.mxu0 0
  %293 = vmatmul.mubr.bf16.gmra.mxu0 %v135
  %v294 = vpop.f32.mrf.mxu0
  %v295 = vadd.f32 %v105, %v294
  %v296 = vpop.f32.mrf.mxu0
  %v297 = vpop.f32.mrf.mxu0
  %v298 = vadd.f32 %v105, %v297
  %v299 = vpop.f32.mrf.mxu0
  %300 = vmatprep.mubr.bf16.mxu0 0
  %301 = vmatmul.mubr.bf16.gmra.mxu0 %v138
  %v302 = vpop.f32.mrf.mxu0
  %v303 = vadd.f32 %v105, %v302
  %v304 = vpop.f32.mrf.mxu0
  %v305 = vpop.f32.mrf.mxu0
  %v306 = vadd.f32 %v105, %v305
  %v307 = vpop.f32.mrf.mxu0
  %308 = vmatprep.mubr.bf16.mxu0 0
  %309 = vmatmul.mubr.bf16.gmra.mxu0 %v141
  %v310 = vpop.f32.mrf.mxu0
  %v311 = vadd.f32 %v105, %v310
  %v312 = vpop.f32.mrf.mxu0
  %v313 = vpop.f32.mrf.mxu0
  %v314 = vadd.f32 %v105, %v313
  %v315 = vpop.f32.mrf.mxu0
  %316 = vmatprep.mubr.bf16.mxu0 0
  %317 = vmatmul.mubr.bf16.gmra.mxu0 %v144
  %v318 = vpop.f32.mrf.mxu0
  %v319 = vadd.f32 %v105, %v318
  %v320 = vpop.f32.mrf.mxu0
  %v321 = vpop.f32.mrf.mxu0
  %v322 = vadd.f32 %v105, %v321
  %v323 = vpop.f32.mrf.mxu0
  %324 = vmatprep.mubr.bf16.mxu0 0
  %325 = vmatmul.mubr.bf16.gmra.mxu0 %v147
  %v326 = vpop.f32.mrf.mxu0
  %v327 = vadd.f32 %v105, %v326
  %v328 = vpop.f32.mrf.mxu0
  %v329 = vpop.f32.mrf.mxu0
  %v330 = vadd.f32 %v105, %v329
  %v331 = vpop.f32.mrf.mxu0
  %332 = vmatprep.mubr.bf16.mxu0 0
  %333 = vmatmul.mubr.bf16.gmra.mxu0 %v150
  %v334 = vpop.f32.mrf.mxu0
  %v335 = vadd.f32 %v105, %v334
  %v336 = vpop.f32.mrf.mxu0
  %v337 = vpop.f32.mrf.mxu0
  %v338 = vadd.f32 %v105, %v337
  %v339 = vpop.f32.mrf.mxu0
  %340 = vmatprep.mubr.bf16.mxu0 0
  %341 = vmatmul.mubr.bf16.gmra.mxu0 %v153
  %v342 = vpop.f32.mrf.mxu0
  %v343 = vadd.f32 %v105, %v342
  %v344 = vpop.f32.mrf.mxu0
  %v345 = vpop.f32.mrf.mxu0
  %v346 = vadd.f32 %v105, %v345
  %v347 = vpop.f32.mrf.mxu0
  %348 = vmatprep.mubr.bf16.mxu0 0
  %349 = vmatmul.mubr.bf16.gmra.mxu0 %v156
  %v350 = vpop.f32.mrf.mxu0
  %v351 = vadd.f32 %v105, %v350
  %v352 = vpop.f32.mrf.mxu0
  %v353 = vpop.f32.mrf.mxu0
  %v354 = vadd.f32 %v105, %v353
  %v355 = vpop.f32.mrf.mxu0
  %356 = vmatprep.mubr.bf16.mxu0 0
  %357 = vmatmul.mubr.bf16.gmra.mxu0 %v159
  %v358 = vpop.f32.mrf.mxu0
  %v359 = vadd.f32 %v105, %v358
  %v360 = vpop.f32.mrf.mxu0
  %v361 = vpop.f32.mrf.mxu0
  %v362 = vadd.f32 %v105, %v361
  %v363 = vpop.f32.mrf.mxu0
  %364 = vmatprep.mubr.bf16.mxu0 0
  %365 = vmatmul.mubr.bf16.gmra.mxu0 %v162
  %v366 = vpop.f32.mrf.mxu0
  %v367 = vadd.f32 %v105, %v366
  %v368 = vpop.f32.mrf.mxu0
  %v369 = vpop.f32.mrf.mxu0
  %v370 = vadd.f32 %v105, %v369
  %v371 = vpop.f32.mrf.mxu0
  %372 = vmatprep.mubr.bf16.mxu0 0
  %373 = vmatmul.mubr.bf16.gmra.mxu0 %v165
  %v374 = vpop.f32.mrf.mxu0
  %v375 = vadd.f32 %v105, %v374
  %v376 = vpop.f32.mrf.mxu0
  %v377 = vpop.f32.mrf.mxu0
  %v378 = vadd.f32 %v105, %v377
  %v379 = vpop.f32.mrf.mxu0
  %380 = vmatprep.mubr.bf16.mxu0 0
  %381 = vmatmul.mubr.bf16.gmra.mxu0 %v168
  %v382 = vpop.f32.mrf.mxu0
  %v383 = vadd.f32 %v105, %v382
  %v384 = vpop.f32.mrf.mxu0
  %v385 = vpop.f32.mrf.mxu0
  %v386 = vadd.f32 %v105, %v385
  %v387 = vpop.f32.mrf.mxu0
  %388 = vmatprep.mubr.bf16.mxu0 0
  %389 = vmatmul.mubr.bf16.gmra.mxu0 %v171
  %v390 = vpop.f32.mrf.mxu0
  %v391 = vadd.f32 %v105, %v390
  %v392 = vpop.f32.mrf.mxu0
  %v393 = vpop.f32.mrf.mxu0
  %v394 = vadd.f32 %v105, %v393
  %v395 = vpop.f32.mrf.mxu0
  %396 = vmatprep.mubr.bf16.mxu0 0
  %397 = vmatmul.mubr.bf16.gmra.mxu0 %v174
  %v398 = vpop.f32.mrf.mxu0
  %v399 = vadd.f32 %v105, %v398
  %v400 = vpop.f32.mrf.mxu0
  %v401 = vpop.f32.mrf.mxu0
  %v402 = vadd.f32 %v105, %v401
  %v403 = vpop.f32.mrf.mxu0
  %404 = vmatprep.mubr.bf16.mxu0 0
  %405 = vmatmul.mubr.bf16.gmra.mxu0 %v177
  %v406 = vpop.f32.mrf.mxu0
  %v407 = vadd.f32 %v105, %v406
  %v408 = vpop.f32.mrf.mxu0
  %v409 = vpop.f32.mrf.mxu0
  %v410 = vadd.f32 %v105, %v409
  %v411 = vpop.f32.mrf.mxu0
  %412 = vmatprep.mubr.bf16.mxu0 0
  %413 = vmatmul.mubr.bf16.gmra.mxu0 %v180
  %v414 = vpop.f32.mrf.mxu0
  %v415 = vadd.f32 %v105, %v414
  %v416 = vpop.f32.mrf.mxu0
  %v417 = vpop.f32.mrf.mxu0
  %v418 = vadd.f32 %v105, %v417
  %v419 = vpop.f32.mrf.mxu0
  %420 = vmatprep.mubr.bf16.mxu0 0
  %421 = vmatmul.mubr.bf16.gmra.mxu0 %v183
  %v422 = vpop.f32.mrf.mxu0
  %v423 = vadd.f32 %v105, %v422
  %v424 = vpop.f32.mrf.mxu0
  %v425 = vpop.f32.mrf.mxu0
  %v426 = vadd.f32 %v105, %v425
  %v427 = vpop.f32.mrf.mxu0
  %428 = vmatprep.mubr.bf16.mxu0 0
  %429 = vmatmul.mubr.bf16.gmra.mxu0 %v186
  %v430 = vpop.f32.mrf.mxu0
  %v431 = vadd.f32 %v105, %v430
  %v432 = vpop.f32.mrf.mxu0
  %v433 = vpop.f32.mrf.mxu0
  %v434 = vadd.f32 %v105, %v433
  %v435 = vpop.f32.mrf.mxu0
  %436 = vmatprep.mubr.bf16.mxu0 0
  %437 = vmatmul.mubr.bf16.gmra.mxu0 %v189
  %v438 = vpop.f32.mrf.mxu0
  %v439 = vadd.f32 %v105, %v438
  %v440 = vpop.f32.mrf.mxu0
  %v441 = vpop.f32.mrf.mxu0
  %v442 = vadd.f32 %v105, %v441
  %v443 = vpop.f32.mrf.mxu0
  %444 = vmatprep.mubr.bf16.mxu0 0
  %445 = vmatmul.mubr.bf16.gmra.mxu0 %v192
  %v446 = vpop.f32.mrf.mxu0
  %v447 = vadd.f32 %v105, %v446
  %v448 = vpop.f32.mrf.mxu0
  %v449 = vpop.f32.mrf.mxu0
  %v450 = vadd.f32 %v105, %v449
  %v451 = vpop.f32.mrf.mxu0
  %452 = vmatprep.mubr.bf16.mxu0 0
  %453 = vmatmul.mubr.bf16.gmra.mxu0 %v195
  %v454 = vpop.f32.mrf.mxu0
  %v455 = vadd.f32 %v105, %v454
  %v456 = vpop.f32.mrf.mxu0
  %v457 = vpop.f32.mrf.mxu0
  %v458 = vpop.f32.mrf.mxu0
  %459 = vdwg.mxu0
  %v460 = vmax.f32 %v239, 0.0
  %v461 = vmax.f32 %v242, 0.0
  %v462 = vmax.f32 %v247, 0.0
  %v463 = vmax.f32 %v250, 0.0
  %v464 = vmax.f32 %v255, 0.0
  %v465 = vmax.f32 %v258, 0.0
  %v466 = vmax.f32 %v263, 0.0
  %v467 = vmax.f32 %v266, 0.0
  %v468 = vmax.f32 %v271, 0.0
  %v469 = vmax.f32 %v274, 0.0
  %v470 = vmax.f32 %v279, 0.0
  %v471 = vmax.f32 %v282, 0.0
  %v472 = vmax.f32 %v287, 0.0
  %v473 = vmax.f32 %v290, 0.0
  %v474 = vmax.f32 %v295, 0.0
  %v475 = vmax.f32 %v298, 0.0
  %v476 = vmax.f32 %v303, 0.0
  %v477 = vmax.f32 %v306, 0.0
  %v478 = vmax.f32 %v311, 0.0
  %v479 = vmax.f32 %v314, 0.0
  %v480 = vmax.f32 %v319, 0.0
  %v481 = vmax.f32 %v322, 0.0
  %v482 = vmax.f32 %v327, 0.0
  %v483 = vmax.f32 %v330, 0.0
  %v484 = vmax.f32 %v335, 0.0
  %v485 = vmax.f32 %v338, 0.0
  %v486 = vmax.f32 %v343, 0.0
  %v487 = vmax.f32 %v346, 0.0
  %v488 = vmax.f32 %v351, 0.0
  %v489 = vmax.f32 %v354, 0.0
  %v490 = vmax.f32 %v359, 0.0
  %v491 = vmax.f32 %v362, 0.0
  %v492 = vmax.f32 %v367, 0.0
  %v493 = vmax.f32 %v370, 0.0
  %v494 = vmax.f32 %v375, 0.0
  %v495 = vmax.f32 %v378, 0.0
  %v496 = vmax.f32 %v383, 0.0
  %v497 = vmax.f32 %v386, 0.0
  %v498 = vmax.f32 %v391, 0.0
  %v499 = vmax.f32 %v394, 0.0
  %v500 = vmax.f32 %v399, 0.0
  %v501 = vmax.f32 %v402, 0.0
  %v502 = vmax.f32 %v407, 0.0
  %v503 = vmax.f32 %v410, 0.0
  %v504 = vmax.f32 %v415, 0.0
  %v505 = vmax.f32 %v418, 0.0
  %v506 = vmax.f32 %v423, 0.0
  %v507 = vmax.f32 %v426, 0.0
  %v508 = vmax.f32 %v431, 0.0
  %v509 = vmax.f32 %v434, 0.0
  %v510 = vmax.f32 %v439, 0.0
  %v511 = vmax.f32 %v442, 0.0
  %v512 = vmax.f32 %v447, 0.0
  %v513 = vmax.f32 %v450, 0.0
  %v514 = vmax.f32 %v455, 0.0
  %vm515 = vcmask 261120
  %516 = vst.msk [vmem:[%s3] sm:$0xff] %vm515, %v460
  %517 = vst.msk [vmem:[%s3 + $0x8] sm:$0xff] %vm515, %v461
  %518 = vst.msk [vmem:[%s3 + $0x10] sm:$0xff] %vm515, %v462
  %519 = vst.msk [vmem:[%s3 + $0x18] sm:$0xff] %vm515, %v463
  %520 = vst.msk [vmem:[%s3 + $0x20] sm:$0xff] %vm515, %v464
  %521 = vst.msk [vmem:[%s3 + $0x28] sm:$0xff] %vm515, %v465
  %522 = vst.msk [vmem:[%s3 + $0x30] sm:$0xff] %vm515, %v466
  %523 = vst.msk [vmem:[%s3 + $0x38] sm:$0xff] %vm515, %v467
  %524 = vst.msk [vmem:[%s3 + $0x40] sm:$0xff] %vm515, %v468
  %525 = vst.msk [vmem:[%s3 + $0x48] sm:$0xff] %vm515, %v469
  %526 = vst.msk [vmem:[%s3 + $0x50] sm:$0xff] %vm515, %v470
  %527 = vst.msk [vmem:[%s3 + $0x58] sm:$0xff] %vm515, %v471
  %528 = vst.msk [vmem:[%s3 + $0x60] sm:$0xff] %vm515, %v472
  %529 = vst.msk [vmem:[%s3 + $0x68] sm:$0xff] %vm515, %v473
  %530 = vst.msk [vmem:[%s3 + $0x70] sm:$0xff] %vm515, %v474
  %531 = vst.msk [vmem:[%s3 + $0x78] sm:$0xff] %vm515, %v475
  %532 = vst.msk [vmem:[%s3 + $0x80] sm:$0xff] %vm515, %v476
  %533 = vst.msk [vmem:[%s3 + $0x88] sm:$0xff] %vm515, %v477
  %534 = vst.msk [vmem:[%s3 + $0x90] sm:$0xff] %vm515, %v478
  %535 = vst.msk [vmem:[%s3 + $0x98] sm:$0xff] %vm515, %v479
  %536 = vst.msk [vmem:[%s3 + $0xa0] sm:$0xff] %vm515, %v480
  %537 = vst.msk [vmem:[%s3 + $0xa8] sm:$0xff] %vm515, %v481
  %538 = vst.msk [vmem:[%s3 + $0xb0] sm:$0xff] %vm515, %v482
  %539 = vst.msk [vmem:[%s3 + $0xb8] sm:$0xff] %vm515, %v483
  %540 = vst.msk [vmem:[%s3 + $0xc0] sm:$0xff] %vm515, %v484
  %541 = vst.msk [vmem:[%s3 + $0xc8] sm:$0xff] %vm515, %v485
  %542 = vst.msk [vmem:[%s3 + $0xd0] sm:$0xff] %vm515, %v486
  %543 = vst.msk [vmem:[%s3 + $0xd8] sm:$0xff] %vm515, %v487
  %544 = vst.msk [vmem:[%s3 + $0xe0] sm:$0xff] %vm515, %v488
  %545 = vst.msk [vmem:[%s3 + $0xe8] sm:$0xff] %vm515, %v489
  %546 = vst.msk [vmem:[%s3 + $0xf0] sm:$0xff] %vm515, %v490
  %547 = vst.msk [vmem:[%s3 + $0xf8] sm:$0xff] %vm515, %v491
  %548 = vst.msk [vmem:[%s3 + $0x100] sm:$0xff] %vm515, %v492
  %549 = vst.msk [vmem:[%s3 + $0x108] sm:$0xff] %vm515, %v493
  %550 = vst.msk [vmem:[%s3 + $0x110] sm:$0xff] %vm515, %v494
  %551 = vst.msk [vmem:[%s3 + $0x118] sm:$0xff] %vm515, %v495
  %552 = vst.msk [vmem:[%s3 + $0x120] sm:$0xff] %vm515, %v496
  %553 = vst.msk [vmem:[%s3 + $0x128] sm:$0xff] %vm515, %v497
  %554 = vst.msk [vmem:[%s3 + $0x130] sm:$0xff] %vm515, %v498
  %555 = vst.msk [vmem:[%s3 + $0x138] sm:$0xff] %vm515, %v499
  %556 = vst.msk [vmem:[%s3 + $0x140] sm:$0xff] %vm515, %v500
  %557 = vst.msk [vmem:[%s3 + $0x148] sm:$0xff] %vm515, %v501
  %558 = vst.msk [vmem:[%s3 + $0x150] sm:$0xff] %vm515, %v502
  %559 = vst.msk [vmem:[%s3 + $0x158] sm:$0xff] %vm515, %v503
  %560 = vst.msk [vmem:[%s3 + $0x160] sm:$0xff] %vm515, %v504
  %561 = vst.msk [vmem:[%s3 + $0x168] sm:$0xff] %vm515, %v505
  %562 = vst.msk [vmem:[%s3 + $0x170] sm:$0xff] %vm515, %v506
  %563 = vst.msk [vmem:[%s3 + $0x178] sm:$0xff] %vm515, %v507
  %564 = vst.msk [vmem:[%s3 + $0x180] sm:$0xff] %vm515, %v508
  %565 = vst.msk [vmem:[%s3 + $0x188] sm:$0xff] %vm515, %v509
  %566 = vst.msk [vmem:[%s3 + $0x190] sm:$0xff] %vm515, %v510
  %567 = vst.msk [vmem:[%s3 + $0x198] sm:$0xff] %vm515, %v511
  %568 = vst.msk [vmem:[%s3 + $0x1a0] sm:$0xff] %vm515, %v512
  %569 = vst.msk [vmem:[%s3 + $0x1a8] sm:$0xff] %vm515, %v513
  %vm570 = vcmask 254976
  %571 = vst.msk [vmem:[%s3 + $0x1b0] sm:$0x3] %vm570, %v514
  // Predicated region
  $region14: #{encoder_forward.6} parent=0 // pred_check
    _
  $region15: #{encoder_forward.6} parent=0 // pred_check_branch
    %573 = sbr.rel (0) target = $region17
  $region16: #{encoder_forward.6} parent=0 // pred_region
    _
  $region17: #{encoder_forward.6} parent=0 // pred_fallthru
    _
  // Predicated region
  $region18: #{encoder_forward.6} parent=0 // pred_check
    _
  $region19: #{encoder_forward.6} parent=0 // pred_check_branch
    %575 = sbr.rel (0) target = $region21
  $region20: #{encoder_forward.6} parent=0 // pred_region
    _
  $region21: #{encoder_forward.6} parent=0 // pred_fallthru
    _

// kernel: encoder_forward.7
$region0: #{encoder_forward.7}
  #allocation0 [shape = 'u32[]', space=smem, size = 0x4, offset = 0x4, fixed_abs, tag = 'smem constant byte address 0x4 - core index']
  #allocation1 [shape = 'u32[144,128]{1,0:T(1,128)}', space=vmem, size = 0x12000, scoped, tag = 'internal scratch']
  %s0 = inlined_call_operand.vmem [shape: f32[90,288], index: 0, kind: input, shape index: {}]
  %s1 = inlined_call_operand.vmem [shape: bf16[288,32], index: 1, kind: input, shape index: {}]
  %s2 = inlined_call_operand.vmem [shape: f32[1,32], index: 2, kind: input, shape index: {}]
  %s3 = inlined_call_operand.vmem [shape: f32[90,32], index: 3, kind: output, shape index: {}]
  %s4 = sld [smem:[#allocation0]]
  $region22: #{encoder_forward.7} parent=0
    _
  %s6 = ssub.s32 1, %s4
  %s7 = scalar_select 0, %s6, %s4
  // Predicated region
  $region2: #{encoder_forward.7} parent=0 // pred_check
    _
  $region3: #{encoder_forward.7} parent=0 // pred_check_branch
    %9 = sbr.rel (0) target = $region5
  $region4: #{encoder_forward.7} parent=0 // pred_region
    _
  $region5: #{encoder_forward.7} parent=0 // pred_fallthru
    _
  // Predicated region
  $region6: #{encoder_forward.7} parent=0 // pred_check
    _
  $region7: #{encoder_forward.7} parent=0 // pred_check_branch
    %11 = sbr.rel (0) target = $region9
  $region8: #{encoder_forward.7} parent=0 // pred_region
    _
  $region9: #{encoder_forward.7} parent=0 // pred_fallthru
    _
  // Predicated region
  $region10: #{encoder_forward.7} parent=0 // pred_check
    _
  $region11: #{encoder_forward.7} parent=0 // pred_check_branch
    %13 = sbr.rel (0) target = $region13
  $region12: #{encoder_forward.7} parent=0 // pred_region
    _
  $region13: #{encoder_forward.7} parent=0 // pred_fallthru
    _
  %v15 = vld [vmem:[%s0] sm:$0xff]
  %v16 = vld [vmem:[%s0 + $0x8] sm:$0xff]
  %v17 = vld [vmem:[%s0 + $0x10] sm:$0xff]
  %v18 = vld [vmem:[%s0 + $0x18] sm:$0xff]
  %v19 = vld [vmem:[%s0 + $0x20] sm:$0xff]
  %v20 = vld [vmem:[%s0 + $0x28] sm:$0xff]
  %v21 = vld [vmem:[%s0 + $0x30] sm:$0xff]
  %v22 = vld [vmem:[%s0 + $0x38] sm:$0xff]
  %v23 = vld [vmem:[%s0 + $0x40] sm:$0xff]
  %v24 = vld [vmem:[%s0 + $0x48] sm:$0xff]
  %v25 = vld [vmem:[%s0 + $0x50] sm:$0xff]
  %v26 = vld [vmem:[%s0 + $0x58] sm:$0xff]
  %v27 = vld [vmem:[%s0 + $0x60] sm:$0xff]
  %v28 = vld [vmem:[%s0 + $0x68] sm:$0xff]
  %v29 = vld [vmem:[%s0 + $0x70] sm:$0xff]
  %v30 = vld [vmem:[%s0 + $0x78] sm:$0xff]
  %v31 = vld [vmem:[%s0 + $0x80] sm:$0xff]
  %v32 = vld [vmem:[%s0 + $0x88] sm:$0xff]
  %v33 = vld [vmem:[%s0 + $0x90] sm:$0xff]
  %v34 = vld [vmem:[%s0 + $0x98] sm:$0xff]
  %v35 = vld [vmem:[%s0 + $0xa0] sm:$0xff]
  %v36 = vld [vmem:[%s0 + $0xa8] sm:$0xff]
  %v37 = vld [vmem:[%s0 + $0xb0] sm:$0xff]
  %v38 = vld [vmem:[%s0 + $0xb8] sm:$0xff]
  %v39 = vld [vmem:[%s0 + $0xc0] sm:$0xff]
  %v40 = vld [vmem:[%s0 + $0xc8] sm:$0xff]
  %v41 = vld [vmem:[%s0 + $0xd0] sm:$0xff]
  %v42 = vld [vmem:[%s0 + $0xd8] sm:$0xff]
  %v43 = vld [vmem:[%s0 + $0xe0] sm:$0xff]
  %v44 = vld [vmem:[%s0 + $0xe8] sm:$0xff]
  %v45 = vld [vmem:[%s0 + $0xf0] sm:$0xff]
  %v46 = vld [vmem:[%s0 + $0xf8] sm:$0xff]
  %v47 = vld [vmem:[%s0 + $0x100] sm:$0xff]
  %v48 = vld [vmem:[%s0 + $0x108] sm:$0x3]
  %v49 = vld [vmem:[%s0 + $0x110] sm:$0x3]
  %v50 = vld [vmem:[%s0 + $0x118] sm:$0x3]
  %v51 = vpack.c.bf16 %v18, %v15
  %v52 = vpack.c.bf16 %v19, %v16
  %v53 = vpack.c.bf16 %v20, %v17
  %v54 = vpack.c.bf16 %v24, %v21
  %v55 = vpack.c.bf16 %v25, %v22
  %v56 = vpack.c.bf16 %v26, %v23
  %v57 = vpack.c.bf16 %v30, %v27
  %v58 = vpack.c.bf16 %v31, %v28
  %v59 = vpack.c.bf16 %v32, %v29
  %v60 = vpack.c.bf16 %v36, %v33
  %v61 = vpack.c.bf16 %v37, %v34
  %v62 = vpack.c.bf16 %v38, %v35
  %v63 = vpack.c.bf16 %v42, %v39
  %v64 = vpack.c.bf16 %v43, %v40
  %v65 = vpack.c.bf16 %v44, %v41
  %v66 = vpack.c.bf16 %v48, %v45
  %v67 = vpack.c.bf16 %v49, %v46
  %v68 = vpack.c.bf16 %v50, %v47
  %v69 = vld [vmem:[%s1] sm:$0xf]
  %v70 = vld [vmem:[%s1 + $0x4] sm:$0xf]
  %v71 = vld [vmem:[%s1 + $0x8] sm:$0xf]
  %v72 = vld [vmem:[%s1 + $0xc] sm:$0xf]
  %v73 = vld [vmem:[%s1 + $0x10] sm:$0xf]
  %v74 = vld [vmem:[%s1 + $0x14] sm:$0xf]
  %v75 = vld [vmem:[%s1 + $0x18] sm:$0xf]
  %v76 = vld [vmem:[%s1 + $0x1c] sm:$0xf]
  %v77 = vld [vmem:[%s1 + $0x20] sm:$0xf]
  %v78 = vld [vmem:[%s1 + $0x24] sm:$0xf]
  %v79 = vld [vmem:[%s1 + $0x28] sm:$0xf]
  %v80 = vld [vmem:[%s1 + $0x2c] sm:$0xf]
  %v81 = vld [vmem:[%s1 + $0x30] sm:$0xf]
  %v82 = vld [vmem:[%s1 + $0x34] sm:$0xf]
  %v83 = vld [vmem:[%s1 + $0x38] sm:$0xf]
  %v84 = vld [vmem:[%s1 + $0x3c] sm:$0xf]
  %v85 = vld [vmem:[%s1 + $0x40] sm:$0xf]
  %v86 = vld [vmem:[%s1 + $0x44] sm:$0xf]
  %v87 = vld [vmem:[%s1 + $0x48] sm:$0xf]
  %v88 = vld [vmem:[%s1 + $0x4c] sm:$0xf]
  %v89 = vld [vmem:[%s1 + $0x50] sm:$0xf]
  %v90 = vld [vmem:[%s1 + $0x54] sm:$0xf]
  %v91 = vld [vmem:[%s1 + $0x58] sm:$0xf]
  %v92 = vld [vmem:[%s1 + $0x5c] sm:$0xf]
  %v93 = vld [vmem:[%s1 + $0x60] sm:$0xf]
  %v94 = vld [vmem:[%s1 + $0x64] sm:$0xf]
  %v95 = vld [vmem:[%s1 + $0x68] sm:$0xf]
  %v96 = vld [vmem:[%s1 + $0x6c] sm:$0xf]
  %v97 = vld [vmem:[%s1 + $0x70] sm:$0xf]
  %v98 = vld [vmem:[%s1 + $0x74] sm:$0xf]
  %v99 = vld [vmem:[%s1 + $0x78] sm:$0xf]
  %v100 = vld [vmem:[%s1 + $0x7c] sm:$0xf]
  %v101 = vld [vmem:[%s1 + $0x80] sm:$0xf]
  %v102 = vld [vmem:[%s1 + $0x84] sm:$0xf]
  %v103 = vld [vmem:[%s1 + $0x88] sm:$0xf]
  %v104 = vld [vmem:[%s1 + $0x8c] sm:$0xf]
  %v105 = vld [vmem:[%s2] sm:$0x1]
  %v107 = vlaneseq
  %v108 = vshrl.u32 %v107, 7
  %v109 = vsub.s32 0, %v108
  %v110 = vrot.slane %v105, %v109
  %v148 = vunpack.c.l.b16 %v69
  %v149 = vunpack.c.l.b16 %v70
  %v150 = vunpack.c.l.b16 %v71
  %v151 = vunpack.c.l.b16 %v72
  %v152 = vunpack.c.l.b16 %v73
  %v153 = vunpack.c.l.b16 %v74
  %v154 = vunpack.c.l.b16 %v75
  %v155 = vunpack.c.l.b16 %v76
  %v156 = vunpack.c.l.b16 %v77
  %v157 = vunpack.c.l.b16 %v78
  %v158 = vunpack.c.l.b16 %v79
  %v159 = vunpack.c.l.b16 %v80
  %v160 = vunpack.c.l.b16 %v81
  %v161 = vunpack.c.l.b16 %v82
  %v162 = vunpack.c.l.b16 %v83
  %v163 = vunpack.c.l.b16 %v84
  %v164 = vunpack.c.l.b16 %v85
  %v165 = vunpack.c.l.b16 %v86
  %v166 = vunpack.c.l.b16 %v87
  %v167 = vunpack.c.l.b16 %v88
  %v168 = vunpack.c.l.b16 %v89
  %v169 = vunpack.c.l.b16 %v90
  %v170 = vunpack.c.l.b16 %v91
  %v171 = vunpack.c.l.b16 %v92
  %v172 = vunpack.c.l.b16 %v93
  %v173 = vunpack.c.l.b16 %v94
  %v174 = vunpack.c.l.b16 %v95
  %v175 = vunpack.c.l.b16 %v96
  %v176 = vunpack.c.l.b16 %v97
  %v177 = vunpack.c.l.b16 %v98
  %v178 = vunpack.c.l.b16 %v99
  %v179 = vunpack.c.l.b16 %v100
  %v180 = vunpack.c.l.b16 %v101
  %v181 = vunpack.c.l.b16 %v102
  %v182 = vunpack.c.l.b16 %v103
  %v183 = vunpack.c.l.b16 %v104
  %v184 = vpack.c.b16 %v149, %v148
  %v185 = vpack.c.b16 %v151, %v150
  %v186 = vpack.c.b16 %v153, %v152
  %v187 = vpack.c.b16 %v155, %v154
  %v188 = vpack.c.b16 %v157, %v156
  %v189 = vpack.c.b16 %v159, %v158
  %v190 = vpack.c.b16 %v161, %v160
  %v191 = vpack.c.b16 %v163, %v162
  %v192 = vpack.c.b16 %v165, %v164
  %v193 = vpack.c.b16 %v167, %v166
  %v194 = vpack.c.b16 %v169, %v168
  %v195 = vpack.c.b16 %v171, %v170
  %v196 = vpack.c.b16 %v173, %v172
  %v197 = vpack.c.b16 %v175, %v174
  %v198 = vpack.c.b16 %v177, %v176
  %v199 = vpack.c.b16 %v179, %v178
  %v200 = vpack.c.b16 %v181, %v180
  %v201 = vpack.c.b16 %v183, %v182
  %vm220 = vcmask 261120
  %v222 = vsel %vm220, %v53, 0
  %v225 = vsel %vm220, %v56, 0
  %v228 = vsel %vm220, %v59, 0
  %v231 = vsel %vm220, %v62, 0
  %v234 = vsel %vm220, %v65, 0
  %v237 = vsel %vm220, %v68, 0
  %239 = vmatprep.subr.bf16.mxu0 0
  %240 = vmatpush1.bf16.msra.mxu0 %v191
  %241 = vmatprep.subr.bf16.mxu0 0
  %242 = vmatpush1.bf16.msra.mxu0 %v190
  %243 = vmatprep.subr.bf16.mxu0 0
  %244 = vmatpush1.bf16.msra.mxu0 %v189
  %245 = vmatprep.subr.bf16.mxu0 0
  %246 = vmatpush1.bf16.msra.mxu0 %v188
  %247 = vmatprep.subr.bf16.mxu0 0
  %248 = vmatpush1.bf16.msra.mxu0 %v187
  %249 = vmatprep.subr.bf16.mxu0 0
  %250 = vmatpush1.bf16.msra.mxu0 %v186
  %251 = vmatprep.subr.bf16.mxu0 0
  %252 = vmatpush1.bf16.msra.mxu0 %v185
  %253 = vmatprep.subr.bf16.mxu0 0
  %254 = vmatpush1.bf16.msra.mxu0 %v184
  %255 = vmatprep.subr.bf16.mxu0 0
  %256 = vmatpush2.bf16.msra.mxu0 %v199
  %257 = vmatprep.subr.bf16.mxu0 0
  %258 = vmatpush2.bf16.msra.mxu0 %v198
  %259 = vmatprep.subr.bf16.mxu0 0
  %260 = vmatpush2.bf16.msra.mxu0 %v197
  %261 = vmatprep.subr.bf16.mxu0 0
  %262 = vmatpush2.bf16.msra.mxu0 %v196
  %263 = vmatprep.subr.bf16.mxu0 0
  %264 = vmatpush2.bf16.msra.mxu0 %v195
  %265 = vmatprep.subr.bf16.mxu0 0
  %266 = vmatpush2.bf16.msra.mxu0 %v194
  %267 = vmatprep.subr.bf16.mxu0 0
  %268 = vmatpush2.bf16.msra.mxu0 %v193
  %269 = vmatprep.subr.bf16.mxu0 0
  %270 = vmatpush2.bf16.msra.mxu0 %v192
  %271 = vmatprep.mubr.bf16.mxu0 %v52
  %272 = vmatmul.mubr.bf16.gmra.mxu0 %v51
  %v273 = vpop.f32.mrf.mxu0
  %v274 = vadd.f32 %v110, %v273
  %v275 = vpop.f32.mrf.mxu0
  %v276 = vpop.f32.mrf.mxu0
  %v277 = vadd.f32 %v110, %v276
  %v278 = vpop.f32.mrf.mxu0
  %279 = vmatprep.mubr.bf16.mxu0 %v55
  %280 = vmatmul.mubr.bf16.gmra.mxu0 %v54
  %v281 = vpop.f32.mrf.mxu0
  %v282 = vadd.f32 %v110, %v281
  %v283 = vpop.f32.mrf.mxu0
  %v284 = vpop.f32.mrf.mxu0
  %v285 = vadd.f32 %v110, %v284
  %v286 = vpop.f32.mrf.mxu0
  %287 = vmatprep.mubr.bf16.mxu0 %v58
  %288 = vmatmul.mubr.bf16.gmra.mxu0 %v57
  %v289 = vpop.f32.mrf.mxu0
  %v290 = vadd.f32 %v110, %v289
  %v291 = vpop.f32.mrf.mxu0
  %v292 = vpop.f32.mrf.mxu0
  %v293 = vadd.f32 %v110, %v292
  %v294 = vpop.f32.mrf.mxu0
  %295 = vmatprep.mubr.bf16.mxu0 %v61
  %296 = vmatmul.mubr.bf16.gmra.mxu0 %v60
  %v297 = vpop.f32.mrf.mxu0
  %v298 = vadd.f32 %v110, %v297
  %v299 = vpop.f32.mrf.mxu0
  %v300 = vpop.f32.mrf.mxu0
  %v301 = vadd.f32 %v110, %v300
  %v302 = vpop.f32.mrf.mxu0
  %303 = vmatprep.mubr.bf16.mxu0 %v64
  %304 = vmatmul.mubr.bf16.gmra.mxu0 %v63
  %v305 = vpop.f32.mrf.mxu0
  %v306 = vadd.f32 %v110, %v305
  %v307 = vpop.f32.mrf.mxu0
  %v308 = vpop.f32.mrf.mxu0
  %v309 = vadd.f32 %v110, %v308
  %v310 = vpop.f32.mrf.mxu0
  %311 = vmatprep.mubr.bf16.mxu0 %v67
  %312 = vmatmul.mubr.bf16.gmra.mxu0 %v66
  %v313 = vpop.f32.mrf.mxu0
  %v314 = vadd.f32 %v110, %v313
  %v315 = vpop.f32.mrf.mxu0
  %v316 = vpop.f32.mrf.mxu0
  %v317 = vadd.f32 %v110, %v316
  %v318 = vpop.f32.mrf.mxu0
  %319 = vdwg.mxu0
  %320 = vmatprep.subr.bf16.mxu0 0
  %321 = vmatpush1.bf16.msra.mxu0 0
  %322 = vmatprep.subr.bf16.mxu0 0
  %323 = vmatpush1.bf16.msra.mxu0 0
  %324 = vmatprep.subr.bf16.mxu0 0
  %325 = vmatpush1.bf16.msra.mxu0 0
  %326 = vmatprep.subr.bf16.mxu0 0
  %327 = vmatpush1.bf16.msra.mxu0 0
  %328 = vmatprep.subr.bf16.mxu0 0
  %329 = vmatpush1.bf16.msra.mxu0 0
  %330 = vmatprep.subr.bf16.mxu0 0
  %331 = vmatpush1.bf16.msra.mxu0 0
  %332 = vmatprep.subr.bf16.mxu0 0
  %333 = vmatpush1.bf16.msra.mxu0 %v201
  %334 = vmatprep.subr.bf16.mxu0 0
  %335 = vmatpush1.bf16.msra.mxu0 %v200
  %336 = vmatprep.subr.bf16.mxu0 0
  %337 = vmatpush2.bf16.msra.mxu0 0
  %338 = vmatprep.subr.bf16.mxu0 0
  %339 = vmatpush2.bf16.msra.mxu0 0
  %340 = vmatprep.subr.bf16.mxu0 0
  %341 = vmatpush2.bf16.msra.mxu0 0
  %342 = vmatprep.subr.bf16.mxu0 0
  %343 = vmatpush2.bf16.msra.mxu0 0
  %344 = vmatprep.subr.bf16.mxu0 0
  %345 = vmatpush2.bf16.msra.mxu0 0
  %346 = vmatprep.subr.bf16.mxu0 0
  %347 = vmatpush2.bf16.msra.mxu0 0
  %348 = vmatprep.subr.bf16.mxu0 0
  %349 = vmatpush2.bf16.msra.mxu0 0
  %350 = vmatprep.subr.bf16.mxu0 0
  %351 = vmatpush2.bf16.msra.mxu0 0
  %352 = vmatprep.mubr.bf16.mxu0 0
  %353 = vmatmul.mubr.bf16.gmra.mxu0 %v222
  %v354 = vpop.f32.mrf.mxu0
  %v355 = vadd.f32 %v274, %v354
  %v356 = vpop.f32.mrf.mxu0
  %v357 = vpop.f32.mrf.mxu0
  %v358 = vadd.f32 %v277, %v357
  %v359 = vpop.f32.mrf.mxu0
  %360 = vmatprep.mubr.bf16.mxu0 0
  %361 = vmatmul.mubr.bf16.gmra.mxu0 %v225
  %v362 = vpop.f32.mrf.mxu0
  %v363 = vadd.f32 %v282, %v362
  %v364 = vpop.f32.mrf.mxu0
  %v365 = vpop.f32.mrf.mxu0
  %v366 = vadd.f32 %v285, %v365
  %v367 = vpop.f32.mrf.mxu0
  %368 = vmatprep.mubr.bf16.mxu0 0
  %369 = vmatmul.mubr.bf16.gmra.mxu0 %v228
  %v370 = vpop.f32.mrf.mxu0
  %v371 = vadd.f32 %v290, %v370
  %v372 = vpop.f32.mrf.mxu0
  %v373 = vpop.f32.mrf.mxu0
  %v374 = vadd.f32 %v293, %v373
  %v375 = vpop.f32.mrf.mxu0
  %376 = vmatprep.mubr.bf16.mxu0 0
  %377 = vmatmul.mubr.bf16.gmra.mxu0 %v231
  %v378 = vpop.f32.mrf.mxu0
  %v379 = vadd.f32 %v298, %v378
  %v380 = vpop.f32.mrf.mxu0
  %v381 = vpop.f32.mrf.mxu0
  %v382 = vadd.f32 %v301, %v381
  %v383 = vpop.f32.mrf.mxu0
  %384 = vmatprep.mubr.bf16.mxu0 0
  %385 = vmatmul.mubr.bf16.gmra.mxu0 %v234
  %v386 = vpop.f32.mrf.mxu0
  %v387 = vadd.f32 %v306, %v386
  %v388 = vpop.f32.mrf.mxu0
  %v389 = vpop.f32.mrf.mxu0
  %v390 = vadd.f32 %v309, %v389
  %v391 = vpop.f32.mrf.mxu0
  %392 = vmatprep.mubr.bf16.mxu0 0
  %393 = vmatmul.mubr.bf16.gmra.mxu0 %v237
  %v394 = vpop.f32.mrf.mxu0
  %v395 = vadd.f32 %v314, %v394
  %v396 = vpop.f32.mrf.mxu0
  %v397 = vpop.f32.mrf.mxu0
  %v398 = vadd.f32 %v317, %v397
  %v399 = vpop.f32.mrf.mxu0
  %400 = vdwg.mxu0
  %v401 = vmax.f32 %v355, 0.0
  %v402 = vmax.f32 %v358, 0.0
  %v403 = vmax.f32 %v363, 0.0
  %v404 = vmax.f32 %v366, 0.0
  %v405 = vmax.f32 %v371, 0.0
  %v406 = vmax.f32 %v374, 0.0
  %v407 = vmax.f32 %v379, 0.0
  %v408 = vmax.f32 %v382, 0.0
  %v409 = vmax.f32 %v387, 0.0
  %v410 = vmax.f32 %v390, 0.0
  %v411 = vmax.f32 %v395, 0.0
  %v412 = vmax.f32 %v398, 0.0
  %413 = vst.msk [vmem:[%s3] sm:$0xff] %vm220, %v401
  %414 = vst.msk [vmem:[%s3 + $0x8] sm:$0xff] %vm220, %v402
  %415 = vst.msk [vmem:[%s3 + $0x10] sm:$0xff] %vm220, %v403
  %416 = vst.msk [vmem:[%s3 + $0x18] sm:$0xff] %vm220, %v404
  %417 = vst.msk [vmem:[%s3 + $0x20] sm:$0xff] %vm220, %v405
  %418 = vst.msk [vmem:[%s3 + $0x28] sm:$0xff] %vm220, %v406
  %419 = vst.msk [vmem:[%s3 + $0x30] sm:$0xff] %vm220, %v407
  %420 = vst.msk [vmem:[%s3 + $0x38] sm:$0xff] %vm220, %v408
  %421 = vst.msk [vmem:[%s3 + $0x40] sm:$0xff] %vm220, %v409
  %422 = vst.msk [vmem:[%s3 + $0x48] sm:$0xff] %vm220, %v410
  %423 = vst.msk [vmem:[%s3 + $0x50] sm:$0xff] %vm220, %v411
  %vm424 = vcmask 254976
  %425 = vst.msk [vmem:[%s3 + $0x58] sm:$0x3] %vm424, %v412
  // Predicated region
  $region14: #{encoder_forward.7} parent=0 // pred_check
    _
  $region15: #{encoder_forward.7} parent=0 // pred_check_branch
    %427 = sbr.rel (0) target = $region17
  $region16: #{encoder_forward.7} parent=0 // pred_region
    _
  $region17: #{encoder_forward.7} parent=0 // pred_fallthru
    _
  // Predicated region
  $region18: #{encoder_forward.7} parent=0 // pred_check
    _
  $region19: #{encoder_forward.7} parent=0 // pred_check_branch
    %429 = sbr.rel (0) target = $region21
  $region20: #{encoder_forward.7} parent=0 // pred_region
    _
  $region21: #{encoder_forward.7} parent=0 // pred_fallthru
    _

// kernel: encoder_forward.8
$region0: #{encoder_forward.8}
  #allocation0 [shape = 'u32[]', space=smem, size = 0x4, offset = 0x4, fixed_abs, tag = 'smem constant byte address 0x4 - core index']
  #allocation1 [shape = 'u32[144,128]{1,0:T(1,128)}', space=vmem, size = 0x12000, scoped, tag = 'internal scratch']
  %s0 = inlined_call_operand.vmem [shape: f32[2,15,96], index: 0, kind: input, shape index: {}]
  %s1 = inlined_call_operand.vmem [shape: bf16[96,32], index: 1, kind: input, shape index: {}]
  %s2 = inlined_call_operand.vmem [shape: f32[1,32], index: 2, kind: input, shape index: {}]
  %s3 = inlined_call_operand.vmem [shape: f32[15,32], index: 3, kind: input, shape index: {}]
  %s4 = inlined_call_operand.vmem [shape: f32[2,16,32], index: 4, kind: output, shape index: {}]
  %s5 = sld [smem:[#allocation0]]
  $region49: #{encoder_forward.8} parent=0
    _
  %s7 = ssub.s32 1, %s5
  %s8 = scalar_select 0, %s7, %s5
  loop: start=0, step=1, limit=4
  $region2: #{encoder_forward.8} parent=0 // loop_pre_header
    _
  $region3: #{encoder_forward.8} parent=0 // loop_header
    %s10 = sphi 0, %s14
    %p11 = scmp.ge.s32.totalorder %s10, 4
    %s20 = sphi 0, %s22
    %s23 = sphi 0, %s20
    %s24 = sphi 0, %s23
    %s40 = sphi 0, %s24
    %s44 = sphi 0, %s44
    %s46 = sphi 0, %s44
    %s47 = sphi 0, %s46
    %s61 = sphi 0, %s47
    %s65 = sphi 0, %s65
    %s67 = sphi 0, %s65
    %s68 = sphi 0, %s67
    %s82 = sphi 0, %s68
    %s86 = sphi 0, %s86
    %s88 = sphi 0, %s86
    %s89 = sphi 0, %s88
    %s103 = sphi 0, %s89
    %s109 = sphi 0, %s111
    %s112 = sphi 0, %s109
    %s113 = sphi 0, %s112
    %s129 = sphi 0, %s113
  $region4: #{encoder_forward.8} parent=0 // loop_header_branch
    %13 = sbr.rel (%p11) target = $region8
  $region5: #{encoder_forward.8} parent=0 // loop_body
    %s15 = ssub.s32 %s10, 1
    %s16 = ssub.s32 %s10, 2
    %s17 = sadd.s32 %s10, 1
    %s18 = ssub.s32 %s10, %s17
    %p19 = scmp.eq.s32.totalorder %s18, 0
    %s21 = sadd.s32 %s20, 1
    %s22 = scalar_select %p19, %s20, %s21
    %p25 = pneg %p19
    %p26 = scmp.eq.s32.totalorder %s10, 1
    %p27 = por %p25, %p26
    %p28 = scmp.ne.s32.totalorder %s20, %s23
    %p29 = scmp.eq.s32.totalorder %s10, 0
    %p30 = por %p28, %p29
    %p31 = scmp.ne.s32.totalorder %s20, %s23
    %p32 = scmp.eq.s32.totalorder %s15, 1
    %p33 = por %p31, %p32
    %p34 = scmp.ne.s32.totalorder %s23, %s24
    %p35 = scmp.eq.s32.totalorder %s15, 0
    %p36 = por %p34, %p35
    %p37 = scmp.ne.s32.totalorder %s23, %s24
    %p38 = scmp.eq.s32.totalorder %s16, 1
    %p39 = por %p37, %p38
    %p41 = scmp.ne.s32.totalorder %s24, %s40
    %p42 = scmp.eq.s32.totalorder %s16, 0
    %p43 = por %p41, %p42
    %s45 = sadd.s32 %s44, 1
    %p48 = scmp.eq.s32.totalorder %s10, 1
    %p49 = scmp.ne.s32.totalorder %s44, %s46
    %p50 = scmp.eq.s32.totalorder %s10, 0
    %p51 = por %p49, %p50
    %p52 = scmp.ne.s32.totalorder %s44, %s46
    %p53 = scmp.eq.s32.totalorder %s15, 1
    %p54 = por %p52, %p53
    %p55 = scmp.ne.s32.totalorder %s46, %s47
    %p56 = scmp.eq.s32.totalorder %s15, 0
    %p57 = por %p55, %p56
    %p58 = scmp.ne.s32.totalorder %s46, %s47
    %p59 = scmp.eq.s32.totalorder %s16, 1
    %p60 = por %p58, %p59
    %p62 = scmp.ne.s32.totalorder %s47, %s61
    %p63 = scmp.eq.s32.totalorder %s16, 0
    %p64 = por %p62, %p63
    %s66 = sadd.s32 %s65, 1
    %p69 = scmp.eq.s32.totalorder %s10, 1
    %p70 = scmp.ne.s32.totalorder %s65, %s67
    %p71 = scmp.eq.s32.totalorder %s10, 0
    %p72 = por %p70, %p71
    %p73 = scmp.ne.s32.totalorder %s65, %s67
    %p74 = scmp.eq.s32.totalorder %s15, 1
    %p75 = por %p73, %p74
    %p76 = scmp.ne.s32.totalorder %s67, %s68
    %p77 = scmp.eq.s32.totalorder %s15, 0
    %p78 = por %p76, %p77
    %p79 = scmp.ne.s32.totalorder %s67, %s68
    %p80 = scmp.eq.s32.totalorder %s16, 1
    %p81 = por %p79, %p80
    %p83 = scmp.ne.s32.totalorder %s68, %s82
    %p84 = scmp.eq.s32.totalorder %s16, 0
    %p85 = por %p83, %p84
    %s87 = sadd.s32 %s86, 1
    %p90 = scmp.eq.s32.totalorder %s10, 1
    %p91 = scmp.ne.s32.totalorder %s86, %s88
    %p92 = scmp.eq.s32.totalorder %s10, 0
    %p93 = por %p91, %p92
    %p94 = scmp.ne.s32.totalorder %s86, %s88
    %p95 = scmp.eq.s32.totalorder %s15, 1
    %p96 = por %p94, %p95
    %p97 = scmp.ne.s32.totalorder %s88, %s89
    %p98 = scmp.eq.s32.totalorder %s15, 0
    %p99 = por %p97, %p98
    %p100 = scmp.ne.s32.totalorder %s88, %s89
    %p101 = scmp.eq.s32.totalorder %s16, 1
    %p102 = por %p100, %p101
    %p104 = scmp.ne.s32.totalorder %s89, %s103
    %p105 = scmp.eq.s32.totalorder %s16, 0
    %p106 = por %p104, %p105
    %s107 = ssub.s32 %s10, %s17
    %p108 = scmp.eq.s32.totalorder %s107, 0
    %s110 = sadd.s32 %s109, 1
    %s111 = scalar_select %p108, %s109, %s110
    %p114 = pneg %p108
    %p115 = scmp.eq.s32.totalorder %s10, 1
    %p116 = por %p114, %p115
    %p117 = scmp.ne.s32.totalorder %s109, %s112
    %p118 = scmp.eq.s32.totalorder %s10, 0
    %p119 = por %p117, %p118
    %p120 = scmp.ne.s32.totalorder %s109, %s112
    %p121 = scmp.eq.s32.totalorder %s15, 1
    %p122 = por %p120, %p121
    %p123 = scmp.ne.s32.totalorder %s112, %s113
    %p124 = scmp.eq.s32.totalorder %s15, 0
    %p125 = por %p123, %p124
    %p126 = scmp.ne.s32.totalorder %s112, %s113
    %p127 = scmp.eq.s32.totalorder %s16, 1
    %p128 = por %p126, %p127
    %p130 = scmp.ne.s32.totalorder %s113, %s129
    %p131 = scmp.eq.s32.totalorder %s16, 0
    %p132 = por %p130, %p131
    %p133 = scmp.le.s32.totalorder 1, %s10
    %p134 = scmp.lt.s32.totalorder %s10, 3
    %p135 = pnand %p133, %p134
    %p136 = pneg %p135
    // Predicated region
    $region9: #{encoder_forward.8} parent=5 // pred_check
      _
    $region10: #{encoder_forward.8} parent=5 // pred_check_branch
      %138 = sbr.rel (%p135) target = $region12
    $region11: #{encoder_forward.8} parent=5 // pred_region
      %s139 = ssub.s32 %s10, 1
      // Predicated region
      $region13: #{encoder_forward.8} parent=11 // pred_check
        %p140 = pneg %p57
      $region14: #{encoder_forward.8} parent=11 // pred_check_branch
        %142 = sbr.rel (%p140) target = $region16
      $region15: #{encoder_forward.8} parent=11 // pred_region
        _
      $region16: #{encoder_forward.8} parent=11 // pred_fallthru
        _
      // Predicated region
      $region17: #{encoder_forward.8} parent=11 // pred_check
        %p143 = pneg %p78
      $region18: #{encoder_forward.8} parent=11 // pred_check_branch
        %145 = sbr.rel (%p143) target = $region20
      $region19: #{encoder_forward.8} parent=11 // pred_region
        _
      $region20: #{encoder_forward.8} parent=11 // pred_fallthru
        _
      // Predicated region
      $region21: #{encoder_forward.8} parent=11 // pred_check
        %p146 = pneg %p99
      $region22: #{encoder_forward.8} parent=11 // pred_check_branch
        %148 = sbr.rel (%p146) target = $region24
      $region23: #{encoder_forward.8} parent=11 // pred_region
        _
      $region24: #{encoder_forward.8} parent=11 // pred_fallthru
        _
    $region12: #{encoder_forward.8} parent=5 // pred_fallthru
      _
    %p149 = scmp.lt.s32.totalorder %s10, 2
    // Predicated region
    $region25: #{encoder_forward.8} parent=5 // pred_check
      %p150 = pneg %p149
    $region26: #{encoder_forward.8} parent=5 // pred_check_branch
      %152 = sbr.rel (%p150) target = $region28
    $region27: #{encoder_forward.8} parent=5 // pred_region
      // Predicated region
      $region29: #{encoder_forward.8} parent=27 // pred_check
        %p153 = pneg %p30
      $region30: #{encoder_forward.8} parent=27 // pred_check_branch
        %155 = sbr.rel (%p153) target = $region32
      $region31: #{encoder_forward.8} parent=27 // pred_region
        %p156 = scmp.lt.s32.totalorder %s10, 1
        %s157 = scalar_select %p156, %s10, 1
        %s158 = smul.addr %s157, 2
        %s159 = smul.addr %s158, 8
        %s160 = scalar_lea.vmem %s0, %s159
      $region32: #{encoder_forward.8} parent=27 // pred_fallthru
        _
    $region28: #{encoder_forward.8} parent=5 // pred_fallthru
      _
    %p161 = scmp.le.s32.totalorder 1, %s10
    %p162 = scmp.lt.s32.totalorder %s10, 3
    %p163 = pnand %p161, %p162
    %p164 = pneg %p163
    // Predicated region
    $region33: #{encoder_forward.8} parent=5 // pred_check
      _
    $region34: #{encoder_forward.8} parent=5 // pred_check_branch
      %166 = sbr.rel (%p163) target = $region36
    $region35: #{encoder_forward.8} parent=5 // pred_region
      %s167 = ssub.s32 %s10, 1
      %p168 = scmp.lt.s32.totalorder %s15, 1
      %s169 = scalar_select %p168, %s15, 1
      %s170 = smul.addr %s169, 2
      %s171 = smul.addr %s170, 8
      %s172 = scalar_lea.vmem %s0, %s171
      %p173 = pneg %p36
      %p174 = pneg %p33
      %p175 = pneg %p57
      %p176 = pneg %p54
      %p177 = pneg %p78
      %p178 = pneg %p75
      %p179 = pneg %p99
      %p180 = pneg %p96
      %p181 = pneg %p125
      %p182 = pneg %p122
      %p183 = scmp.lt.s32.totalorder %s15, 1
      %s184 = scalar_select %p183, %s15, 1
      %s185 = smul.addr %s184, 2
      %s186 = smul.addr %s185, 8
      %s187 = scalar_lea.vmem %s4, %s186
      %p188 = scmp.lt.s32.totalorder %s15, 1
      %s189 = scalar_select %p188, %s15, 1
      %s190 = smul.addr %s189, 2
      %s191 = smul.addr %s190, 8
      %s192 = scalar_lea.vmem %s0, %s191
      %p193 = scmp.lt.s32.totalorder %s15, 1
      %s194 = scalar_select %p193, %s15, 1
      %s195 = smul.addr %s194, 2
      %s196 = smul.addr %s195, 8
      %s197 = scalar_lea.vmem %s4, %s196
      %v199 = vld [vmem:[%s192] sm:$0xff]
      %v200 = vld [vmem:[%s192 + $0x8] sm:$0x7f]
      %v201 = vpack.c.bf16 %v200, %v199
      %v202 = vld [vmem:[%s1] sm:$0xf]
      %v203 = vld [vmem:[%s1 + $0x4] sm:$0xf]
      %v204 = vld [vmem:[%s1 + $0x8] sm:$0xf]
      %v205 = vld [vmem:[%s1 + $0xc] sm:$0xf]
      %v206 = vld [vmem:[%s1 + $0x10] sm:$0xf]
      %v207 = vld [vmem:[%s1 + $0x14] sm:$0xf]
      %v208 = vld [vmem:[%s1 + $0x18] sm:$0xf]
      %v209 = vld [vmem:[%s1 + $0x1c] sm:$0xf]
      %v210 = vld [vmem:[%s1 + $0x20] sm:$0xf]
      %v211 = vld [vmem:[%s1 + $0x24] sm:$0xf]
      %v212 = vld [vmem:[%s1 + $0x28] sm:$0xf]
      %v213 = vld [vmem:[%s1 + $0x2c] sm:$0xf]
      %v214 = vld [vmem:[%s2] sm:$0x1]
      %v216 = vlaneseq
      %v217 = vshrl.u32 %v216, 7
      %v218 = vsub.s32 0, %v217
      %v219 = vrot.slane %v214, %v218
      %v233 = vunpack.c.l.b16 %v202
      %v234 = vunpack.c.l.b16 %v203
      %v235 = vunpack.c.l.b16 %v204
      %v236 = vunpack.c.l.b16 %v205
      %v237 = vunpack.c.l.b16 %v206
      %v238 = vunpack.c.l.b16 %v207
      %v239 = vunpack.c.l.b16 %v208
      %v240 = vunpack.c.l.b16 %v209
      %v241 = vunpack.c.l.b16 %v210
      %v242 = vunpack.c.l.b16 %v211
      %v243 = vunpack.c.l.b16 %v212
      %v244 = vunpack.c.l.b16 %v213
      %v245 = vpack.c.b16 %v234, %v233
      %v246 = vpack.c.b16 %v236, %v235
      %v247 = vpack.c.b16 %v238, %v237
      %v248 = vpack.c.b16 %v240, %v239
      %v249 = vpack.c.b16 %v242, %v241
      %v250 = vpack.c.b16 %v244, %v243
      %vm257 = vcmask 785408
      %v259 = vsel %vm257, %v201, 0
      %261 = vmatprep.subr.bf16.mxu0 0
      %262 = vmatpush1.bf16.msra.mxu0 0
      %263 = vmatprep.subr.bf16.mxu0 0
      %264 = vmatpush1.bf16.msra.mxu0 0
      %265 = vmatprep.subr.bf16.mxu0 0
      %266 = vmatpush1.bf16.msra.mxu0 %v250
      %267 = vmatprep.subr.bf16.mxu0 0
      %268 = vmatpush1.bf16.msra.mxu0 %v249
      %269 = vmatprep.subr.bf16.mxu0 0
      %270 = vmatpush1.bf16.msra.mxu0 %v248
      %271 = vmatprep.subr.bf16.mxu0 0
      %272 = vmatpush1.bf16.msra.mxu0 %v247
      %273 = vmatprep.subr.bf16.mxu0 0
      %274 = vmatpush1.bf16.msra.mxu0 %v246
      %275 = vmatprep.subr.bf16.mxu0 0
      %276 = vmatpush1.bf16.msra.mxu0 %v245
      %277 = vmatprep.subr.bf16.mxu0 0
      %278 = vmatpush2.bf16.msra.mxu0 0
      %279 = vmatprep.subr.bf16.mxu0 0
      %280 = vmatpush2.bf16.msra.mxu0 0
      %281 = vmatprep.subr.bf16.mxu0 0
      %282 = vmatpush2.bf16.msra.mxu0 0
      %283 = vmatprep.subr.bf16.mxu0 0
      %284 = vmatpush2.bf16.msra.mxu0 0
      %285 = vmatprep.subr.bf16.mxu0 0
      %286 = vmatpush2.bf16.msra.mxu0 0
      %287 = vmatprep.subr.bf16.mxu0 0
      %288 = vmatpush2.bf16.msra.mxu0 0
      %289 = vmatprep.subr.bf16.mxu0 0
      %290 = vmatpush2.bf16.msra.mxu0 0
      %291 = vmatprep.subr.bf16.mxu0 0
      %292 = vmatpush2.bf16.msra.mxu0 0
      %293 = vmatprep.mubr.bf16.mxu0 0
      %294 = vmatmul.mubr.bf16.gmra.mxu0 %v259
      %v295 = vpop.f32.mrf.mxu0
      %v296 = vadd.f32 %v219, %v295
      %v297 = vpop.f32.mrf.mxu0
      %v298 = vpop.f32.mrf.mxu0
      %v299 = vadd.f32 %v219, %v298
      %v300 = vpop.f32.mrf.mxu0
      %301 = vdwg.mxu0
      %v302 = vmul.f32 %v296, 5.656854
      %v303 = vmul.f32 %v299, 5.656854
      %v304 = vld [vmem:[%s3] sm:$0xff]
      %v305 = vld [vmem:[%s3 + $0x8] sm:$0x7f]
      %v306 = vadd.f32 %v302, %v304
      %v307 = vadd.f32 %v303, %v305
      %vm308 = vcmask 261120
      %309 = vst.msk [vmem:[%s197] sm:$0xff] %vm308, %v306
      %vm310 = vcmask 260096
      %311 = vst.msk [vmem:[%s197 + $0x8] sm:$0x7f] %vm310, %v307
      %vm312 = vcmask 253952
      %313 = vst.msk [vmem:[%s197 + $0xf] sm:$0x1] %vm312, 0.0
      %p314 = scmp.lt.s32.totalorder %s15, 1
      %s315 = scalar_select %p314, %s15, 1
      %s316 = smul.addr %s315, 2
      %s317 = smul.addr %s316, 8
      %s318 = scalar_lea.vmem %s4, %s317
      // Predicated region
      $region37: #{encoder_forward.8} parent=35 // pred_check
        %p319 = pneg %p122
      $region38: #{encoder_forward.8} parent=35 // pred_check_branch
        %321 = sbr.rel (%p319) target = $region40
      $region39: #{encoder_forward.8} parent=35 // pred_region
        _
      $region40: #{encoder_forward.8} parent=35 // pred_fallthru
        _
    $region36: #{encoder_forward.8} parent=5 // pred_fallthru
      _
    %p322 = scmp.le.s32.totalorder 2, %s10
    // Predicated region
    $region41: #{encoder_forward.8} parent=5 // pred_check
      %p323 = pneg %p322
    $region42: #{encoder_forward.8} parent=5 // pred_check_branch
      %325 = sbr.rel (%p323) target = $region44
    $region43: #{encoder_forward.8} parent=5 // pred_region
      %s326 = ssub.s32 %s10, 2
      // Predicated region
      $region45: #{encoder_forward.8} parent=43 // pred_check
        %p327 = pneg %p128
      $region46: #{encoder_forward.8} parent=43 // pred_check_branch
        %329 = sbr.rel (%p327) target = $region48
      $region47: #{encoder_forward.8} parent=43 // pred_region
        %p330 = scmp.lt.s32.totalorder %s16, 1
        %s331 = scalar_select %p330, %s16, 1
        %s332 = smul.addr %s331, 2
        %s333 = smul.addr %s332, 8
        %s334 = scalar_lea.vmem %s4, %s333
      $region48: #{encoder_forward.8} parent=43 // pred_fallthru
        _
    $region44: #{encoder_forward.8} parent=5 // pred_fallthru
      _
  $region6: #{encoder_forward.8} parent=0 // loop_footer
    %s14 = sadd.s32 1, %s10
  $region7: #{encoder_forward.8} parent=0 // loop_footer_branch
    %9 = sbr.rel target = $region3
  $region8: #{encoder_forward.8} parent=0 // loop_exit
    _

// kernel: encoder_forward.11
$region0: #{encoder_forward.11}
  #allocation0 [shape = 'u32[]', space=smem, size = 0x4, offset = 0x4, fixed_abs, tag = 'smem constant byte address 0x4 - core index']
  #allocation1 [shape = 'u32[144,128]{1,0:T(1,128)}', space=vmem, size = 0x12000, scoped, tag = 'internal scratch']
  %s0 = inlined_call_operand.vmem [shape: f32[2,16,32], index: 0, kind: input, shape index: {}]
  %s1 = inlined_call_operand.vmem [shape: f32[1,32], index: 1, kind: input, shape index: {}]
  %s2 = inlined_call_operand.vmem [shape: f32[1,32], index: 2, kind: input, shape index: {}]
  %s3 = inlined_call_operand.vmem [shape: bf16[32,32], index: 3, kind: input, shape index: {}]
  %s4 = inlined_call_operand.vmem [shape: f32[1,32], index: 4, kind: input, shape index: {}]
  %s5 = inlined_call_operand.vmem [shape: f32[2,16,32], index: 5, kind: output, shape index: {0}]
  %s6 = inlined_call_operand.vmem [shape: f32[2,16,32], index: 6, kind: output, shape index: {1}]
  %s7 = inlined_call_operand.vmem [shape: f32[2,16,10], index: 7, kind: output, shape index: {2}]
  %s8 = inlined_call_operand.vmem [shape: s32[2,16,10], index: 8, kind: output, shape index: {3}]
  %9 = xla_tuple %s5, %s6, %s7, %s8
  %s10 = sld [smem:[#allocation0]]
  $region77: #{encoder_forward.11} parent=0
    _
  %s12 = ssub.s32 1, %s10
  %s13 = scalar_select 0, %s12, %s10
  loop: start=0, step=1, limit=4
  $region2: #{encoder_forward.11} parent=0 // loop_pre_header
    _
  $region3: #{encoder_forward.11} parent=0 // loop_header
    %s15 = sphi 0, %s19
    %p16 = scmp.ge.s32.totalorder %s15, 4
    %s25 = sphi 0, %s27
    %s28 = sphi 0, %s25
    %s29 = sphi 0, %s28
    %s45 = sphi 0, %s29
    %s49 = sphi 0, %s49
    %s51 = sphi 0, %s49
    %s52 = sphi 0, %s51
    %s66 = sphi 0, %s52
    %s70 = sphi 0, %s70
    %s72 = sphi 0, %s70
    %s73 = sphi 0, %s72
    %s87 = sphi 0, %s73
    %s91 = sphi 0, %s91
    %s93 = sphi 0, %s91
    %s94 = sphi 0, %s93
    %s108 = sphi 0, %s94
    %s112 = sphi 0, %s112
    %s114 = sphi 0, %s112
    %s115 = sphi 0, %s114
    %s129 = sphi 0, %s115
    %s135 = sphi 0, %s137
    %s138 = sphi 0, %s135
    %s139 = sphi 0, %s138
    %s155 = sphi 0, %s139
    %s161 = sphi 0, %s163
    %s164 = sphi 0, %s161
    %s165 = sphi 0, %s164
    %s181 = sphi 0, %s165
    %s187 = sphi 0, %s189
    %s190 = sphi 0, %s187
    %s191 = sphi 0, %s190
    %s207 = sphi 0, %s191
    %s213 = sphi 0, %s215
    %s216 = sphi 0, %s213
    %s217 = sphi 0, %s216
    %s233 = sphi 0, %s217
  $region4: #{encoder_forward.11} parent=0 // loop_header_branch
    %18 = sbr.rel (%p16) target = $region8
  $region5: #{encoder_forward.11} parent=0 // loop_body
    %s20 = ssub.s32 %s15, 1
    %s21 = ssub.s32 %s15, 2
    %s22 = sadd.s32 %s15, 1
    %s23 = ssub.s32 %s15, %s22
    %p24 = scmp.eq.s32.totalorder %s23, 0
    %s26 = sadd.s32 %s25, 1
    %s27 = scalar_select %p24, %s25, %s26
    %p30 = pneg %p24
    %p31 = scmp.eq.s32.totalorder %s15, 1
    %p32 = por %p30, %p31
    %p33 = scmp.ne.s32.totalorder %s25, %s28
    %p34 = scmp.eq.s32.totalorder %s15, 0
    %p35 = por %p33, %p34
    %p36 = scmp.ne.s32.totalorder %s25, %s28
    %p37 = scmp.eq.s32.totalorder %s20, 1
    %p38 = por %p36, %p37
    %p39 = scmp.ne.s32.totalorder %s28, %s29
    %p40 = scmp.eq.s32.totalorder %s20, 0
    %p41 = por %p39, %p40
    %p42 = scmp.ne.s32.totalorder %s28, %s29
    %p43 = scmp.eq.s32.totalorder %s21, 1
    %p44 = por %p42, %p43
    %p46 = scmp.ne.s32.totalorder %s29, %s45
    %p47 = scmp.eq.s32.totalorder %s21, 0
    %p48 = por %p46, %p47
    %s50 = sadd.s32 %s49, 1
    %p53 = scmp.eq.s32.totalorder %s15, 1
    %p54 = scmp.ne.s32.totalorder %s49, %s51
    %p55 = scmp.eq.s32.totalorder %s15, 0
    %p56 = por %p54, %p55
    %p57 = scmp.ne.s32.totalorder %s49, %s51
    %p58 = scmp.eq.s32.totalorder %s20, 1
    %p59 = por %p57, %p58
    %p60 = scmp.ne.s32.totalorder %s51, %s52
    %p61 = scmp.eq.s32.totalorder %s20, 0
    %p62 = por %p60, %p61
    %p63 = scmp.ne.s32.totalorder %s51, %s52
    %p64 = scmp.eq.s32.totalorder %s21, 1
    %p65 = por %p63, %p64
    %p67 = scmp.ne.s32.totalorder %s52, %s66
    %p68 = scmp.eq.s32.totalorder %s21, 0
    %p69 = por %p67, %p68
    %s71 = sadd.s32 %s70, 1
    %p74 = scmp.eq.s32.totalorder %s15, 1
    %p75 = scmp.ne.s32.totalorder %s70, %s72
    %p76 = scmp.eq.s32.totalorder %s15, 0
    %p77 = por %p75, %p76
    %p78 = scmp.ne.s32.totalorder %s70, %s72
    %p79 = scmp.eq.s32.totalorder %s20, 1
    %p80 = por %p78, %p79
    %p81 = scmp.ne.s32.totalorder %s72, %s73
    %p82 = scmp.eq.s32.totalorder %s20, 0
    %p83 = por %p81, %p82
    %p84 = scmp.ne.s32.totalorder %s72, %s73
    %p85 = scmp.eq.s32.totalorder %s21, 1
    %p86 = por %p84, %p85
    %p88 = scmp.ne.s32.totalorder %s73, %s87
    %p89 = scmp.eq.s32.totalorder %s21, 0
    %p90 = por %p88, %p89
    %s92 = sadd.s32 %s91, 1
    %p95 = scmp.eq.s32.totalorder %s15, 1
    %p96 = scmp.ne.s32.totalorder %s91, %s93
    %p97 = scmp.eq.s32.totalorder %s15, 0
    %p98 = por %p96, %p97
    %p99 = scmp.ne.s32.totalorder %s91, %s93
    %p100 = scmp.eq.s32.totalorder %s20, 1
    %p101 = por %p99, %p100
    %p102 = scmp.ne.s32.totalorder %s93, %s94
    %p103 = scmp.eq.s32.totalorder %s20, 0
    %p104 = por %p102, %p103
    %p105 = scmp.ne.s32.totalorder %s93, %s94
    %p106 = scmp.eq.s32.totalorder %s21, 1
    %p107 = por %p105, %p106
    %p109 = scmp.ne.s32.totalorder %s94, %s108
    %p110 = scmp.eq.s32.totalorder %s21, 0
    %p111 = por %p109, %p110
    %s113 = sadd.s32 %s112, 1
    %p116 = scmp.eq.s32.totalorder %s15, 1
    %p117 = scmp.ne.s32.totalorder %s112, %s114
    %p118 = scmp.eq.s32.totalorder %s15, 0
    %p119 = por %p117, %p118
    %p120 = scmp.ne.s32.totalorder %s112, %s114
    %p121 = scmp.eq.s32.totalorder %s20, 1
    %p122 = por %p120, %p121
    %p123 = scmp.ne.s32.totalorder %s114, %s115
    %p124 = scmp.eq.s32.totalorder %s20, 0
    %p125 = por %p123, %p124
    %p126 = scmp.ne.s32.totalorder %s114, %s115
    %p127 = scmp.eq.s32.totalorder %s21, 1
    %p128 = por %p126, %p127
    %p130 = scmp.ne.s32.totalorder %s115, %s129
    %p131 = scmp.eq.s32.totalorder %s21, 0
    %p132 = por %p130, %p131
    %s133 = ssub.s32 %s15, %s22
    %p134 = scmp.eq.s32.totalorder %s133, 0
    %s136 = sadd.s32 %s135, 1
    %s137 = scalar_select %p134, %s135, %s136
    %p140 = pneg %p134
    %p141 = scmp.eq.s32.totalorder %s15, 1
    %p142 = por %p140, %p141
    %p143 = scmp.ne.s32.totalorder %s135, %s138
    %p144 = scmp.eq.s32.totalorder %s15, 0
    %p145 = por %p143, %p144
    %p146 = scmp.ne.s32.totalorder %s135, %s138
    %p147 = scmp.eq.s32.totalorder %s20, 1
    %p148 = por %p146, %p147
    %p149 = scmp.ne.s32.totalorder %s138, %s139
    %p150 = scmp.eq.s32.totalorder %s20, 0
    %p151 = por %p149, %p150
    %p152 = scmp.ne.s32.totalorder %s138, %s139
    %p153 = scmp.eq.s32.totalorder %s21, 1
    %p154 = por %p152, %p153
    %p156 = scmp.ne.s32.totalorder %s139, %s155
    %p157 = scmp.eq.s32.totalorder %s21, 0
    %p158 = por %p156, %p157
    %s159 = ssub.s32 %s15, %s22
    %p160 = scmp.eq.s32.totalorder %s159, 0
    %s162 = sadd.s32 %s161, 1
    %s163 = scalar_select %p160, %s161, %s162
    %p166 = pneg %p160
    %p167 = scmp.eq.s32.totalorder %s15, 1
    %p168 = por %p166, %p167
    %p169 = scmp.ne.s32.totalorder %s161, %s164
    %p170 = scmp.eq.s32.totalorder %s15, 0
    %p171 = por %p169, %p170
    %p172 = scmp.ne.s32.totalorder %s161, %s164
    %p173 = scmp.eq.s32.totalorder %s20, 1
    %p174 = por %p172, %p173
    %p175 = scmp.ne.s32.totalorder %s164, %s165
    %p176 = scmp.eq.s32.totalorder %s20, 0
    %p177 = por %p175, %p176
    %p178 = scmp.ne.s32.totalorder %s164, %s165
    %p179 = scmp.eq.s32.totalorder %s21, 1
    %p180 = por %p178, %p179
    %p182 = scmp.ne.s32.totalorder %s165, %s181
    %p183 = scmp.eq.s32.totalorder %s21, 0
    %p184 = por %p182, %p183
    %s185 = ssub.s32 %s15, %s22
    %p186 = scmp.eq.s32.totalorder %s185, 0
    %s188 = sadd.s32 %s187, 1
    %s189 = scalar_select %p186, %s187, %s188
    %p192 = pneg %p186
    %p193 = scmp.eq.s32.totalorder %s15, 1
    %p194 = por %p192, %p193
    %p195 = scmp.ne.s32.totalorder %s187, %s190
    %p196 = scmp.eq.s32.totalorder %s15, 0
    %p197 = por %p195, %p196
    %p198 = scmp.ne.s32.totalorder %s187, %s190
    %p199 = scmp.eq.s32.totalorder %s20, 1
    %p200 = por %p198, %p199
    %p201 = scmp.ne.s32.totalorder %s190, %s191
    %p202 = scmp.eq.s32.totalorder %s20, 0
    %p203 = por %p201, %p202
    %p204 = scmp.ne.s32.totalorder %s190, %s191
    %p205 = scmp.eq.s32.totalorder %s21, 1
    %p206 = por %p204, %p205
    %p208 = scmp.ne.s32.totalorder %s191, %s207
    %p209 = scmp.eq.s32.totalorder %s21, 0
    %p210 = por %p208, %p209
    %s211 = ssub.s32 %s15, %s22
    %p212 = scmp.eq.s32.totalorder %s211, 0
    %s214 = sadd.s32 %s213, 1
    %s215 = scalar_select %p212, %s213, %s214
    %p218 = pneg %p212
    %p219 = scmp.eq.s32.totalorder %s15, 1
    %p220 = por %p218, %p219
    %p221 = scmp.ne.s32.totalorder %s213, %s216
    %p222 = scmp.eq.s32.totalorder %s15, 0
    %p223 = por %p221, %p222
    %p224 = scmp.ne.s32.totalorder %s213, %s216
    %p225 = scmp.eq.s32.totalorder %s20, 1
    %p226 = por %p224, %p225
    %p227 = scmp.ne.s32.totalorder %s216, %s217
    %p228 = scmp.eq.s32.totalorder %s20, 0
    %p229 = por %p227, %p228
    %p230 = scmp.ne.s32.totalorder %s216, %s217
    %p231 = scmp.eq.s32.totalorder %s21, 1
    %p232 = por %p230, %p231
    %p234 = scmp.ne.s32.totalorder %s217, %s233
    %p235 = scmp.eq.s32.totalorder %s21, 0
    %p236 = por %p234, %p235
    %p237 = scmp.le.s32.totalorder 1, %s15
    %p238 = scmp.lt.s32.totalorder %s15, 3
    %p239 = pnand %p237, %p238
    %p240 = pneg %p239
    // Predicated region
    $region9: #{encoder_forward.11} parent=5 // pred_check
      _
    $region10: #{encoder_forward.11} parent=5 // pred_check_branch
      %242 = sbr.rel (%p239) target = $region12
    $region11: #{encoder_forward.11} parent=5 // pred_region
      %s243 = ssub.s32 %s15, 1
      // Predicated region
      $region13: #{encoder_forward.11} parent=11 // pred_check
        %p244 = pneg %p62
      $region14: #{encoder_forward.11} parent=11 // pred_check_branch
        %246 = sbr.rel (%p244) target = $region16
      $region15: #{encoder_forward.11} parent=11 // pred_region
        _
      $region16: #{encoder_forward.11} parent=11 // pred_fallthru
        _
      // Predicated region
      $region17: #{encoder_forward.11} parent=11 // pred_check
        %p247 = pneg %p83
      $region18: #{encoder_forward.11} parent=11 // pred_check_branch
        %249 = sbr.rel (%p247) target = $region20
      $region19: #{encoder_forward.11} parent=11 // pred_region
        _
      $region20: #{encoder_forward.11} parent=11 // pred_fallthru
        _
      // Predicated region
      $region21: #{encoder_forward.11} parent=11 // pred_check
        %p250 = pneg %p104
      $region22: #{encoder_forward.11} parent=11 // pred_check_branch
        %252 = sbr.rel (%p250) target = $region24
      $region23: #{encoder_forward.11} parent=11 // pred_region
        _
      $region24: #{encoder_forward.11} parent=11 // pred_fallthru
        _
      // Predicated region
      $region25: #{encoder_forward.11} parent=11 // pred_check
        %p253 = pneg %p125
      $region26: #{encoder_forward.11} parent=11 // pred_check_branch
        %255 = sbr.rel (%p253) target = $region28
      $region27: #{encoder_forward.11} parent=11 // pred_region
        _
      $region28: #{encoder_forward.11} parent=11 // pred_fallthru
        _
    $region12: #{encoder_forward.11} parent=5 // pred_fallthru
      _
    %p256 = scmp.lt.s32.totalorder %s15, 2
    // Predicated region
    $region29: #{encoder_forward.11} parent=5 // pred_check
      %p257 = pneg %p256
    $region30: #{encoder_forward.11} parent=5 // pred_check_branch
      %259 = sbr.rel (%p257) target = $region32
    $region31: #{encoder_forward.11} parent=5 // pred_region
      // Predicated region
      $region33: #{encoder_forward.11} parent=31 // pred_check
        %p260 = pneg %p35
      $region34: #{encoder_forward.11} parent=31 // pred_check_branch
        %262 = sbr.rel (%p260) target = $region36
      $region35: #{encoder_forward.11} parent=31 // pred_region
        %p263 = scmp.lt.s32.totalorder %s15, 1
        %s264 = scalar_select %p263, %s15, 1
        %s265 = smul.addr %s264, 2
        %s266 = smul.addr %s265, 8
        %s267 = scalar_lea.vmem %s0, %s266
      $region36: #{encoder_forward.11} parent=31 // pred_fallthru
        _
    $region32: #{encoder_forward.11} parent=5 // pred_fallthru
      _
    %p268 = scmp.le.s32.totalorder 1, %s15
    %p269 = scmp.lt.s32.totalorder %s15, 3
    %p270 = pnand %p268, %p269
    %p271 = pneg %p270
    // Predicated region
    $region37: #{encoder_forward.11} parent=5 // pred_check
      _
    $region38: #{encoder_forward.11} parent=5 // pred_check_branch
      %273 = sbr.rel (%p270) target = $region40
    $region39: #{encoder_forward.11} parent=5 // pred_region
      %s274 = ssub.s32 %s15, 1
      %p275 = scmp.lt.s32.totalorder %s20, 1
      %s276 = scalar_select %p275, %s20, 1
      %s277 = smul.addr %s276, 2
      %s278 = smul.addr %s277, 8
      %s279 = scalar_lea.vmem %s0, %s278
      %p280 = pneg %p41
      %p281 = pneg %p38
      %p282 = pneg %p62
      %p283 = pneg %p59
      %p284 = pneg %p83
      %p285 = pneg %p80
      %p286 = pneg %p104
      %p287 = pneg %p101
      %p288 = pneg %p125
      %p289 = pneg %p122
      %p290 = pneg %p151
      %p291 = pneg %p148
      %p292 = scmp.lt.s32.totalorder %s20, 1
      %s293 = scalar_select %p292, %s20, 1
      %s294 = smul.addr %s293, 2
      %s295 = smul.addr %s294, 8
      %s296 = scalar_lea.vmem %s5, %s295
      %p297 = pneg %p177
      %p298 = pneg %p174
      %p299 = scmp.lt.s32.totalorder %s20, 1
      %s300 = scalar_select %p299, %s20, 1
      %s301 = smul.addr %s300, 2
      %s302 = smul.addr %s301, 8
      %s303 = scalar_lea.vmem %s6, %s302
      %p304 = pneg %p203
      %p305 = pneg %p200
      %p306 = scmp.lt.s32.totalorder %s20, 1
      %s307 = scalar_select %p306, %s20, 1
      %s308 = smul.addr %s307, 2
      %s309 = smul.addr %s308, 8
      %s310 = scalar_lea.vmem %s7, %s309
      %p311 = pneg %p229
      %p312 = pneg %p226
      %p313 = scmp.lt.s32.totalorder %s20, 1
      %s314 = scalar_select %p313, %s20, 1
      %s315 = smul.addr %s314, 2
      %s316 = smul.addr %s315, 8
      %s317 = scalar_lea.vmem %s8, %s316
      %p318 = scmp.lt.s32.totalorder %s20, 1
      %s319 = scalar_select %p318, %s20, 1
      %s320 = smul.addr %s319, 2
      %s321 = smul.addr %s320, 8
      %s322 = scalar_lea.vmem %s0, %s321
      %p323 = scmp.lt.s32.totalorder %s20, 1
      %s324 = scalar_select %p323, %s20, 1
      %s325 = smul.addr %s324, 2
      %s326 = smul.addr %s325, 8
      %s327 = scalar_lea.vmem %s5, %s326
      %p328 = scmp.lt.s32.totalorder %s20, 1
      %s329 = scalar_select %p328, %s20, 1
      %s330 = smul.addr %s329, 2
      %s331 = smul.addr %s330, 8
      %s332 = scalar_lea.vmem %s6, %s331
      %p333 = scmp.lt.s32.totalorder %s20, 1
      %s334 = scalar_select %p333, %s20, 1
      %s335 = smul.addr %s334, 2
      %s336 = smul.addr %s335, 8
      %s337 = scalar_lea.vmem %s7, %s336
      %p338 = scmp.lt.s32.totalorder %s20, 1
      %s339 = scalar_select %p338, %s20, 1
      %s340 = smul.addr %s339, 2
      %s341 = smul.addr %s340, 8
      %s342 = scalar_lea.vmem %s8, %s341
      %v344 = vld [vmem:[%s322] sm:$0xff]
      %v345 = vld [vmem:[%s322 + $0x8] sm:$0xff]
      %vm346 = vcmask 261120
      %v347 = vsel %vm346, %v344, 0.0
      %348 = vadd.xlane.f32.xlu0 %v347
      %v349 = vpop.xlane.xlu0 %348
      %v350 = vsel %vm346, %v345, 0.0
      %351 = vadd.xlane.f32.xlu0 %v350
      %v352 = vpop.xlane.xlu0 %351
      %v353 = vrcp.pop 32.0
      %v354 = vmul.f32 %v349, %v353
      %v355 = vmul.f32 %v352, %v353
      %v356 = vsub.f32 %v344, %v354
      %v357 = vsub.f32 %v345, %v355
      %v358 = vmul.f32 %v356, %v356
      %v359 = vmul.f32 %v357, %v357
      %v360 = vsel %vm346, %v358, 0.0
      %361 = vadd.xlane.f32.xlu0 %v360
      %v362 = vpop.xlane.xlu0 %361
      %v363 = vsel %vm346, %v359, 0.0
      %364 = vadd.xlane.f32.xlu0 %v363
      %v365 = vpop.xlane.xlu0 %364
      %v366 = vmul.f32 %v362, %v353
      %v367 = vmul.f32 %v365, %v353
      %v368 = vadd.f32 %v366, 1e-05
      %v369 = vadd.f32 %v367, 1e-05
      %v370 = vrsqrt.pop %v368
      %v371 = vrsqrt.pop %v369
      %v372 = vmul.f32 %v356, %v370
      %v373 = vmul.f32 %v357, %v371
      %v374 = vld [vmem:[%s1] sm:$0x1]
      %v376 = vlaneseq
      %v377 = vshrl.u32 %v376, 7
      %v378 = vsub.s32 0, %v377
      %v379 = vrot.slane %v374, %v378
      %v381 = vmul.f32 %v372, %v379
      %v382 = vmul.f32 %v373, %v379
      %v383 = vld [vmem:[%s2] sm:$0x1]
      %v385 = vlaneseq
      %v386 = vshrl.u32 %v385, 7
      %v387 = vsub.s32 0, %v386
      %v388 = vrot.slane %v383, %v387
      %v390 = vadd.f32 %v381, %v388
      %v391 = vadd.f32 %v382, %v388
      %392 = vst.msk [vmem:[%s327] sm:$0xff] %vm346, %v390
      %393 = vst.msk [vmem:[%s327 + $0x8] sm:$0xff] %vm346, %v391
      %v394 = vpack.c.bf16 %v391, %v390
      %v395 = vld [vmem:[%s3] sm:$0xf]
      %v396 = vld [vmem:[%s3 + $0x4] sm:$0xf]
      %v397 = vld [vmem:[%s3 + $0x8] sm:$0xf]
      %v398 = vld [vmem:[%s3 + $0xc] sm:$0xf]
      %v399 = vld [vmem:[%s4] sm:$0x1]
      %v401 = vlaneseq
      %v402 = vshrl.u32 %v401, 7
      %v403 = vsub.s32 0, %v402
      %v404 = vrot.slane %v399, %v403
      %v410 = vunpack.c.l.b16 %v395
      %v411 = vunpack.c.l.b16 %v396
      %v412 = vunpack.c.l.b16 %v397
      %v413 = vunpack.c.l.b16 %v398
      %v414 = vpack.c.b16 %v411, %v410
      %v415 = vpack.c.b16 %v413, %v412
      %v419 = vsel %vm346, %v394, 0
      %421 = vmatprep.subr.bf16.mxu0 0
      %422 = vmatpush1.bf16.msra.mxu0 0
      %423 = vmatprep.subr.bf16.mxu0 0
      %424 = vmatpush1.bf16.msra.mxu0 0
      %425 = vmatprep.subr.bf16.mxu0 0
      %426 = vmatpush1.bf16.msra.mxu0 0
      %427 = vmatprep.subr.bf16.mxu0 0
      %428 = vmatpush1.bf16.msra.mxu0 0
      %429 = vmatprep.subr.bf16.mxu0 0
      %430 = vmatpush1.bf16.msra.mxu0 0
      %431 = vmatprep.subr.bf16.mxu0 0
      %432 = vmatpush1.bf16.msra.mxu0 0
      %433 = vmatprep.subr.bf16.mxu0 0
      %434 = vmatpush1.bf16.msra.mxu0 %v415
      %435 = vmatprep.subr.bf16.mxu0 0
      %436 = vmatpush1.bf16.msra.mxu0 %v414
      %437 = vmatprep.subr.bf16.mxu0 0
      %438 = vmatpush2.bf16.msra.mxu0 0
      %439 = vmatprep.subr.bf16.mxu0 0
      %440 = vmatpush2.bf16.msra.mxu0 0
      %441 = vmatprep.subr.bf16.mxu0 0
      %442 = vmatpush2.bf16.msra.mxu0 0
      %443 = vmatprep.subr.bf16.mxu0 0
      %444 = vmatpush2.bf16.msra.mxu0 0
      %445 = vmatprep.subr.bf16.mxu0 0
      %446 = vmatpush2.bf16.msra.mxu0 0
      %447 = vmatprep.subr.bf16.mxu0 0
      %448 = vmatpush2.bf16.msra.mxu0 0
      %449 = vmatprep.subr.bf16.mxu0 0
      %450 = vmatpush2.bf16.msra.mxu0 0
      %451 = vmatprep.subr.bf16.mxu0 0
      %452 = vmatpush2.bf16.msra.mxu0 0
      %453 = vmatprep.mubr.bf16.mxu0 0
      %454 = vmatmul.mubr.bf16.gmra.mxu0 %v419
      %v455 = vpop.f32.mrf.mxu0
      %v456 = vadd.f32 %v404, %v455
      %v457 = vpop.f32.mrf.mxu0
      %v458 = vpop.f32.mrf.mxu0
      %v459 = vadd.f32 %v404, %v458
      %v460 = vpop.f32.mrf.mxu0
      %461 = vdwg.mxu0
      %v462 = vsel %vm346, %v456, -inf
      %463 = vmax.xlane.f32.xlu0 %v462
      %v464 = vpop.xlane.xlu0 %463
      %v465 = vsel %vm346, %v459, -inf
      %466 = vmax.xlane.f32.xlu0 %v465
      %v467 = vpop.xlane.xlu0 %466
      %v468 = vsub.f32 %v456, %v464
      %v469 = vsub.f32 %v459, %v467
      %v470 = vmul.f32 %v468, 1.442695
      %v471 = vpow.pop %v470
      %v472 = vmul.f32 %v469, 1.442695
      %v473 = vpow.pop %v472
      %v474 = vsel %vm346, %v471, 0.0
      %475 = vadd.xlane.f32.xlu0 %v474
      %v476 = vpop.xlane.xlu0 %475
      %v477 = vsel %vm346, %v473, 0.0
      %478 = vadd.xlane.f32.xlu0 %v477
      %v479 = vpop.xlane.xlu0 %478
      %v480 = vlog2.pop %v476
      %v481 = vmul.f32 %v480, 0.6931472
      %v482 = vlog2.pop %v479
      %v483 = vmul.f32 %v482, 0.6931472
      %v484 = vadd.f32 %v481, %v464
      %v485 = vadd.f32 %v483, %v467
      %v486 = vsub.f32 %v456, %v484
      %v487 = vsub.f32 %v459, %v485
      %488 = vst.msk [vmem:[%s332] sm:$0xff] %vm346, %v486
      %489 = vst.msk [vmem:[%s332 + $0x8] sm:$0xff] %vm346, %v487
      %v490 = vlaneseq
      %v491 = vand.u32 %v490, 127
      %v492 = vsel %vm346, %v486, -inf
      %493 = vmax.xlane.f32.xlu0 %v492
      %v494 = vpop.xlane.xlu0 %493
      %v495 = vsel %vm346, %v487, -inf
      %496 = vmax.xlane.f32.xlu0 %v495
      %v497 = vpop.xlane.xlu0 %496
      %vm498 = vcmp.ge.f32.partialorder %v486, %v494
      %vm499 = vcmp.ge.f32.partialorder %v487, %v497
      %v500 = vsel %vm498, %v491, 32
      %v501 = vsel %vm499, %v491, 32
      %v502 = vsel %vm346, %v500, 2147483647
      %v503 = vand.u32 %v502, 65535
      %v504 = vshra.s32 %v502, 16
      %v505 = vcvt.s32.f32 %v503
      %v506 = vcvt.s32.f32 %v504
      %507 = vmin.xlane.f32.xlu0 %v506
      %v508 = vpop.xlane.xlu0 %507
      %vm509 = vcmp.eq.f32.partialorder %v506, %v508
      %v510 = vsel %vm509, %v505, inf
      %511 = vmin.xlane.f32.xlu0 %v510
      %v512 = vpop.xlane.xlu0 %511
      %v513 = vcvt.f32.s32 %v512
      %v514 = vcvt.f32.s32 %v508
      %v515 = vshll.u32 %v514, 16
      %v516 = vadd.s32 %v515, %v513
      %v517 = vsel %vm346, %v501, 2147483647
      %v518 = vand.u32 %v517, 65535
      %v519 = vshra.s32 %v517, 16
      %v520 = vcvt.s32.f32 %v518
      %v521 = vcvt.s32.f32 %v519
      %522 = vmin.xlane.f32.xlu0 %v521
      %v523 = vpop.xlane.xlu0 %522
      %vm524 = vcmp.eq.f32.partialorder %v521, %v523
      %v525 = vsel %vm524, %v520, inf
      %526 = vmin.xlane.f32.xlu0 %v525
      %v527 = vpop.xlane.xlu0 %526
      %v528 = vcvt.f32.s32 %v527
      %v529 = vcvt.f32.s32 %v523
      %v530 = vshll.u32 %v529, 16
      %v531 = vadd.s32 %v530, %v528
      %vm532 = vcmp.eq.s32.totalorder %v491, 0
      %v533 = vsel %vm532, %v494, -inf
      %v534 = vsel %vm532, %v497, -inf
      %v535 = vsel %vm532, %v516, 0
      %v536 = vsel %vm532, %v531, 0
      %vm537 = vcmp.eq.s32.totalorder %v491, %v516
      %vm538 = vcmp.eq.s32.totalorder %v491, %v531
      %v539 = vsel %vm537, -inf, %v486
      %v540 = vsel %vm538, -inf, %v487
      %v541 = vsel %vm346, %v539, -inf
      %542 = vmax.xlane.f32.xlu0 %v541
      %v543 = vpop.xlane.xlu0 %542
      %v544 = vsel %vm346, %v540, -inf
      %545 = vmax.xlane.f32.xlu0 %v544
      %v546 = vpop.xlane.xlu0 %545
      %vm547 = vcmp.ge.f32.partialorder %v539, %v543
      %vm548 = vcmp.ge.f32.partialorder %v540, %v546
      %v549 = vsel %vm547, %v491, 32
      %v550 = vsel %vm548, %v491, 32
      %v551 = vsel %vm346, %v549, 2147483647
      %v552 = vand.u32 %v551, 65535
      %v553 = vshra.s32 %v551, 16
      %v554 = vcvt.s32.f32 %v552
      %v555 = vcvt.s32.f32 %v553
      %556 = vmin.xlane.f32.xlu0 %v555
      %v557 = vpop.xlane.xlu0 %556
      %vm558 = vcmp.eq.f32.partialorder %v555, %v557
      %v559 = vsel %vm558, %v554, inf
      %560 = vmin.xlane.f32.xlu0 %v559
      %v561 = vpop.xlane.xlu0 %560
      %v562 = vcvt.f32.s32 %v561
      %v563 = vcvt.f32.s32 %v557
      %v564 = vshll.u32 %v563, 16
      %v565 = vadd.s32 %v564, %v562
      %v566 = vsel %vm346, %v550, 2147483647
      %v567 = vand.u32 %v566, 65535
      %v568 = vshra.s32 %v566, 16
      %v569 = vcvt.s32.f32 %v567
      %v570 = vcvt.s32.f32 %v568
      %571 = vmin.xlane.f32.xlu0 %v570
      %v572 = vpop.xlane.xlu0 %571
      %vm573 = vcmp.eq.f32.partialorder %v570, %v572
      %v574 = vsel %vm573, %v569, inf
      %575 = vmin.xlane.f32.xlu0 %v574
      %v576 = vpop.xlane.xlu0 %575
      %v577 = vcvt.f32.s32 %v576
      %v578 = vcvt.f32.s32 %v572
      %v579 = vshll.u32 %v578, 16
      %v580 = vadd.s32 %v579, %v577
      %vm581 = vcmp.eq.s32.totalorder %v491, 1
      %v582 = vsel %vm581, %v543, %v533
      %v583 = vsel %vm581, %v546, %v534
      %v584 = vsel %vm581, %v565, %v535
      %v585 = vsel %vm581, %v580, %v536
      %vm586 = vcmp.eq.s32.totalorder %v491, %v565
      %vm587 = vcmp.eq.s32.totalorder %v491, %v580
      %v588 = vsel %vm586, -inf, %v539
      %v589 = vsel %vm587, -inf, %v540
      %v590 = vsel %vm346, %v588, -inf
      %591 = vmax.xlane.f32.xlu0 %v590
      %v592 = vpop.xlane.xlu0 %591
      %v593 = vsel %vm346, %v589, -inf
      %594 = vmax.xlane.f32.xlu0 %v593
      %v595 = vpop.xlane.xlu0 %594
      %vm596 = vcmp.ge.f32.partialorder %v588, %v592
      %vm597 = vcmp.ge.f32.partialorder %v589, %v595
      %v598 = vsel %vm596, %v491, 32
      %v599 = vsel %vm597, %v491, 32
      %v600 = vsel %vm346, %v598, 2147483647
      %v601 = vand.u32 %v600, 65535
      %v602 = vshra.s32 %v600, 16
      %v603 = vcvt.s32.f32 %v601
      %v604 = vcvt.s32.f32 %v602
      %605 = vmin.xlane.f32.xlu0 %v604
      %v606 = vpop.xlane.xlu0 %605
      %vm607 = vcmp.eq.f32.partialorder %v604, %v606
      %v608 = vsel %vm607, %v603, inf
      %609 = vmin.xlane.f32.xlu0 %v608
      %v610 = vpop.xlane.xlu0 %609
      %v611 = vcvt.f32.s32 %v610
      %v612 = vcvt.f32.s32 %v606
      %v613 = vshll.u32 %v612, 16
      %v614 = vadd.s32 %v613, %v611
      %v615 = vsel %vm346, %v599, 2147483647
      %v616 = vand.u32 %v615, 65535
      %v617 = vshra.s32 %v615, 16
      %v618 = vcvt.s32.f32 %v616
      %v619 = vcvt.s32.f32 %v617
      %620 = vmin.xlane.f32.xlu0 %v619
      %v621 = vpop.xlane.xlu0 %620
      %vm622 = vcmp.eq.f32.partialorder %v619, %v621
      %v623 = vsel %vm622, %v618, inf
      %624 = vmin.xlane.f32.xlu0 %v623
      %v625 = vpop.xlane.xlu0 %624
      %v626 = vcvt.f32.s32 %v625
      %v627 = vcvt.f32.s32 %v621
      %v628 = vshll.u32 %v627, 16
      %v629 = vadd.s32 %v628, %v626
      %vm630 = vcmp.eq.s32.totalorder %v491, 2
      %v631 = vsel %vm630, %v592, %v582
      %v632 = vsel %vm630, %v595, %v583
      %v633 = vsel %vm630, %v614, %v584
      %v634 = vsel %vm630, %v629, %v585
      %vm635 = vcmp.eq.s32.totalorder %v491, %v614
      %vm636 = vcmp.eq.s32.totalorder %v491, %v629
      %v637 = vsel %vm635, -inf, %v588
      %v638 = vsel %vm636, -inf, %v589
      %v639 = vsel %vm346, %v637, -inf
      %640 = vmax.xlane.f32.xlu0 %v639
      %v641 = vpop.xlane.xlu0 %640
      %v642 = vsel %vm346, %v638, -inf
      %643 = vmax.xlane.f32.xlu0 %v642
      %v644 = vpop.xlane.xlu0 %643
      %vm645 = vcmp.ge.f32.partialorder %v637, %v641
      %vm646 = vcmp.ge.f32.partialorder %v638, %v644
      %v647 = vsel %vm645, %v491, 32
      %v648 = vsel %vm646, %v491, 32
      %v649 = vsel %vm346, %v647, 2147483647
      %v650 = vand.u32 %v649, 65535
      %v651 = vshra.s32 %v649, 16
      %v652 = vcvt.s32.f32 %v650
      %v653 = vcvt.s32.f32 %v651
      %654 = vmin.xlane.f32.xlu0 %v653
      %v655 = vpop.xlane.xlu0 %654
      %vm656 = vcmp.eq.f32.partialorder %v653, %v655
      %v657 = vsel %vm656, %v652, inf
      %658 = vmin.xlane.f32.xlu0 %v657
      %v659 = vpop.xlane.xlu0 %658
      %v660 = vcvt.f32.s32 %v659
      %v661 = vcvt.f32.s32 %v655
      %v662 = vshll.u32 %v661, 16
      %v663 = vadd.s32 %v662, %v660
      %v664 = vsel %vm346, %v648, 2147483647
      %v665 = vand.u32 %v664, 65535
      %v666 = vshra.s32 %v664, 16
      %v667 = vcvt.s32.f32 %v665
      %v668 = vcvt.s32.f32 %v666
      %669 = vmin.xlane.f32.xlu0 %v668
      %v670 = vpop.xlane.xlu0 %669
      %vm671 = vcmp.eq.f32.partialorder %v668, %v670
      %v672 = vsel %vm671, %v667, inf
      %673 = vmin.xlane.f32.xlu0 %v672
      %v674 = vpop.xlane.xlu0 %673
      %v675 = vcvt.f32.s32 %v674
      %v676 = vcvt.f32.s32 %v670
      %v677 = vshll.u32 %v676, 16
      %v678 = vadd.s32 %v677, %v675
      %vm679 = vcmp.eq.s32.totalorder %v491, 3
      %v680 = vsel %vm679, %v641, %v631
      %v681 = vsel %vm679, %v644, %v632
      %v682 = vsel %vm679, %v663, %v633
      %v683 = vsel %vm679, %v678, %v634
      %vm684 = vcmp.eq.s32.totalorder %v491, %v663
      %vm685 = vcmp.eq.s32.totalorder %v491, %v678
      %v686 = vsel %vm684, -inf, %v637
      %v687 = vsel %vm685, -inf, %v638
      %v688 = vsel %vm346, %v686, -inf
      %689 = vmax.xlane.f32.xlu0 %v688
      %v690 = vpop.xlane.xlu0 %689
      %v691 = vsel %vm346, %v687, -inf
      %692 = vmax.xlane.f32.xlu0 %v691
      %v693 = vpop.xlane.xlu0 %692
      %vm694 = vcmp.ge.f32.partialorder %v686, %v690
      %vm695 = vcmp.ge.f32.partialorder %v687, %v693
      %v696 = vsel %vm694, %v491, 32
      %v697 = vsel %vm695, %v491, 32
      %v698 = vsel %vm346, %v696, 2147483647
      %v699 = vand.u32 %v698, 65535
      %v700 = vshra.s32 %v698, 16
      %v701 = vcvt.s32.f32 %v699
      %v702 = vcvt.s32.f32 %v700
      %703 = vmin.xlane.f32.xlu0 %v702
      %v704 = vpop.xlane.xlu0 %703
      %vm705 = vcmp.eq.f32.partialorder %v702, %v704
      %v706 = vsel %vm705, %v701, inf
      %707 = vmin.xlane.f32.xlu0 %v706
      %v708 = vpop.xlane.xlu0 %707
      %v709 = vcvt.f32.s32 %v708
      %v710 = vcvt.f32.s32 %v704
      %v711 = vshll.u32 %v710, 16
      %v712 = vadd.s32 %v711, %v709
      %v713 = vsel %vm346, %v697, 2147483647
      %v714 = vand.u32 %v713, 65535
      %v715 = vshra.s32 %v713, 16
      %v716 = vcvt.s32.f32 %v714
      %v717 = vcvt.s32.f32 %v715
      %718 = vmin.xlane.f32.xlu0 %v717
      %v719 = vpop.xlane.xlu0 %718
      %vm720 = vcmp.eq.f32.partialorder %v717, %v719
      %v721 = vsel %vm720, %v716, inf
      %722 = vmin.xlane.f32.xlu0 %v721
      %v723 = vpop.xlane.xlu0 %722
      %v724 = vcvt.f32.s32 %v723
      %v725 = vcvt.f32.s32 %v719
      %v726 = vshll.u32 %v725, 16
      %v727 = vadd.s32 %v726, %v724
      %vm728 = vcmp.eq.s32.totalorder %v491, 4
      %v729 = vsel %vm728, %v690, %v680
      %v730 = vsel %vm728, %v693, %v681
      %v731 = vsel %vm728, %v712, %v682
      %v732 = vsel %vm728, %v727, %v683
      %vm733 = vcmp.eq.s32.totalorder %v491, %v712
      %vm734 = vcmp.eq.s32.totalorder %v491, %v727
      %v735 = vsel %vm733, -inf, %v686
      %v736 = vsel %vm734, -inf, %v687
      %v737 = vsel %vm346, %v735, -inf
      %738 = vmax.xlane.f32.xlu0 %v737
      %v739 = vpop.xlane.xlu0 %738
      %v740 = vsel %vm346, %v736, -inf
      %741 = vmax.xlane.f32.xlu0 %v740
      %v742 = vpop.xlane.xlu0 %741
      %vm743 = vcmp.ge.f32.partialorder %v735, %v739
      %vm744 = vcmp.ge.f32.partialorder %v736, %v742
      %v745 = vsel %vm743, %v491, 32
      %v746 = vsel %vm744, %v491, 32
      %v747 = vsel %vm346, %v745, 2147483647
      %v748 = vand.u32 %v747, 65535
      %v749 = vshra.s32 %v747, 16
      %v750 = vcvt.s32.f32 %v748
      %v751 = vcvt.s32.f32 %v749
      %752 = vmin.xlane.f32.xlu0 %v751
      %v753 = vpop.xlane.xlu0 %752
      %vm754 = vcmp.eq.f32.partialorder %v751, %v753
      %v755 = vsel %vm754, %v750, inf
      %756 = vmin.xlane.f32.xlu0 %v755
      %v757 = vpop.xlane.xlu0 %756
      %v758 = vcvt.f32.s32 %v757
      %v759 = vcvt.f32.s32 %v753
      %v760 = vshll.u32 %v759, 16
      %v761 = vadd.s32 %v760, %v758
      %v762 = vsel %vm346, %v746, 2147483647
      %v763 = vand.u32 %v762, 65535
      %v764 = vshra.s32 %v762, 16
      %v765 = vcvt.s32.f32 %v763
      %v766 = vcvt.s32.f32 %v764
      %767 = vmin.xlane.f32.xlu0 %v766
      %v768 = vpop.xlane.xlu0 %767
      %vm769 = vcmp.eq.f32.partialorder %v766, %v768
      %v770 = vsel %vm769, %v765, inf
      %771 = vmin.xlane.f32.xlu0 %v770
      %v772 = vpop.xlane.xlu0 %771
      %v773 = vcvt.f32.s32 %v772
      %v774 = vcvt.f32.s32 %v768
      %v775 = vshll.u32 %v774, 16
      %v776 = vadd.s32 %v775, %v773
      %vm777 = vcmp.eq.s32.totalorder %v491, 5
      %v778 = vsel %vm777, %v739, %v729
      %v779 = vsel %vm777, %v742, %v730
      %v780 = vsel %vm777, %v761, %v731
      %v781 = vsel %vm777, %v776, %v732
      %vm782 = vcmp.eq.s32.totalorder %v491, %v761
      %vm783 = vcmp.eq.s32.totalorder %v491, %v776
      %v784 = vsel %vm782, -inf, %v735
      %v785 = vsel %vm783, -inf, %v736
      %v786 = vsel %vm346, %v784, -inf
      %787 = vmax.xlane.f32.xlu0 %v786
      %v788 = vpop.xlane.xlu0 %787
      %v789 = vsel %vm346, %v785, -inf
      %790 = vmax.xlane.f32.xlu0 %v789
      %v791 = vpop.xlane.xlu0 %790
      %vm792 = vcmp.ge.f32.partialorder %v784, %v788
      %vm793 = vcmp.ge.f32.partialorder %v785, %v791
      %v794 = vsel %vm792, %v491, 32
      %v795 = vsel %vm793, %v491, 32
      %v796 = vsel %vm346, %v794, 2147483647
      %v797 = vand.u32 %v796, 65535
      %v798 = vshra.s32 %v796, 16
      %v799 = vcvt.s32.f32 %v797
      %v800 = vcvt.s32.f32 %v798
      %801 = vmin.xlane.f32.xlu0 %v800
      %v802 = vpop.xlane.xlu0 %801
      %vm803 = vcmp.eq.f32.partialorder %v800, %v802
      %v804 = vsel %vm803, %v799, inf
      %805 = vmin.xlane.f32.xlu0 %v804
      %v806 = vpop.xlane.xlu0 %805
      %v807 = vcvt.f32.s32 %v806
      %v808 = vcvt.f32.s32 %v802
      %v809 = vshll.u32 %v808, 16
      %v810 = vadd.s32 %v809, %v807
      %v811 = vsel %vm346, %v795, 2147483647
      %v812 = vand.u32 %v811, 65535
      %v813 = vshra.s32 %v811, 16
      %v814 = vcvt.s32.f32 %v812
      %v815 = vcvt.s32.f32 %v813
      %816 = vmin.xlane.f32.xlu0 %v815
      %v817 = vpop.xlane.xlu0 %816
      %vm818 = vcmp.eq.f32.partialorder %v815, %v817
      %v819 = vsel %vm818, %v814, inf
      %820 = vmin.xlane.f32.xlu0 %v819
      %v821 = vpop.xlane.xlu0 %820
      %v822 = vcvt.f32.s32 %v821
      %v823 = vcvt.f32.s32 %v817
      %v824 = vshll.u32 %v823, 16
      %v825 = vadd.s32 %v824, %v822
      %vm826 = vcmp.eq.s32.totalorder %v491, 6
      %v827 = vsel %vm826, %v788, %v778
      %v828 = vsel %vm826, %v791, %v779
      %v829 = vsel %vm826, %v810, %v780
      %v830 = vsel %vm826, %v825, %v781
      %vm831 = vcmp.eq.s32.totalorder %v491, %v810
      %vm832 = vcmp.eq.s32.totalorder %v491, %v825
      %v833 = vsel %vm831, -inf, %v784
      %v834 = vsel %vm832, -inf, %v785
      %v835 = vsel %vm346, %v833, -inf
      %836 = vmax.xlane.f32.xlu0 %v835
      %v837 = vpop.xlane.xlu0 %836
      %v838 = vsel %vm346, %v834, -inf
      %839 = vmax.xlane.f32.xlu0 %v838
      %v840 = vpop.xlane.xlu0 %839
      %vm841 = vcmp.ge.f32.partialorder %v833, %v837
      %vm842 = vcmp.ge.f32.partialorder %v834, %v840
      %v843 = vsel %vm841, %v491, 32
      %v844 = vsel %vm842, %v491, 32
      %v845 = vsel %vm346, %v843, 2147483647
      %v846 = vand.u32 %v845, 65535
      %v847 = vshra.s32 %v845, 16
      %v848 = vcvt.s32.f32 %v846
      %v849 = vcvt.s32.f32 %v847
      %850 = vmin.xlane.f32.xlu0 %v849
      %v851 = vpop.xlane.xlu0 %850
      %vm852 = vcmp.eq.f32.partialorder %v849, %v851
      %v853 = vsel %vm852, %v848, inf
      %854 = vmin.xlane.f32.xlu0 %v853
      %v855 = vpop.xlane.xlu0 %854
      %v856 = vcvt.f32.s32 %v855
      %v857 = vcvt.f32.s32 %v851
      %v858 = vshll.u32 %v857, 16
      %v859 = vadd.s32 %v858, %v856
      %v860 = vsel %vm346, %v844, 2147483647
      %v861 = vand.u32 %v860, 65535
      %v862 = vshra.s32 %v860, 16
      %v863 = vcvt.s32.f32 %v861
      %v864 = vcvt.s32.f32 %v862
      %865 = vmin.xlane.f32.xlu0 %v864
      %v866 = vpop.xlane.xlu0 %865
      %vm867 = vcmp.eq.f32.partialorder %v864, %v866
      %v868 = vsel %vm867, %v863, inf
      %869 = vmin.xlane.f32.xlu0 %v868
      %v870 = vpop.xlane.xlu0 %869
      %v871 = vcvt.f32.s32 %v870
      %v872 = vcvt.f32.s32 %v866
      %v873 = vshll.u32 %v872, 16
      %v874 = vadd.s32 %v873, %v871
      %vm875 = vcmp.eq.s32.totalorder %v491, 7
      %v876 = vsel %vm875, %v837, %v827
      %v877 = vsel %vm875, %v840, %v828
      %v878 = vsel %vm875, %v859, %v829
      %v879 = vsel %vm875, %v874, %v830
      %vm880 = vcmp.eq.s32.totalorder %v491, %v859
      %vm881 = vcmp.eq.s32.totalorder %v491, %v874
      %v882 = vsel %vm880, -inf, %v833
      %v883 = vsel %vm881, -inf, %v834
      %v884 = vsel %vm346, %v882, -inf
      %885 = vmax.xlane.f32.xlu0 %v884
      %v886 = vpop.xlane.xlu0 %885
      %v887 = vsel %vm346, %v883, -inf
      %888 = vmax.xlane.f32.xlu0 %v887
      %v889 = vpop.xlane.xlu0 %888
      %vm890 = vcmp.ge.f32.partialorder %v882, %v886
      %vm891 = vcmp.ge.f32.partialorder %v883, %v889
      %v892 = vsel %vm890, %v491, 32
      %v893 = vsel %vm891, %v491, 32
      %v894 = vsel %vm346, %v892, 2147483647
      %v895 = vand.u32 %v894, 65535
      %v896 = vshra.s32 %v894, 16
      %v897 = vcvt.s32.f32 %v895
      %v898 = vcvt.s32.f32 %v896
      %899 = vmin.xlane.f32.xlu0 %v898
      %v900 = vpop.xlane.xlu0 %899
      %vm901 = vcmp.eq.f32.partialorder %v898, %v900
      %v902 = vsel %vm901, %v897, inf
      %903 = vmin.xlane.f32.xlu0 %v902
      %v904 = vpop.xlane.xlu0 %903
      %v905 = vcvt.f32.s32 %v904
      %v906 = vcvt.f32.s32 %v900
      %v907 = vshll.u32 %v906, 16
      %v908 = vadd.s32 %v907, %v905
      %v909 = vsel %vm346, %v893, 2147483647
      %v910 = vand.u32 %v909, 65535
      %v911 = vshra.s32 %v909, 16
      %v912 = vcvt.s32.f32 %v910
      %v913 = vcvt.s32.f32 %v911
      %914 = vmin.xlane.f32.xlu0 %v913
      %v915 = vpop.xlane.xlu0 %914
      %vm916 = vcmp.eq.f32.partialorder %v913, %v915
      %v917 = vsel %vm916, %v912, inf
      %918 = vmin.xlane.f32.xlu0 %v917
      %v919 = vpop.xlane.xlu0 %918
      %v920 = vcvt.f32.s32 %v919
      %v921 = vcvt.f32.s32 %v915
      %v922 = vshll.u32 %v921, 16
      %v923 = vadd.s32 %v922, %v920
      %vm924 = vcmp.eq.s32.totalorder %v491, 8
      %v925 = vsel %vm924, %v886, %v876
      %v926 = vsel %vm924, %v889, %v877
      %v927 = vsel %vm924, %v908, %v878
      %v928 = vsel %vm924, %v923, %v879
      %vm929 = vcmp.eq.s32.totalorder %v491, %v908
      %vm930 = vcmp.eq.s32.totalorder %v491, %v923
      %v931 = vsel %vm929, -inf, %v882
      %v932 = vsel %vm930, -inf, %v883
      %v933 = vsel %vm346, %v931, -inf
      %934 = vmax.xlane.f32.xlu0 %v933
      %v935 = vpop.xlane.xlu0 %934
      %v936 = vsel %vm346, %v932, -inf
      %937 = vmax.xlane.f32.xlu0 %v936
      %v938 = vpop.xlane.xlu0 %937
      %vm939 = vcmp.ge.f32.partialorder %v931, %v935
      %vm940 = vcmp.ge.f32.partialorder %v932, %v938
      %v941 = vsel %vm939, %v491, 32
      %v942 = vsel %vm940, %v491, 32
      %v943 = vsel %vm346, %v941, 2147483647
      %v944 = vand.u32 %v943, 65535
      %v945 = vshra.s32 %v943, 16
      %v946 = vcvt.s32.f32 %v944
      %v947 = vcvt.s32.f32 %v945
      %948 = vmin.xlane.f32.xlu0 %v947
      %v949 = vpop.xlane.xlu0 %948
      %vm950 = vcmp.eq.f32.partialorder %v947, %v949
      %v951 = vsel %vm950, %v946, inf
      %952 = vmin.xlane.f32.xlu0 %v951
      %v953 = vpop.xlane.xlu0 %952
      %v954 = vcvt.f32.s32 %v953
      %v955 = vcvt.f32.s32 %v949
      %v956 = vshll.u32 %v955, 16
      %v957 = vadd.s32 %v956, %v954
      %v958 = vsel %vm346, %v942, 2147483647
      %v959 = vand.u32 %v958, 65535
      %v960 = vshra.s32 %v958, 16
      %v961 = vcvt.s32.f32 %v959
      %v962 = vcvt.s32.f32 %v960
      %963 = vmin.xlane.f32.xlu0 %v962
      %v964 = vpop.xlane.xlu0 %963
      %vm965 = vcmp.eq.f32.partialorder %v962, %v964
      %v966 = vsel %vm965, %v961, inf
      %967 = vmin.xlane.f32.xlu0 %v966
      %v968 = vpop.xlane.xlu0 %967
      %v969 = vcvt.f32.s32 %v968
      %v970 = vcvt.f32.s32 %v964
      %v971 = vshll.u32 %v970, 16
      %v972 = vadd.s32 %v971, %v969
      %vm973 = vcmp.eq.s32.totalorder %v491, 9
      %v974 = vsel %vm973, %v935, %v925
      %v975 = vsel %vm973, %v938, %v926
      %v976 = vsel %vm973, %v957, %v927
      %v977 = vsel %vm973, %v972, %v928
      %vm978 = vcmask 80896
      %979 = vst.msk [vmem:[%s337] sm:$0xff] %vm978, %v974
      %980 = vst.msk [vmem:[%s337 + $0x8] sm:$0xff] %vm978, %v975
      %981 = vst.msk [vmem:[%s342] sm:$0xff] %vm978, %v976
      %982 = vst.msk [vmem:[%s342 + $0x8] sm:$0xff] %vm978, %v977
      %p983 = scmp.lt.s32.totalorder %s20, 1
      %s984 = scalar_select %p983, %s20, 1
      %s985 = smul.addr %s984, 2
      %s986 = smul.addr %s985, 8
      %s987 = scalar_lea.vmem %s5, %s986
      %p988 = scmp.lt.s32.totalorder %s20, 1
      %s989 = scalar_select %p988, %s20, 1
      %s990 = smul.addr %s989, 2
      %s991 = smul.addr %s990, 8
      %s992 = scalar_lea.vmem %s6, %s991
      %p993 = scmp.lt.s32.totalorder %s20, 1
      %s994 = scalar_select %p993, %s20, 1
      %s995 = smul.addr %s994, 2
      %s996 = smul.addr %s995, 8
      %s997 = scalar_lea.vmem %s7, %s996
      %p998 = scmp.lt.s32.totalorder %s20, 1
      %s999 = scalar_select %p998, %s20, 1
      %s1000 = smul.addr %s999, 2
      %s1001 = smul.addr %s1000, 8
      %s1002 = scalar_lea.vmem %s8, %s1001
      // Predicated region
      $region41: #{encoder_forward.11} parent=39 // pred_check
        %p1003 = pneg %p148
      $region42: #{encoder_forward.11} parent=39 // pred_check_branch
        %1005 = sbr.rel (%p1003) target = $region44
      $region43: #{encoder_forward.11} parent=39 // pred_region
        _
      $region44: #{encoder_forward.11} parent=39 // pred_fallthru
        _
      // Predicated region
      $region45: #{encoder_forward.11} parent=39 // pred_check
        %p1006 = pneg %p174
      $region46: #{encoder_forward.11} parent=39 // pred_check_branch
        %1008 = sbr.rel (%p1006) target = $region48
      $region47: #{encoder_forward.11} parent=39 // pred_region
        _
      $region48: #{encoder_forward.11} parent=39 // pred_fallthru
        _
      // Predicated region
      $region49: #{encoder_forward.11} parent=39 // pred_check
        %p1009 = pneg %p200
      $region50: #{encoder_forward.11} parent=39 // pred_check_branch
        %1011 = sbr.rel (%p1009) target = $region52
      $region51: #{encoder_forward.11} parent=39 // pred_region
        _
      $region52: #{encoder_forward.11} parent=39 // pred_fallthru
        _
      // Predicated region
      $region53: #{encoder_forward.11} parent=39 // pred_check
        %p1012 = pneg %p226
      $region54: #{encoder_forward.11} parent=39 // pred_check_branch
        %1014 = sbr.rel (%p1012) target = $region56
      $region55: #{encoder_forward.11} parent=39 // pred_region
        _
      $region56: #{encoder_forward.11} parent=39 // pred_fallthru
        _
    $region40: #{encoder_forward.11} parent=5 // pred_fallthru
      _
    %p1015 = scmp.le.s32.totalorder 2, %s15
    // Predicated region
    $region57: #{encoder_forward.11} parent=5 // pred_check
      %p1016 = pneg %p1015
    $region58: #{encoder_forward.11} parent=5 // pred_check_branch
      %1018 = sbr.rel (%p1016) target = $region60
    $region59: #{encoder_forward.11} parent=5 // pred_region
      %s1019 = ssub.s32 %s15, 2
      // Predicated region
      $region61: #{encoder_forward.11} parent=59 // pred_check
        %p1020 = pneg %p154
      $region62: #{encoder_forward.11} parent=59 // pred_check_branch
        %1022 = sbr.rel (%p1020) target = $region64
      $region63: #{encoder_forward.11} parent=59 // pred_region
        %p1023 = scmp.lt.s32.totalorder %s21, 1
        %s1024 = scalar_select %p1023, %s21, 1
        %s1025 = smul.addr %s1024, 2
        %s1026 = smul.addr %s1025, 8
        %s1027 = scalar_lea.vmem %s5, %s1026
      $region64: #{encoder_forward.11} parent=59 // pred_fallthru
        _
      // Predicated region
      $region65: #{encoder_forward.11} parent=59 // pred_check
        %p1028 = pneg %p180
      $region66: #{encoder_forward.11} parent=59 // pred_check_branch
        %1030 = sbr.rel (%p1028) target = $region68
      $region67: #{encoder_forward.11} parent=59 // pred_region
        %p1031 = scmp.lt.s32.totalorder %s21, 1
        %s1032 = scalar_select %p1031, %s21, 1
        %s1033 = smul.addr %s1032, 2
        %s1034 = smul.addr %s1033, 8
        %s1035 = scalar_lea.vmem %s6, %s1034
      $region68: #{encoder_forward.11} parent=59 // pred_fallthru
        _
      // Predicated region
      $region69: #{encoder_forward.11} parent=59 // pred_check
        %p1036 = pneg %p206
      $region70: #{encoder_forward.11} parent=59 // pred_check_branch
        %1038 = sbr.rel (%p1036) target = $region72
      $region71: #{encoder_forward.11} parent=59 // pred_region
        %p1039 = scmp.lt.s32.totalorder %s21, 1
        %s1040 = scalar_select %p1039, %s21, 1
        %s1041 = smul.addr %s1040, 2
        %s1042 = smul.addr %s1041, 8
        %s1043 = scalar_lea.vmem %s7, %s1042
      $region72: #{encoder_forward.11} parent=59 // pred_fallthru
        _
      // Predicated region
      $region73: #{encoder_forward.11} parent=59 // pred_check
        %p1044 = pneg %p232
      $region74: #{encoder_forward.11} parent=59 // pred_check_branch
        %1046 = sbr.rel (%p1044) target = $region76
      $region75: #{encoder_forward.11} parent=59 // pred_region
        %p1047 = scmp.lt.s32.totalorder %s21, 1
        %s1048 = scalar_select %p1047, %s21, 1
        %s1049 = smul.addr %s1048, 2
        %s1050 = smul.addr %s1049, 8
        %s1051 = scalar_lea.vmem %s8, %s1050
      $region76: #{encoder_forward.11} parent=59 // pred_fallthru
        _
    $region60: #{encoder_forward.11} parent=5 // pred_fallthru
      _
  $region6: #{encoder_forward.11} parent=0 // loop_footer
    %s19 = sadd.s32 1, %s15
  $region7: #{encoder_forward.11} parent=0 // loop_footer_branch
    %14 = sbr.rel target = $region3
  $region8: #{encoder_forward.11} parent=0 // loop_exit
    _

// kernel: encoder_forward.9
$region0: #{encoder_forward.9}
  #allocation0 [shape = 'u32[]', space=smem, size = 0x4, offset = 0x4, fixed_abs, tag = 'smem constant byte address 0x4 - core index']
  #allocation1 [shape = 'u32[144,128]{1,0:T(1,128)}', space=vmem, size = 0x12000, scoped, tag = 'internal scratch']
  #allocation2 [shape = 'f32[16,96]{1,0:T(8,128)}', space=vmem, size = 0x2000, scoped, tag = 'scratch operand']
  %s0 = inlined_call_operand.vmem [shape: f32[2,16,32], index: 0, kind: input, shape index: {}]
  %s1 = inlined_call_operand.vmem [shape: f32[2,1,16], index: 1, kind: input, shape index: {}]
  %s2 = inlined_call_operand.vmem [shape: f32[1,32], index: 2, kind: input, shape index: {}]
  %s3 = inlined_call_operand.vmem [shape: f32[1,32], index: 3, kind: input, shape index: {}]
  %s4 = inlined_call_operand.vmem [shape: bf16[32,96], index: 4, kind: input, shape index: {}]
  %s5 = inlined_call_operand.vmem [shape: f32[1,96], index: 5, kind: input, shape index: {}]
  %s6 = inlined_call_operand.vmem [shape: bf16[4,8,32], index: 6, kind: input, shape index: {}]
  %s7 = inlined_call_operand.vmem [shape: f32[1,32], index: 7, kind: input, shape index: {}]
  %s8 = inlined_call_operand.vmem [shape: f32[1,32], index: 8, kind: input, shape index: {}]
  %s9 = inlined_call_operand.vmem [shape: f32[1,32], index: 9, kind: input, shape index: {}]
  %s10 = inlined_call_operand.vmem [shape: bf16[32,64], index: 10, kind: input, shape index: {}]
  %s11 = inlined_call_operand.vmem [shape: f32[1,64], index: 11, kind: input, shape index: {}]
  %s12 = inlined_call_operand.vmem [shape: bf16[64,32], index: 12, kind: input, shape index: {}]
  %s13 = inlined_call_operand.vmem [shape: f32[1,32], index: 13, kind: input, shape index: {}]
  %s14 = inlined_call_operand.vmem [shape: f32[2,16,32], index: 14, kind: output, shape index: {}]
  %s15 = sld [smem:[#allocation0]]
  $region89: #{encoder_forward.9} parent=0
    _
  %s17 = ssub.s32 1, %s15
  %s18 = scalar_select 0, %s17, %s15
  loop: start=0, step=1, limit=4
  $region2: #{encoder_forward.9} parent=0 // loop_pre_header
    _
  $region3: #{encoder_forward.9} parent=0 // loop_header
    %s20 = sphi 0, %s24
    %p21 = scmp.ge.s32.totalorder %s20, 4
    %s30 = sphi 0, %s32
    %s33 = sphi 0, %s30
    %s34 = sphi 0, %s33
    %s50 = sphi 0, %s34
    %s56 = sphi 0, %s58
    %s59 = sphi 0, %s56
    %s60 = sphi 0, %s59
    %s76 = sphi 0, %s60
    %s80 = sphi 0, %s80
    %s82 = sphi 0, %s80
    %s83 = sphi 0, %s82
    %s97 = sphi 0, %s83
    %s101 = sphi 0, %s101
    %s103 = sphi 0, %s101
    %s104 = sphi 0, %s103
    %s118 = sphi 0, %s104
    %s122 = sphi 0, %s122
    %s124 = sphi 0, %s122
    %s125 = sphi 0, %s124
    %s139 = sphi 0, %s125
    %s143 = sphi 0, %s143
    %s145 = sphi 0, %s143
    %s146 = sphi 0, %s145
    %s160 = sphi 0, %s146
    %s164 = sphi 0, %s164
    %s166 = sphi 0, %s164
    %s167 = sphi 0, %s166
    %s181 = sphi 0, %s167
    %s185 = sphi 0, %s185
    %s187 = sphi 0, %s185
    %s188 = sphi 0, %s187
    %s202 = sphi 0, %s188
    %s206 = sphi 0, %s206
    %s208 = sphi 0, %s206
    %s209 = sphi 0, %s208
    %s223 = sphi 0, %s209
    %s227 = sphi 0, %s227
    %s229 = sphi 0, %s227
    %s230 = sphi 0, %s229
    %s244 = sphi 0, %s230
    %s248 = sphi 0, %s248
    %s250 = sphi 0, %s248
    %s251 = sphi 0, %s250
    %s265 = sphi 0, %s251
    %s269 = sphi 0, %s269
    %s271 = sphi 0, %s269
    %s272 = sphi 0, %s271
    %s286 = sphi 0, %s272
    %s290 = sphi 0, %s290
    %s292 = sphi 0, %s290
    %s293 = sphi 0, %s292
    %s307 = sphi 0, %s293
    %s311 = sphi 0, %s311
    %s313 = sphi 0, %s311
    %s314 = sphi 0, %s313
    %s328 = sphi 0, %s314
    %s334 = sphi 0, %s336
    %s337 = sphi 0, %s334
    %s338 = sphi 0, %s337
    %s354 = sphi 0, %s338
  $region4: #{encoder_forward.9} parent=0 // loop_header_branch
    %23 = sbr.rel (%p21) target = $region8
  $region5: #{encoder_forward.9} parent=0 // loop_body
    %s25 = ssub.s32 %s20, 1
    %s26 = ssub.s32 %s20, 2
    %s27 = sadd.s32 %s20, 1
    %s28 = ssub.s32 %s20, %s27
    %p29 = scmp.eq.s32.totalorder %s28, 0
    %s31 = sadd.s32 %s30, 1
    %s32 = scalar_select %p29, %s30, %s31
    %p35 = pneg %p29
    %p36 = scmp.eq.s32.totalorder %s20, 1
    %p37 = por %p35, %p36
    %p38 = scmp.ne.s32.totalorder %s30, %s33
    %p39 = scmp.eq.s32.totalorder %s20, 0
    %p40 = por %p38, %p39
    %p41 = scmp.ne.s32.totalorder %s30, %s33
    %p42 = scmp.eq.s32.totalorder %s25, 1
    %p43 = por %p41, %p42
    %p44 = scmp.ne.s32.totalorder %s33, %s34
    %p45 = scmp.eq.s32.totalorder %s25, 0
    %p46 = por %p44, %p45
    %p47 = scmp.ne.s32.totalorder %s33, %s34
    %p48 = scmp.eq.s32.totalorder %s26, 1
    %p49 = por %p47, %p48
    %p51 = scmp.ne.s32.totalorder %s34, %s50
    %p52 = scmp.eq.s32.totalorder %s26, 0
    %p53 = por %p51, %p52
    %s54 = ssub.s32 %s20, %s27
    %p55 = scmp.eq.s32.totalorder %s54, 0
    %s57 = sadd.s32 %s56, 1
    %s58 = scalar_select %p55, %s56, %s57
    %p61 = pneg %p55
    %p62 = scmp.eq.s32.totalorder %s20, 1
    %p63 = por %p61, %p62
    %p64 = scmp.ne.s32.totalorder %s56, %s59
    %p65 = scmp.eq.s32.totalorder %s20, 0
    %p66 = por %p64, %p65
    %p67 = scmp.ne.s32.totalorder %s56, %s59
    %p68 = scmp.eq.s32.totalorder %s25, 1
    %p69 = por %p67, %p68
    %p70 = scmp.ne.s32.totalorder %s59, %s60
    %p71 = scmp.eq.s32.totalorder %s25, 0
    %p72 = por %p70, %p71
    %p73 = scmp.ne.s32.totalorder %s59, %s60
    %p74 = scmp.eq.s32.totalorder %s26, 1
    %p75 = por %p73, %p74
    %p77 = scmp.ne.s32.totalorder %s60, %s76
    %p78 = scmp.eq.s32.totalorder %s26, 0
    %p79 = por %p77, %p78
    %s81 = sadd.s32 %s80, 1
    %p84 = scmp.eq.s32.totalorder %s20, 1
    %p85 = scmp.ne.s32.totalorder %s80, %s82
    %p86 = scmp.eq.s32.totalorder %s20, 0
    %p87 = por %p85, %p86
    %p88 = scmp.ne.s32.totalorder %s80, %s82
    %p89 = scmp.eq.s32.totalorder %s25, 1
    %p90 = por %p88, %p89
    %p91 = scmp.ne.s32.totalorder %s82, %s83
    %p92 = scmp.eq.s32.totalorder %s25, 0
    %p93 = por %p91, %p92
    %p94 = scmp.ne.s32.totalorder %s82, %s83
    %p95 = scmp.eq.s32.totalorder %s26, 1
    %p96 = por %p94, %p95
    %p98 = scmp.ne.s32.totalorder %s83, %s97
    %p99 = scmp.eq.s32.totalorder %s26, 0
    %p100 = por %p98, %p99
    %s102 = sadd.s32 %s101, 1
    %p105 = scmp.eq.s32.totalorder %s20, 1
    %p106 = scmp.ne.s32.totalorder %s101, %s103
    %p107 = scmp.eq.s32.totalorder %s20, 0
    %p108 = por %p106, %p107
    %p109 = scmp.ne.s32.totalorder %s101, %s103
    %p110 = scmp.eq.s32.totalorder %s25, 1
    %p111 = por %p109, %p110
    %p112 = scmp.ne.s32.totalorder %s103, %s104
    %p113 = scmp.eq.s32.totalorder %s25, 0
    %p114 = por %p112, %p113
    %p115 = scmp.ne.s32.totalorder %s103, %s104
    %p116 = scmp.eq.s32.totalorder %s26, 1
    %p117 = por %p115, %p116
    %p119 = scmp.ne.s32.totalorder %s104, %s118
    %p120 = scmp.eq.s32.totalorder %s26, 0
    %p121 = por %p119, %p120
    %s123 = sadd.s32 %s122, 1
    %p126 = scmp.eq.s32.totalorder %s20, 1
    %p127 = scmp.ne.s32.totalorder %s122, %s124
    %p128 = scmp.eq.s32.totalorder %s20, 0
    %p129 = por %p127, %p128
    %p130 = scmp.ne.s32.totalorder %s122, %s124
    %p131 = scmp.eq.s32.totalorder %s25, 1
    %p132 = por %p130, %p131
    %p133 = scmp.ne.s32.totalorder %s124, %s125
    %p134 = scmp.eq.s32.totalorder %s25, 0
    %p135 = por %p133, %p134
    %p136 = scmp.ne.s32.totalorder %s124, %s125
    %p137 = scmp.eq.s32.totalorder %s26, 1
    %p138 = por %p136, %p137
    %p140 = scmp.ne.s32.totalorder %s125, %s139
    %p141 = scmp.eq.s32.totalorder %s26, 0
    %p142 = por %p140, %p141
    %s144 = sadd.s32 %s143, 1
    %p147 = scmp.eq.s32.totalorder %s20, 1
    %p148 = scmp.ne.s32.totalorder %s143, %s145
    %p149 = scmp.eq.s32.totalorder %s20, 0
    %p150 = por %p148, %p149
    %p151 = scmp.ne.s32.totalorder %s143, %s145
    %p152 = scmp.eq.s32.totalorder %s25, 1
    %p153 = por %p151, %p152
    %p154 = scmp.ne.s32.totalorder %s145, %s146
    %p155 = scmp.eq.s32.totalorder %s25, 0
    %p156 = por %p154, %p155
    %p157 = scmp.ne.s32.totalorder %s145, %s146
    %p158 = scmp.eq.s32.totalorder %s26, 1
    %p159 = por %p157, %p158
    %p161 = scmp.ne.s32.totalorder %s146, %s160
    %p162 = scmp.eq.s32.totalorder %s26, 0
    %p163 = por %p161, %p162
    %s165 = sadd.s32 %s164, 1
    %p168 = scmp.eq.s32.totalorder %s20, 1
    %p169 = scmp.ne.s32.totalorder %s164, %s166
    %p170 = scmp.eq.s32.totalorder %s20, 0
    %p171 = por %p169, %p170
    %p172 = scmp.ne.s32.totalorder %s164, %s166
    %p173 = scmp.eq.s32.totalorder %s25, 1
    %p174 = por %p172, %p173
    %p175 = scmp.ne.s32.totalorder %s166, %s167
    %p176 = scmp.eq.s32.totalorder %s25, 0
    %p177 = por %p175, %p176
    %p178 = scmp.ne.s32.totalorder %s166, %s167
    %p179 = scmp.eq.s32.totalorder %s26, 1
    %p180 = por %p178, %p179
    %p182 = scmp.ne.s32.totalorder %s167, %s181
    %p183 = scmp.eq.s32.totalorder %s26, 0
    %p184 = por %p182, %p183
    %s186 = sadd.s32 %s185, 1
    %p189 = scmp.eq.s32.totalorder %s20, 1
    %p190 = scmp.ne.s32.totalorder %s185, %s187
    %p191 = scmp.eq.s32.totalorder %s20, 0
    %p192 = por %p190, %p191
    %p193 = scmp.ne.s32.totalorder %s185, %s187
    %p194 = scmp.eq.s32.totalorder %s25, 1
    %p195 = por %p193, %p194
    %p196 = scmp.ne.s32.totalorder %s187, %s188
    %p197 = scmp.eq.s32.totalorder %s25, 0
    %p198 = por %p196, %p197
    %p199 = scmp.ne.s32.totalorder %s187, %s188
    %p200 = scmp.eq.s32.totalorder %s26, 1
    %p201 = por %p199, %p200
    %p203 = scmp.ne.s32.totalorder %s188, %s202
    %p204 = scmp.eq.s32.totalorder %s26, 0
    %p205 = por %p203, %p204
    %s207 = sadd.s32 %s206, 1
    %p210 = scmp.eq.s32.totalorder %s20, 1
    %p211 = scmp.ne.s32.totalorder %s206, %s208
    %p212 = scmp.eq.s32.totalorder %s20, 0
    %p213 = por %p211, %p212
    %p214 = scmp.ne.s32.totalorder %s206, %s208
    %p215 = scmp.eq.s32.totalorder %s25, 1
    %p216 = por %p214, %p215
    %p217 = scmp.ne.s32.totalorder %s208, %s209
    %p218 = scmp.eq.s32.totalorder %s25, 0
    %p219 = por %p217, %p218
    %p220 = scmp.ne.s32.totalorder %s208, %s209
    %p221 = scmp.eq.s32.totalorder %s26, 1
    %p222 = por %p220, %p221
    %p224 = scmp.ne.s32.totalorder %s209, %s223
    %p225 = scmp.eq.s32.totalorder %s26, 0
    %p226 = por %p224, %p225
    %s228 = sadd.s32 %s227, 1
    %p231 = scmp.eq.s32.totalorder %s20, 1
    %p232 = scmp.ne.s32.totalorder %s227, %s229
    %p233 = scmp.eq.s32.totalorder %s20, 0
    %p234 = por %p232, %p233
    %p235 = scmp.ne.s32.totalorder %s227, %s229
    %p236 = scmp.eq.s32.totalorder %s25, 1
    %p237 = por %p235, %p236
    %p238 = scmp.ne.s32.totalorder %s229, %s230
    %p239 = scmp.eq.s32.totalorder %s25, 0
    %p240 = por %p238, %p239
    %p241 = scmp.ne.s32.totalorder %s229, %s230
    %p242 = scmp.eq.s32.totalorder %s26, 1
    %p243 = por %p241, %p242
    %p245 = scmp.ne.s32.totalorder %s230, %s244
    %p246 = scmp.eq.s32.totalorder %s26, 0
    %p247 = por %p245, %p246
    %s249 = sadd.s32 %s248, 1
    %p252 = scmp.eq.s32.totalorder %s20, 1
    %p253 = scmp.ne.s32.totalorder %s248, %s250
    %p254 = scmp.eq.s32.totalorder %s20, 0
    %p255 = por %p253, %p254
    %p256 = scmp.ne.s32.totalorder %s248, %s250
    %p257 = scmp.eq.s32.totalorder %s25, 1
    %p258 = por %p256, %p257
    %p259 = scmp.ne.s32.totalorder %s250, %s251
    %p260 = scmp.eq.s32.totalorder %s25, 0
    %p261 = por %p259, %p260
    %p262 = scmp.ne.s32.totalorder %s250, %s251
    %p263 = scmp.eq.s32.totalorder %s26, 1
    %p264 = por %p262, %p263
    %p266 = scmp.ne.s32.totalorder %s251, %s265
    %p267 = scmp.eq.s32.totalorder %s26, 0
    %p268 = por %p266, %p267
    %s270 = sadd.s32 %s269, 1
    %p273 = scmp.eq.s32.totalorder %s20, 1
    %p274 = scmp.ne.s32.totalorder %s269, %s271
    %p275 = scmp.eq.s32.totalorder %s20, 0
    %p276 = por %p274, %p275
    %p277 = scmp.ne.s32.totalorder %s269, %s271
    %p278 = scmp.eq.s32.totalorder %s25, 1
    %p279 = por %p277, %p278
    %p280 = scmp.ne.s32.totalorder %s271, %s272
    %p281 = scmp.eq.s32.totalorder %s25, 0
    %p282 = por %p280, %p281
    %p283 = scmp.ne.s32.totalorder %s271, %s272
    %p284 = scmp.eq.s32.totalorder %s26, 1
    %p285 = por %p283, %p284
    %p287 = scmp.ne.s32.totalorder %s272, %s286
    %p288 = scmp.eq.s32.totalorder %s26, 0
    %p289 = por %p287, %p288
    %s291 = sadd.s32 %s290, 1
    %p294 = scmp.eq.s32.totalorder %s20, 1
    %p295 = scmp.ne.s32.totalorder %s290, %s292
    %p296 = scmp.eq.s32.totalorder %s20, 0
    %p297 = por %p295, %p296
    %p298 = scmp.ne.s32.totalorder %s290, %s292
    %p299 = scmp.eq.s32.totalorder %s25, 1
    %p300 = por %p298, %p299
    %p301 = scmp.ne.s32.totalorder %s292, %s293
    %p302 = scmp.eq.s32.totalorder %s25, 0
    %p303 = por %p301, %p302
    %p304 = scmp.ne.s32.totalorder %s292, %s293
    %p305 = scmp.eq.s32.totalorder %s26, 1
    %p306 = por %p304, %p305
    %p308 = scmp.ne.s32.totalorder %s293, %s307
    %p309 = scmp.eq.s32.totalorder %s26, 0
    %p310 = por %p308, %p309
    %s312 = sadd.s32 %s311, 1
    %p315 = scmp.eq.s32.totalorder %s20, 1
    %p316 = scmp.ne.s32.totalorder %s311, %s313
    %p317 = scmp.eq.s32.totalorder %s20, 0
    %p318 = por %p316, %p317
    %p319 = scmp.ne.s32.totalorder %s311, %s313
    %p320 = scmp.eq.s32.totalorder %s25, 1
    %p321 = por %p319, %p320
    %p322 = scmp.ne.s32.totalorder %s313, %s314
    %p323 = scmp.eq.s32.totalorder %s25, 0
    %p324 = por %p322, %p323
    %p325 = scmp.ne.s32.totalorder %s313, %s314
    %p326 = scmp.eq.s32.totalorder %s26, 1
    %p327 = por %p325, %p326
    %p329 = scmp.ne.s32.totalorder %s314, %s328
    %p330 = scmp.eq.s32.totalorder %s26, 0
    %p331 = por %p329, %p330
    %s332 = ssub.s32 %s20, %s27
    %p333 = scmp.eq.s32.totalorder %s332, 0
    %s335 = sadd.s32 %s334, 1
    %s336 = scalar_select %p333, %s334, %s335
    %p339 = pneg %p333
    %p340 = scmp.eq.s32.totalorder %s20, 1
    %p341 = por %p339, %p340
    %p342 = scmp.ne.s32.totalorder %s334, %s337
    %p343 = scmp.eq.s32.totalorder %s20, 0
    %p344 = por %p342, %p343
    %p345 = scmp.ne.s32.totalorder %s334, %s337
    %p346 = scmp.eq.s32.totalorder %s25, 1
    %p347 = por %p345, %p346
    %p348 = scmp.ne.s32.totalorder %s337, %s338
    %p349 = scmp.eq.s32.totalorder %s25, 0
    %p350 = por %p348, %p349
    %p351 = scmp.ne.s32.totalorder %s337, %s338
    %p352 = scmp.eq.s32.totalorder %s26, 1
    %p353 = por %p351, %p352
    %p355 = scmp.ne.s32.totalorder %s338, %s354
    %p356 = scmp.eq.s32.totalorder %s26, 0
    %p357 = por %p355, %p356
    %p358 = scmp.le.s32.totalorder 1, %s20
    %p359 = scmp.lt.s32.totalorder %s20, 3
    %p360 = pnand %p358, %p359
    %p361 = pneg %p360
    // Predicated region
    $region9: #{encoder_forward.9} parent=5 // pred_check
      _
    $region10: #{encoder_forward.9} parent=5 // pred_check_branch
      %363 = sbr.rel (%p360) target = $region12
    $region11: #{encoder_forward.9} parent=5 // pred_region
      %s364 = ssub.s32 %s20, 1
      // Predicated region
      $region13: #{encoder_forward.9} parent=11 // pred_check
        %p365 = pneg %p93
      $region14: #{encoder_forward.9} parent=11 // pred_check_branch
        %367 = sbr.rel (%p365) target = $region16
      $region15: #{encoder_forward.9} parent=11 // pred_region
        _
      $region16: #{encoder_forward.9} parent=11 // pred_fallthru
        _
      // Predicated region
      $region17: #{encoder_forward.9} parent=11 // pred_check
        %p368 = pneg %p114
      $region18: #{encoder_forward.9} parent=11 // pred_check_branch
        %370 = sbr.rel (%p368) target = $region20
      $region19: #{encoder_forward.9} parent=11 // pred_region
        _
      $region20: #{encoder_forward.9} parent=11 // pred_fallthru
        _
      // Predicated region
      $region21: #{encoder_forward.9} parent=11 // pred_check
        %p371 = pneg %p135
      $region22: #{encoder_forward.9} parent=11 // pred_check_branch
        %373 = sbr.rel (%p371) target = $region24
      $region23: #{encoder_forward.9} parent=11 // pred_region
        _
      $region24: #{encoder_forward.9} parent=11 // pred_fallthru
        _
      // Predicated region
      $region25: #{encoder_forward.9} parent=11 // pred_check
        %p374 = pneg %p156
      $region26: #{encoder_forward.9} parent=11 // pred_check_branch
        %376 = sbr.rel (%p374) target = $region28
      $region27: #{encoder_forward.9} parent=11 // pred_region
        _
      $region28: #{encoder_forward.9} parent=11 // pred_fallthru
        _
      // Predicated region
      $region29: #{encoder_forward.9} parent=11 // pred_check
        %p377 = pneg %p177
      $region30: #{encoder_forward.9} parent=11 // pred_check_branch
        %379 = sbr.rel (%p377) target = $region32
      $region31: #{encoder_forward.9} parent=11 // pred_region
        _
      $region32: #{encoder_forward.9} parent=11 // pred_fallthru
        _
      // Predicated region
      $region33: #{encoder_forward.9} parent=11 // pred_check
        %p380 = pneg %p198
      $region34: #{encoder_forward.9} parent=11 // pred_check_branch
        %382 = sbr.rel (%p380) target = $region36
      $region35: #{encoder_forward.9} parent=11 // pred_region
        _
      $region36: #{encoder_forward.9} parent=11 // pred_fallthru
        _
      // Predicated region
      $region37: #{encoder_forward.9} parent=11 // pred_check
        %p383 = pneg %p219
      $region38: #{encoder_forward.9} parent=11 // pred_check_branch
        %385 = sbr.rel (%p383) target = $region40
      $region39: #{encoder_forward.9} parent=11 // pred_region
        _
      $region40: #{encoder_forward.9} parent=11 // pred_fallthru
        _
      // Predicated region
      $region41: #{encoder_forward.9} parent=11 // pred_check
        %p386 = pneg %p240
      $region42: #{encoder_forward.9} parent=11 // pred_check_branch
        %388 = sbr.rel (%p386) target = $region44
      $region43: #{encoder_forward.9} parent=11 // pred_region
        _
      $region44: #{encoder_forward.9} parent=11 // pred_fallthru
        _
      // Predicated region
      $region45: #{encoder_forward.9} parent=11 // pred_check
        %p389 = pneg %p261
      $region46: #{encoder_forward.9} parent=11 // pred_check_branch
        %391 = sbr.rel (%p389) target = $region48
      $region47: #{encoder_forward.9} parent=11 // pred_region
        _
      $region48: #{encoder_forward.9} parent=11 // pred_fallthru
        _
      // Predicated region
      $region49: #{encoder_forward.9} parent=11 // pred_check
        %p392 = pneg %p282
      $region50: #{encoder_forward.9} parent=11 // pred_check_branch
        %394 = sbr.rel (%p392) target = $region52
      $region51: #{encoder_forward.9} parent=11 // pred_region
        _
      $region52: #{encoder_forward.9} parent=11 // pred_fallthru
        _
      // Predicated region
      $region53: #{encoder_forward.9} parent=11 // pred_check
        %p395 = pneg %p303
      $region54: #{encoder_forward.9} parent=11 // pred_check_branch
        %397 = sbr.rel (%p395) target = $region56
      $region55: #{encoder_forward.9} parent=11 // pred_region
        _
      $region56: #{encoder_forward.9} parent=11 // pred_fallthru
        _
      // Predicated region
      $region57: #{encoder_forward.9} parent=11 // pred_check
        %p398 = pneg %p324
      $region58: #{encoder_forward.9} parent=11 // pred_check_branch
        %400 = sbr.rel (%p398) target = $region60
      $region59: #{encoder_forward.9} parent=11 // pred_region
        _
      $region60: #{encoder_forward.9} parent=11 // pred_fallthru
        _
    $region12: #{encoder_forward.9} parent=5 // pred_fallthru
      _
    %p401 = scmp.lt.s32.totalorder %s20, 2
    // Predicated region
    $region61: #{encoder_forward.9} parent=5 // pred_check
      %p402 = pneg %p401
    $region62: #{encoder_forward.9} parent=5 // pred_check_branch
      %404 = sbr.rel (%p402) target = $region64
    $region63: #{encoder_forward.9} parent=5 // pred_region
      // Predicated region
      $region65: #{encoder_forward.9} parent=63 // pred_check
        %p405 = pneg %p40
      $region66: #{encoder_forward.9} parent=63 // pred_check_branch
        %407 = sbr.rel (%p405) target = $region68
      $region67: #{encoder_forward.9} parent=63 // pred_region
        %p408 = scmp.lt.s32.totalorder %s20, 1
        %s409 = scalar_select %p408, %s20, 1
        %s410 = smul.addr %s409, 2
        %s411 = smul.addr %s410, 8
        %s412 = scalar_lea.vmem %s0, %s411
      $region68: #{encoder_forward.9} parent=63 // pred_fallthru
        _
      // Predicated region
      $region69: #{encoder_forward.9} parent=63 // pred_check
        %p413 = pneg %p66
      $region70: #{encoder_forward.9} parent=63 // pred_check_branch
        %415 = sbr.rel (%p413) target = $region72
      $region71: #{encoder_forward.9} parent=63 // pred_region
        %p416 = scmp.lt.s32.totalorder %s20, 1
        %s417 = scalar_select %p416, %s20, 1
        %s418 = scalar_lea.vmem %s1, %s417
      $region72: #{encoder_forward.9} parent=63 // pred_fallthru
        _
    $region64: #{encoder_forward.9} parent=5 // pred_fallthru
      _
    %p419 = scmp.le.s32.totalorder 1, %s20
    %p420 = scmp.lt.s32.totalorder %s20, 3
    %p421 = pnand %p419, %p420
    %p422 = pneg %p421
    // Predicated region
    $region73: #{encoder_forward.9} parent=5 // pred_check
      _
    $region74: #{encoder_forward.9} parent=5 // pred_check_branch
      %424 = sbr.rel (%p421) target = $region76
    $region75: #{encoder_forward.9} parent=5 // pred_region
      %s425 = ssub.s32 %s20, 1
      %p426 = scmp.lt.s32.totalorder %s25, 1
      %s427 = scalar_select %p426, %s25, 1
      %s428 = smul.addr %s427, 2
      %s429 = smul.addr %s428, 8
      %s430 = scalar_lea.vmem %s0, %s429
      %p431 = pneg %p46
      %p432 = pneg %p43
      %p433 = scmp.lt.s32.totalorder %s25, 1
      %s434 = scalar_select %p433, %s25, 1
      %s435 = scalar_lea.vmem %s1, %s434
      %p436 = pneg %p72
      %p437 = pneg %p69
      %p438 = pneg %p93
      %p439 = pneg %p90
      %p440 = pneg %p114
      %p441 = pneg %p111
      %p442 = pneg %p135
      %p443 = pneg %p132
      %p444 = pneg %p156
      %p445 = pneg %p153
      %p446 = pneg %p177
      %p447 = pneg %p174
      %p448 = pneg %p198
      %p449 = pneg %p195
      %p450 = pneg %p219
      %p451 = pneg %p216
      %p452 = pneg %p240
      %p453 = pneg %p237
      %p454 = pneg %p261
      %p455 = pneg %p258
      %p456 = pneg %p282
      %p457 = pneg %p279
      %p458 = pneg %p303
      %p459 = pneg %p300
      %p460 = pneg %p324
      %p461 = pneg %p321
      %p462 = pneg %p350
      %p463 = pneg %p347
      %p464 = scmp.lt.s32.totalorder %s25, 1
      %s465 = scalar_select %p464, %s25, 1
      %s466 = smul.addr %s465, 2
      %s467 = smul.addr %s466, 8
      %s468 = scalar_lea.vmem %s14, %s467
      %p469 = scmp.lt.s32.totalorder %s25, 1
      %s470 = scalar_select %p469, %s25, 1
      %s471 = smul.addr %s470, 2
      %s472 = smul.addr %s471, 8
      %s473 = scalar_lea.vmem %s0, %s472
      %p474 = scmp.lt.s32.totalorder %s25, 1
      %s475 = scalar_select %p474, %s25, 1
      %s476 = scalar_lea.vmem %s1, %s475
      %p477 = scmp.lt.s32.totalorder %s25, 1
      %s478 = scalar_select %p477, %s25, 1
      %s479 = smul.addr %s478, 2
      %s480 = smul.addr %s479, 8
      %s481 = scalar_lea.vmem %s14, %s480
      %v483 = vld [vmem:[%s473] sm:$0xff]
      %v484 = vld [vmem:[%s473 + $0x8] sm:$0xff]
      %v485 = vld [vmem:[%s476] sm:$0x1]
      %vm486 = vcmp.gt.f32.partialorder %v485, 0.5
      %v487 = vld [vmem:[%s2] sm:$0x1]
      %v488 = vld [vmem:[%s3] sm:$0x1]
      %vm489 = vcmask 261120
      %v490 = vsel %vm489, %v483, 0.0
      %491 = vadd.xlane.f32.xlu0 %v490
      %v492 = vpop.xlane.xlu0 %491
      %v493 = vsel %vm489, %v484, 0.0
      %494 = vadd.xlane.f32.xlu0 %v493
      %v495 = vpop.xlane.xlu0 %494
      %v496 = vrcp.pop 32.0
      %v497 = vmul.f32 %v492, %v496
      %v498 = vmul.f32 %v495, %v496
      %v499 = vsub.f32 %v483, %v497
      %v500 = vsub.f32 %v484, %v498
      %v501 = vmul.f32 %v499, %v499
      %v502 = vmul.f32 %v500, %v500
      %v503 = vsel %vm489, %v501, 0.0
      %504 = vadd.xlane.f32.xlu0 %v503
      %v505 = vpop.xlane.xlu0 %504
      %v506 = vsel %vm489, %v502, 0.0
      %507 = vadd.xlane.f32.xlu0 %v506
      %v508 = vpop.xlane.xlu0 %507
      %v509 = vmul.f32 %v505, %v496
      %v510 = vmul.f32 %v508, %v496
      %v511 = vadd.f32 %v509, 1e-05
      %v512 = vadd.f32 %v510, 1e-05
      %v513 = vrsqrt.pop %v511
      %v514 = vrsqrt.pop %v512
      %v515 = vmul.f32 %v499, %v513
      %v516 = vmul.f32 %v500, %v514
      %v518 = vlaneseq
      %v519 = vshrl.u32 %v518, 7
      %v520 = vsub.s32 0, %v519
      %v521 = vrot.slane %v487, %v520
      %v523 = vmul.f32 %v515, %v521
      %v524 = vmul.f32 %v516, %v521
      %v526 = vlaneseq
      %v527 = vshrl.u32 %v526, 7
      %v528 = vsub.s32 0, %v527
      %v529 = vrot.slane %v488, %v528
      %v531 = vadd.f32 %v523, %v529
      %v532 = vadd.f32 %v524, %v529
      %v533 = vpack.c.bf16 %v532, %v531
      %v534 = vld [vmem:[%s4] sm:$0xf]
      %v535 = vld [vmem:[%s4 + $0x4] sm:$0xf]
      %v536 = vld [vmem:[%s4 + $0x8] sm:$0xf]
      %v537 = vld [vmem:[%s4 + $0xc] sm:$0xf]
      %v538 = vld [vmem:[%s5] sm:$0x1]
      %v540 = vlaneseq
      %v541 = vshrl.u32 %v540, 7
      %v542 = vsub.s32 0, %v541
      %v543 = vrot.slane %v538, %v542
      %v549 = vunpack.c.l.b16 %v534
      %v550 = vunpack.c.l.b16 %v535
      %v551 = vunpack.c.l.b16 %v536
      %v552 = vunpack.c.l.b16 %v537
      %v553 = vpack.c.b16 %v550, %v549
      %v554 = vpack.c.b16 %v552, %v551
      %v558 = vsel %vm489, %v533, 0
      %560 = vmatprep.subr.bf16.mxu0 0
      %561 = vmatpush1.bf16.msra.mxu0 0
      %562 = vmatprep.subr.bf16.mxu0 0
      %563 = vmatpush1.bf16.msra.mxu0 0
      %564 = vmatprep.subr.bf16.mxu0 0
      %565 = vmatpush1.bf16.msra.mxu0 0
      %566 = vmatprep.subr.bf16.mxu0 0
      %567 = vmatpush1.bf16.msra.mxu0 0
      %568 = vmatprep.subr.bf16.mxu0 0
      %569 = vmatpush1.bf16.msra.mxu0 0
      %570 = vmatprep.subr.bf16.mxu0 0
      %571 = vmatpush1.bf16.msra.mxu0 0
      %572 = vmatprep.subr.bf16.mxu0 0
      %573 = vmatpush1.bf16.msra.mxu0 %v554
      %574 = vmatprep.subr.bf16.mxu0 0
      %575 = vmatpush1.bf16.msra.mxu0 %v553
      %576 = vmatprep.subr.bf16.mxu0 0
      %577 = vmatpush2.bf16.msra.mxu0 0
      %578 = vmatprep.subr.bf16.mxu0 0
      %579 = vmatpush2.bf16.msra.mxu0 0
      %580 = vmatprep.subr.bf16.mxu0 0
      %581 = vmatpush2.bf16.msra.mxu0 0
      %582 = vmatprep.subr.bf16.mxu0 0
      %583 = vmatpush2.bf16.msra.mxu0 0
      %584 = vmatprep.subr.bf16.mxu0 0
      %585 = vmatpush2.bf16.msra.mxu0 0
      %586 = vmatprep.subr.bf16.mxu0 0
      %587 = vmatpush2.bf16.msra.mxu0 0
      %588 = vmatprep.subr.bf16.mxu0 0
      %589 = vmatpush2.bf16.msra.mxu0 0
      %590 = vmatprep.subr.bf16.mxu0 0
      %591 = vmatpush2.bf16.msra.mxu0 0
      %592 = vmatprep.mubr.bf16.mxu0 0
      %593 = vmatmul.mubr.bf16.gmra.mxu0 %v558
      %v594 = vpop.f32.mrf.mxu0
      %v595 = vadd.f32 %v543, %v594
      %v596 = vpop.f32.mrf.mxu0
      %v597 = vpop.f32.mrf.mxu0
      %v598 = vadd.f32 %v543, %v597
      %v599 = vpop.f32.mrf.mxu0
      %600 = vdwg.mxu0
      %vm601 = vcmask 785408
      %602 = vst.msk [vmem:[#allocation2] sm:$0xff] %vm601, %v595
      %603 = vst.msk [vmem:[#allocation2 + $0x8] sm:$0xff] %vm601, %v598
      %v604 = vld [vmem:[#allocation2] sm:$0xff]
      %v605 = vld [vmem:[#allocation2 + $0x8] sm:$0xff]
      %v606 = vpack.c.bf16 %v605, %v604
      %608 = vrot.lane.b32.xlu0 %v606, 96
      %v609 = vpop.permute.xlu0 %608
      %vm610 = vcmask 64512
      %v612 = vsel %vm610, %v606, 0
      %v615 = vsel %vm610, %v609, 0
      %617 = vmatprep.subr.bf16.mxu0 0
      %618 = vmatpush1.bf16.xpose.msra.mxu0 0
      %619 = vmatprep.subr.bf16.mxu0 0
      %620 = vmatpush1.bf16.xpose.msra.mxu0 0
      %621 = vmatprep.subr.bf16.mxu0 0
      %622 = vmatpush1.bf16.xpose.msra.mxu0 0
      %623 = vmatprep.subr.bf16.mxu0 0
      %624 = vmatpush1.bf16.xpose.msra.mxu0 0
      %625 = vmatprep.subr.bf16.mxu0 0
      %626 = vmatpush1.bf16.xpose.msra.mxu0 0
      %627 = vmatprep.subr.bf16.mxu0 0
      %628 = vmatpush1.bf16.xpose.msra.mxu0 0
      %629 = vmatprep.subr.bf16.mxu0 0
      %630 = vmatpush1.bf16.xpose.msra.mxu0 0
      %631 = vmatprep.subr.bf16.mxu0 0
      %632 = vmatpush1.bf16.xpose.msra.mxu0 %v615
      %633 = vmatprep.subr.bf16.mxu0 0
      %634 = vmatpush2.bf16.xpose.msra.mxu0 0
      %635 = vmatprep.subr.bf16.mxu0 0
      %636 = vmatpush2.bf16.xpose.msra.mxu0 0
      %637 = vmatprep.subr.bf16.mxu0 0
      %638 = vmatpush2.bf16.xpose.msra.mxu0 0
      %639 = vmatprep.subr.bf16.mxu0 0
      %640 = vmatpush2.bf16.xpose.msra.mxu0 0
      %641 = vmatprep.subr.bf16.mxu0 0
      %642 = vmatpush2.bf16.xpose.msra.mxu0 0
      %643 = vmatprep.subr.bf16.mxu0 0
      %644 = vmatpush2.bf16.xpose.msra.mxu0 0
      %645 = vmatprep.subr.bf16.mxu0 0
      %646 = vmatpush2.bf16.xpose.msra.mxu0 0
      %647 = vmatprep.subr.bf16.mxu0 0
      %648 = vmatpush2.bf16.xpose.msra.mxu0 0
      %649 = vmatprep.mubr.bf16.mxu0 0
      %650 = vmatmul.mubr.bf16.gmra.mxu0 %v612
      %v651 = vpop.f32.mrf.mxu0
      %v652 = vadd.f32 0.0, %v651
      %v653 = vpop.f32.mrf.mxu0
      %v654 = vpop.f32.mrf.mxu0
      %v655 = vadd.f32 0.0, %v654
      %v656 = vpop.f32.mrf.mxu0
      %657 = vdwg.mxu0
      %v658 = vmul.f32 %v652, 0.35355338
      %v659 = vmul.f32 %v655, 0.35355338
      %v660 = vsel %vm486, 1, 0
      %v661 = vlaneseq
      %v662 = vshrl.u32 %v661, 7
      %v663 = vsub.s32 0, %v662
      %v664 = vrot.slane %v660, %v663
      %vm665 = vcmp.eq.s32.totalorder %v664, 1
      %v666 = vsel %vm665, %v658, -1e+30
      %v667 = vsel %vm665, %v659, -1e+30
      %vm668 = vcmask 130048
      %v669 = vsel %vm668, %v666, -inf
      %670 = vmax.xlane.f32.xlu0 %v669
      %v671 = vpop.xlane.xlu0 %670
      %v672 = vsel %vm668, %v667, -inf
      %673 = vmax.xlane.f32.xlu0 %v672
      %v674 = vpop.xlane.xlu0 %673
      %v675 = vsub.f32 %v666, %v671
      %v676 = vsub.f32 %v667, %v674
      %v677 = vmul.f32 %v675, 1.442695
      %v678 = vpow.pop %v677
      %v679 = vmul.f32 %v676, 1.442695
      %v680 = vpow.pop %v679
      %v681 = vsel %vm668, %v678, 0.0
      %682 = vadd.xlane.f32.xlu0 %v681
      %v683 = vpop.xlane.xlu0 %682
      %v684 = vsel %vm668, %v680, 0.0
      %685 = vadd.xlane.f32.xlu0 %v684
      %v686 = vpop.xlane.xlu0 %685
      %v687 = vrcp.pop %v683
      %v688 = vrcp.pop %v686
      %v689 = vmul.f32 %v678, %v687
      %v690 = vmul.f32 %v680, %v688
      %v691 = vsel %vm665, %v689, 0.0
      %v692 = vsel %vm665, %v690, 0.0
      %v693 = vpack.c.bf16 %v692, %v691
      %694 = vrot.lane.b32.xlu0 %v606, 64
      %v695 = vpop.permute.xlu0 %694
      %v698 = vsel %vm668, %v693, 0
      %700 = vmatprep.subr.bf16.mxu0 0
      %701 = vmatpush1.bf16.msra.mxu0 0
      %702 = vmatprep.subr.bf16.mxu0 0
      %703 = vmatpush1.bf16.msra.mxu0 0
      %704 = vmatprep.subr.bf16.mxu0 0
      %705 = vmatpush1.bf16.msra.mxu0 0
      %706 = vmatprep.subr.bf16.mxu0 0
      %707 = vmatpush1.bf16.msra.mxu0 0
      %708 = vmatprep.subr.bf16.mxu0 0
      %709 = vmatpush1.bf16.msra.mxu0 0
      %710 = vmatprep.subr.bf16.mxu0 0
      %711 = vmatpush1.bf16.msra.mxu0 0
      %712 = vmatprep.subr.bf16.mxu0 0
      %713 = vmatpush1.bf16.msra.mxu0 0
      %714 = vmatprep.subr.bf16.mxu0 0
      %715 = vmatpush1.bf16.msra.mxu0 %v695
      %716 = vmatprep.subr.bf16.mxu0 0
      %717 = vmatpush2.bf16.msra.mxu0 0
      %718 = vmatprep.subr.bf16.mxu0 0
      %719 = vmatpush2.bf16.msra.mxu0 0
      %720 = vmatprep.subr.bf16.mxu0 0
      %721 = vmatpush2.bf16.msra.mxu0 0
      %722 = vmatprep.subr.bf16.mxu0 0
      %723 = vmatpush2.bf16.msra.mxu0 0
      %724 = vmatprep.subr.bf16.mxu0 0
      %725 = vmatpush2.bf16.msra.mxu0 0
      %726 = vmatprep.subr.bf16.mxu0 0
      %727 = vmatpush2.bf16.msra.mxu0 0
      %728 = vmatprep.subr.bf16.mxu0 0
      %729 = vmatpush2.bf16.msra.mxu0 0
      %730 = vmatprep.subr.bf16.mxu0 0
      %731 = vmatpush2.bf16.msra.mxu0 0
      %732 = vmatprep.mubr.bf16.mxu0 0
      %733 = vmatmul.mubr.bf16.gmra.mxu0 %v698
      %v734 = vpop.f32.mrf.mxu0
      %v735 = vadd.f32 0.0, %v734
      %v736 = vpop.f32.mrf.mxu0
      %v737 = vpop.f32.mrf.mxu0
      %v738 = vadd.f32 0.0, %v737
      %v739 = vpop.f32.mrf.mxu0
      %740 = vdwg.mxu0
      %v741 = vpack.c.bf16 %v738, %v735
      %v742 = vld [vmem:[%s6] sm:$0xf]
      %v743 = vld [vmem:[#allocation2] sm:$0xff]
      %v744 = vld [vmem:[#allocation2 + $0x8] sm:$0xff]
      %v745 = vpack.c.bf16 %v744, %v743
      %747 = vrot.lane.b32.xlu0 %v745, 120
      %v748 = vpop.permute.xlu0 %747
      %749 = vrot.lane.b32.xlu0 %v745, 88
      %v750 = vpop.permute.xlu0 %749
      %v752 = vsel %vm610, %v748, 0
      %v755 = vsel %vm610, %v750, 0
      %757 = vmatprep.subr.bf16.mxu0 0
      %758 = vmatpush1.bf16.xpose.msra.mxu0 0
      %759 = vmatprep.subr.bf16.mxu0 0
      %760 = vmatpush1.bf16.xpose.msra.mxu0 0
      %761 = vmatprep.subr.bf16.mxu0 0
      %762 = vmatpush1.bf16.xpose.msra.mxu0 0
      %763 = vmatprep.subr.bf16.mxu0 0
      %764 = vmatpush1.bf16.xpose.msra.mxu0 0
      %765 = vmatprep.subr.bf16.mxu0 0
      %766 = vmatpush1.bf16.xpose.msra.mxu0 0
      %767 = vmatprep.subr.bf16.mxu0 0
      %768 = vmatpush1.bf16.xpose.msra.mxu0 0
      %769 = vmatprep.subr.bf16.mxu0 0
      %770 = vmatpush1.bf16.xpose.msra.mxu0 0
      %771 = vmatprep.subr.bf16.mxu0 0
      %772 = vmatpush1.bf16.xpose.msra.mxu0 %v755
      %773 = vmatprep.subr.bf16.mxu0 0
      %774 = vmatpush2.bf16.xpose.msra.mxu0 0
      %775 = vmatprep.subr.bf16.mxu0 0
      %776 = vmatpush2.bf16.xpose.msra.mxu0 0
      %777 = vmatprep.subr.bf16.mxu0 0
      %778 = vmatpush2.bf16.xpose.msra.mxu0 0
      %779 = vmatprep.subr.bf16.mxu0 0
      %780 = vmatpush2.bf16.xpose.msra.mxu0 0
      %781 = vmatprep.subr.bf16.mxu0 0
      %782 = vmatpush2.bf16.xpose.msra.mxu0 0
      %783 = vmatprep.subr.bf16.mxu0 0
      %784 = vmatpush2.bf16.xpose.msra.mxu0 0
      %785 = vmatprep.subr.bf16.mxu0 0
      %786 = vmatpush2.bf16.xpose.msra.mxu0 0
      %787 = vmatprep.subr.bf16.mxu0 0
      %788 = vmatpush2.bf16.xpose.msra.mxu0 0
      %789 = vmatprep.mubr.bf16.mxu0 0
      %790 = vmatmul.mubr.bf16.gmra.mxu0 %v752
      %v791 = vpop.f32.mrf.mxu0
      %v792 = vadd.f32 0.0, %v791
      %v793 = vpop.f32.mrf.mxu0
      %v794 = vpop.f32.mrf.mxu0
      %v795 = vadd.f32 0.0, %v794
      %v796 = vpop.f32.mrf.mxu0
      %797 = vdwg.mxu0
      %v798 = vmul.f32 %v792, 0.35355338
      %v799 = vmul.f32 %v795, 0.35355338
      %v800 = vsel %vm665, %v798, -1e+30
      %v801 = vsel %vm665, %v799, -1e+30
      %v802 = vsel %vm668, %v800, -inf
      %803 = vmax.xlane.f32.xlu0 %v802
      %v804 = vpop.xlane.xlu0 %803
      %v805 = vsel %vm668, %v801, -inf
      %806 = vmax.xlane.f32.xlu0 %v805
      %v807 = vpop.xlane.xlu0 %806
      %v808 = vsub.f32 %v800, %v804
      %v809 = vsub.f32 %v801, %v807
      %v810 = vmul.f32 %v808, 1.442695
      %v811 = vpow.pop %v810
      %v812 = vmul.f32 %v809, 1.442695
      %v813 = vpow.pop %v812
      %v814 = vsel %vm668, %v811, 0.0
      %815 = vadd.xlane.f32.xlu0 %v814
      %v816 = vpop.xlane.xlu0 %815
      %v817 = vsel %vm668, %v813, 0.0
      %818 = vadd.xlane.f32.xlu0 %v817
      %v819 = vpop.xlane.xlu0 %818
      %v820 = vrcp.pop %v816
      %v821 = vrcp.pop %v819
      %v822 = vmul.f32 %v811, %v820
      %v823 = vmul.f32 %v813, %v821
      %v824 = vsel %vm665, %v822, 0.0
      %v825 = vsel %vm665, %v823, 0.0
      %v826 = vpack.c.bf16 %v825, %v824
      %827 = vrot.lane.b32.xlu0 %v745, 56
      %v828 = vpop.permute.xlu0 %827
      %v831 = vsel %vm668, %v826, 0
      %833 = vmatprep.subr.bf16.mxu0 0
      %834 = vmatpush1.bf16.msra.mxu0 0
      %835 = vmatprep.subr.bf16.mxu0 0
      %836 = vmatpush1.bf16.msra.mxu0 0
      %837 = vmatprep.subr.bf16.mxu0 0
      %838 = vmatpush1.bf16.msra.mxu0 0
      %839 = vmatprep.subr.bf16.mxu0 0
      %840 = vmatpush1.bf16.msra.mxu0 0
      %841 = vmatprep.subr.bf16.mxu0 0
      %842 = vmatpush1.bf16.msra.mxu0 0
      %843 = vmatprep.subr.bf16.mxu0 0
      %844 = vmatpush1.bf16.msra.mxu0 0
      %845 = vmatprep.subr.bf16.mxu0 0
      %846 = vmatpush1.bf16.msra.mxu0 0
      %847 = vmatprep.subr.bf16.mxu0 0
      %848 = vmatpush1.bf16.msra.mxu0 %v828
      %849 = vmatprep.subr.bf16.mxu0 0
      %850 = vmatpush2.bf16.msra.mxu0 0
      %851 = vmatprep.subr.bf16.mxu0 0
      %852 = vmatpush2.bf16.msra.mxu0 0
      %853 = vmatprep.subr.bf16.mxu0 0
      %854 = vmatpush2.bf16.msra.mxu0 0
      %855 = vmatprep.subr.bf16.mxu0 0
      %856 = vmatpush2.bf16.msra.mxu0 0
      %857 = vmatprep.subr.bf16.mxu0 0
      %858 = vmatpush2.bf16.msra.mxu0 0
      %859 = vmatprep.subr.bf16.mxu0 0
      %860 = vmatpush2.bf16.msra.mxu0 0
      %861 = vmatprep.subr.bf16.mxu0 0
      %862 = vmatpush2.bf16.msra.mxu0 0
      %863 = vmatprep.subr.bf16.mxu0 0
      %864 = vmatpush2.bf16.msra.mxu0 0
      %865 = vmatprep.mubr.bf16.mxu0 0
      %866 = vmatmul.mubr.bf16.gmra.mxu0 %v831
      %v867 = vpop.f32.mrf.mxu0
      %v868 = vadd.f32 0.0, %v867
      %v869 = vpop.f32.mrf.mxu0
      %v870 = vpop.f32.mrf.mxu0
      %v871 = vadd.f32 0.0, %v870
      %v872 = vpop.f32.mrf.mxu0
      %873 = vdwg.mxu0
      %v874 = vpack.c.bf16 %v871, %v868
      %s875 = scalar_lea.vmem %s6, 4
      %v876 = vld [vmem:[%s875] sm:$0xf]
      %v878 = vsel %vm610, %v874, 0
      %vm880 = vcmask 1043456
      %v882 = vsel %vm880, %v876, 0
      %884 = vmatprep.subr.bf16.mxu0 0
      %885 = vmatpush1.bf16.msra.mxu0 0
      %886 = vmatprep.subr.bf16.mxu0 0
      %887 = vmatpush1.bf16.msra.mxu0 0
      %888 = vmatprep.subr.bf16.mxu0 0
      %889 = vmatpush1.bf16.msra.mxu0 0
      %890 = vmatprep.subr.bf16.mxu0 0
      %891 = vmatpush1.bf16.msra.mxu0 0
      %892 = vmatprep.subr.bf16.mxu0 0
      %893 = vmatpush1.bf16.msra.mxu0 0
      %894 = vmatprep.subr.bf16.mxu0 0
      %895 = vmatpush1.bf16.msra.mxu0 0
      %896 = vmatprep.subr.bf16.mxu0 0
      %897 = vmatpush1.bf16.msra.mxu0 0
      %898 = vmatprep.subr.bf16.mxu0 0
      %899 = vmatpush1.bf16.msra.mxu0 %v882
      %900 = vmatprep.subr.bf16.mxu0 0
      %901 = vmatpush2.bf16.msra.mxu0 0
      %902 = vmatprep.subr.bf16.mxu0 0
      %903 = vmatpush2.bf16.msra.mxu0 0
      %904 = vmatprep.subr.bf16.mxu0 0
      %905 = vmatpush2.bf16.msra.mxu0 0
      %906 = vmatprep.subr.bf16.mxu0 0
      %907 = vmatpush2.bf16.msra.mxu0 0
      %908 = vmatprep.subr.bf16.mxu0 0
      %909 = vmatpush2.bf16.msra.mxu0 0
      %910 = vmatprep.subr.bf16.mxu0 0
      %911 = vmatpush2.bf16.msra.mxu0 0
      %912 = vmatprep.subr.bf16.mxu0 0
      %913 = vmatpush2.bf16.msra.mxu0 0
      %914 = vmatprep.subr.bf16.mxu0 0
      %915 = vmatpush2.bf16.msra.mxu0 0
      %916 = vmatprep.mubr.bf16.mxu0 0
      %917 = vmatmul.mubr.bf16.gmra.mxu0 %v878
      %v918 = vpop.f32.mrf.mxu0
      %v919 = vadd.f32 0.0, %v918
      %v920 = vpop.f32.mrf.mxu0
      %v921 = vpop.f32.mrf.mxu0
      %v922 = vadd.f32 0.0, %v921
      %v923 = vpop.f32.mrf.mxu0
      %924 = vdwg.mxu0
      %v926 = vsel %vm610, %v741, 0
      %v929 = vsel %vm880, %v742, 0
      %931 = vmatprep.subr.bf16.mxu0 0
      %932 = vmatpush1.bf16.msra.mxu0 0
      %933 = vmatprep.subr.bf16.mxu0 0
      %934 = vmatpush1.bf16.msra.mxu0 0
      %935 = vmatprep.subr.bf16.mxu0 0
      %936 = vmatpush1.bf16.msra.mxu0 0
      %937 = vmatprep.subr.bf16.mxu0 0
      %938 = vmatpush1.bf16.msra.mxu0 0
      %939 = vmatprep.subr.bf16.mxu0 0
      %940 = vmatpush1.bf16.msra.mxu0 0
      %941 = vmatprep.subr.bf16.mxu0 0
      %942 = vmatpush1.bf16.msra.mxu0 0
      %943 = vmatprep.subr.bf16.mxu0 0
      %944 = vmatpush1.bf16.msra.mxu0 0
      %945 = vmatprep.subr.bf16.mxu0 0
      %946 = vmatpush1.bf16.msra.mxu0 %v929
      %947 = vmatprep.subr.bf16.mxu0 0
      %948 = vmatpush2.bf16.msra.mxu0 0
      %949 = vmatprep.subr.bf16.mxu0 0
      %950 = vmatpush2.bf16.msra.mxu0 0
      %951 = vmatprep.subr.bf16.mxu0 0
      %952 = vmatpush2.bf16.msra.mxu0 0
      %953 = vmatprep.subr.bf16.mxu0 0
      %954 = vmatpush2.bf16.msra.mxu0 0
      %955 = vmatprep.subr.bf16.mxu0 0
      %956 = vmatpush2.bf16.msra.mxu0 0
      %957 = vmatprep.subr.bf16.mxu0 0
      %958 = vmatpush2.bf16.msra.mxu0 0
      %959 = vmatprep.subr.bf16.mxu0 0
      %960 = vmatpush2.bf16.msra.mxu0 0
      %961 = vmatprep.subr.bf16.mxu0 0
      %962 = vmatpush2.bf16.msra.mxu0 0
      %963 = vmatprep.mubr.bf16.mxu0 0
      %964 = vmatmul.mubr.bf16.gmra.mxu0 %v926
      %v965 = vpop.f32.mrf.mxu0
      %v966 = vadd.f32 %v919, %v965
      %v967 = vpop.f32.mrf.mxu0
      %v968 = vpop.f32.mrf.mxu0
      %v969 = vadd.f32 %v922, %v968
      %v970 = vpop.f32.mrf.mxu0
      %971 = vdwg.mxu0
      %v972 = vld [vmem:[#allocation2] sm:$0xff]
      %v973 = vld [vmem:[#allocation2 + $0x8] sm:$0xff]
      %v974 = vpack.c.bf16 %v973, %v972
      %976 = vrot.lane.b32.xlu0 %v974, 112
      %v977 = vpop.permute.xlu0 %976
      %978 = vrot.lane.b32.xlu0 %v974, 80
      %v979 = vpop.permute.xlu0 %978
      %v981 = vsel %vm610, %v977, 0
      %v984 = vsel %vm610, %v979, 0
      %986 = vmatprep.subr.bf16.mxu0 0
      %987 = vmatpush1.bf16.xpose.msra.mxu0 0
      %988 = vmatprep.subr.bf16.mxu0 0
      %989 = vmatpush1.bf16.xpose.msra.mxu0 0
      %990 = vmatprep.subr.bf16.mxu0 0
      %991 = vmatpush1.bf16.xpose.msra.mxu0 0
      %992 = vmatprep.subr.bf16.mxu0 0
      %993 = vmatpush1.bf16.xpose.msra.mxu0 0
      %994 = vmatprep.subr.bf16.mxu0 0
      %995 = vmatpush1.bf16.xpose.msra.mxu0 0
      %996 = vmatprep.subr.bf16.mxu0 0
      %997 = vmatpush1.bf16.xpose.msra.mxu0 0
      %998 = vmatprep.subr.bf16.mxu0 0
      %999 = vmatpush1.bf16.xpose.msra.mxu0 0
      %1000 = vmatprep.subr.bf16.mxu0 0
      %1001 = vmatpush1.bf16.xpose.msra.mxu0 %v984
      %1002 = vmatprep.subr.bf16.mxu0 0
      %1003 = vmatpush2.bf16.xpose.msra.mxu0 0
      %1004 = vmatprep.subr.bf16.mxu0 0
      %1005 = vmatpush2.bf16.xpose.msra.mxu0 0
      %1006 = vmatprep.subr.bf16.mxu0 0
      %1007 = vmatpush2.bf16.xpose.msra.mxu0 0
      %1008 = vmatprep.subr.bf16.mxu0 0
      %1009 = vmatpush2.bf16.xpose.msra.mxu0 0
      %1010 = vmatprep.subr.bf16.mxu0 0
      %1011 = vmatpush2.bf16.xpose.msra.mxu0 0
      %1012 = vmatprep.subr.bf16.mxu0 0
      %1013 = vmatpush2.bf16.xpose.msra.mxu0 0
      %1014 = vmatprep.subr.bf16.mxu0 0
      %1015 = vmatpush2.bf16.xpose.msra.mxu0 0
      %1016 = vmatprep.subr.bf16.mxu0 0
      %1017 = vmatpush2.bf16.xpose.msra.mxu0 0
      %1018 = vmatprep.mubr.bf16.mxu0 0
      %1019 = vmatmul.mubr.bf16.gmra.mxu0 %v981
      %v1020 = vpop.f32.mrf.mxu0
      %v1021 = vadd.f32 0.0, %v1020
      %v1022 = vpop.f32.mrf.mxu0
      %v1023 = vpop.f32.mrf.mxu0
      %v1024 = vadd.f32 0.0, %v1023
      %v1025 = vpop.f32.mrf.mxu0
      %1026 = vdwg.mxu0
      %v1027 = vmul.f32 %v1021, 0.35355338
      %v1028 = vmul.f32 %v1024, 0.35355338
      %v1029 = vsel %vm665, %v1027, -1e+30
      %v1030 = vsel %vm665, %v1028, -1e+30
      %v1031 = vsel %vm668, %v1029, -inf
      %1032 = vmax.xlane.f32.xlu0 %v1031
      %v1033 = vpop.xlane.xlu0 %1032
      %v1034 = vsel %vm668, %v1030, -inf
      %1035 = vmax.xlane.f32.xlu0 %v1034
      %v1036 = vpop.xlane.xlu0 %1035
      %v1037 = vsub.f32 %v1029, %v1033
      %v1038 = vsub.f32 %v1030, %v1036
      %v1039 = vmul.f32 %v1037, 1.442695
      %v1040 = vpow.pop %v1039
      %v1041 = vmul.f32 %v1038, 1.442695
      %v1042 = vpow.pop %v1041
      %v1043 = vsel %vm668, %v1040, 0.0
      %1044 = vadd.xlane.f32.xlu0 %v1043
      %v1045 = vpop.xlane.xlu0 %1044
      %v1046 = vsel %vm668, %v1042, 0.0
      %1047 = vadd.xlane.f32.xlu0 %v1046
      %v1048 = vpop.xlane.xlu0 %1047
      %v1049 = vrcp.pop %v1045
      %v1050 = vrcp.pop %v1048
      %v1051 = vmul.f32 %v1040, %v1049
      %v1052 = vmul.f32 %v1042, %v1050
      %v1053 = vsel %vm665, %v1051, 0.0
      %v1054 = vsel %vm665, %v1052, 0.0
      %v1055 = vpack.c.bf16 %v1054, %v1053
      %1056 = vrot.lane.b32.xlu0 %v974, 48
      %v1057 = vpop.permute.xlu0 %1056
      %v1060 = vsel %vm668, %v1055, 0
      %1062 = vmatprep.subr.bf16.mxu0 0
      %1063 = vmatpush1.bf16.msra.mxu0 0
      %1064 = vmatprep.subr.bf16.mxu0 0
      %1065 = vmatpush1.bf16.msra.mxu0 0
      %1066 = vmatprep.subr.bf16.mxu0 0
      %1067 = vmatpush1.bf16.msra.mxu0 0
      %1068 = vmatprep.subr.bf16.mxu0 0
      %1069 = vmatpush1.bf16.msra.mxu0 0
      %1070 = vmatprep.subr.bf16.mxu0 0
      %1071 = vmatpush1.bf16.msra.mxu0 0
      %1072 = vmatprep.subr.bf16.mxu0 0
      %1073 = vmatpush1.bf16.msra.mxu0 0
      %1074 = vmatprep.subr.bf16.mxu0 0
      %1075 = vmatpush1.bf16.msra.mxu0 0
      %1076 = vmatprep.subr.bf16.mxu0 0
      %1077 = vmatpush1.bf16.msra.mxu0 %v1057
      %1078 = vmatprep.subr.bf16.mxu0 0
      %1079 = vmatpush2.bf16.msra.mxu0 0
      %1080 = vmatprep.subr.bf16.mxu0 0
      %1081 = vmatpush2.bf16.msra.mxu0 0
      %1082 = vmatprep.subr.bf16.mxu0 0
      %1083 = vmatpush2.bf16.msra.mxu0 0
      %1084 = vmatprep.subr.bf16.mxu0 0
      %1085 = vmatpush2.bf16.msra.mxu0 0
      %1086 = vmatprep.subr.bf16.mxu0 0
      %1087 = vmatpush2.bf16.msra.mxu0 0
      %1088 = vmatprep.subr.bf16.mxu0 0
      %1089 = vmatpush2.bf16.msra.mxu0 0
      %1090 = vmatprep.subr.bf16.mxu0 0
      %1091 = vmatpush2.bf16.msra.mxu0 0
      %1092 = vmatprep.subr.bf16.mxu0 0
      %1093 = vmatpush2.bf16.msra.mxu0 0
      %1094 = vmatprep.mubr.bf16.mxu0 0
      %1095 = vmatmul.mubr.bf16.gmra.mxu0 %v1060
      %v1096 = vpop.f32.mrf.mxu0
      %v1097 = vadd.f32 0.0, %v1096
      %v1098 = vpop.f32.mrf.mxu0
      %v1099 = vpop.f32.mrf.mxu0
      %v1100 = vadd.f32 0.0, %v1099
      %v1101 = vpop.f32.mrf.mxu0
      %1102 = vdwg.mxu0
      %v1103 = vpack.c.bf16 %v1100, %v1097
      %s1104 = scalar_lea.vmem %s6, 8
      %v1105 = vld [vmem:[%s1104] sm:$0xf]
      %v1107 = vsel %vm610, %v1103, 0
      %v1110 = vsel %vm880, %v1105, 0
      %1112 = vmatprep.subr.bf16.mxu0 0
      %1113 = vmatpush1.bf16.msra.mxu0 0
      %1114 = vmatprep.subr.bf16.mxu0 0
      %1115 = vmatpush1.bf16.msra.mxu0 0
      %1116 = vmatprep.subr.bf16.mxu0 0
      %1117 = vmatpush1.bf16.msra.mxu0 0
      %1118 = vmatprep.subr.bf16.mxu0 0
      %1119 = vmatpush1.bf16.msra.mxu0 0
      %1120 = vmatprep.subr.bf16.mxu0 0
      %1121 = vmatpush1.bf16.msra.mxu0 0
      %1122 = vmatprep.subr.bf16.mxu0 0
      %1123 = vmatpush1.bf16.msra.mxu0 0
      %1124 = vmatprep.subr.bf16.mxu0 0
      %1125 = vmatpush1.bf16.msra.mxu0 0
      %1126 = vmatprep.subr.bf16.mxu0 0
      %1127 = vmatpush1.bf16.msra.mxu0 %v1110
      %1128 = vmatprep.subr.bf16.mxu0 0
      %1129 = vmatpush2.bf16.msra.mxu0 0
      %1130 = vmatprep.subr.bf16.mxu0 0
      %1131 = vmatpush2.bf16.msra.mxu0 0
      %1132 = vmatprep.subr.bf16.mxu0 0
      %1133 = vmatpush2.bf16.msra.mxu0 0
      %1134 = vmatprep.subr.bf16.mxu0 0
      %1135 = vmatpush2.bf16.msra.mxu0 0
      %1136 = vmatprep.subr.bf16.mxu0 0
      %1137 = vmatpush2.bf16.msra.mxu0 0
      %1138 = vmatprep.subr.bf16.mxu0 0
      %1139 = vmatpush2.bf16.msra.mxu0 0
      %1140 = vmatprep.subr.bf16.mxu0 0
      %1141 = vmatpush2.bf16.msra.mxu0 0
      %1142 = vmatprep.subr.bf16.mxu0 0
      %1143 = vmatpush2.bf16.msra.mxu0 0
      %1144 = vmatprep.mubr.bf16.mxu0 0
      %1145 = vmatmul.mubr.bf16.gmra.mxu0 %v1107
      %v1146 = vpop.f32.mrf.mxu0
      %v1147 = vadd.f32 0.0, %v1146
      %v1148 = vpop.f32.mrf.mxu0
      %v1149 = vpop.f32.mrf.mxu0
      %v1150 = vadd.f32 0.0, %v1149
      %v1151 = vpop.f32.mrf.mxu0
      %1152 = vdwg.mxu0
      %v1153 = vadd.f32 %v966, %v1147
      %v1154 = vadd.f32 %v969, %v1150
      %v1155 = vld [vmem:[#allocation2] sm:$0xff]
      %v1156 = vld [vmem:[#allocation2 + $0x8] sm:$0xff]
      %v1157 = vpack.c.bf16 %v1156, %v1155
      %1159 = vrot.lane.b32.xlu0 %v1157, 104
      %v1160 = vpop.permute.xlu0 %1159
      %1161 = vrot.lane.b32.xlu0 %v1157, 72
      %v1162 = vpop.permute.xlu0 %1161
      %v1164 = vsel %vm610, %v1160, 0
      %v1167 = vsel %vm610, %v1162, 0
      %1169 = vmatprep.subr.bf16.mxu0 0
      %1170 = vmatpush1.bf16.xpose.msra.mxu0 0
      %1171 = vmatprep.subr.bf16.mxu0 0
      %1172 = vmatpush1.bf16.xpose.msra.mxu0 0
      %1173 = vmatprep.subr.bf16.mxu0 0
      %1174 = vmatpush1.bf16.xpose.msra.mxu0 0
      %1175 = vmatprep.subr.bf16.mxu0 0
      %1176 = vmatpush1.bf16.xpose.msra.mxu0 0
      %1177 = vmatprep.subr.bf16.mxu0 0
      %1178 = vmatpush1.bf16.xpose.msra.mxu0 0
      %1179 = vmatprep.subr.bf16.mxu0 0
      %1180 = vmatpush1.bf16.xpose.msra.mxu0 0
      %1181 = vmatprep.subr.bf16.mxu0 0
      %1182 = vmatpush1.bf16.xpose.msra.mxu0 0
      %1183 = vmatprep.subr.bf16.mxu0 0
      %1184 = vmatpush1.bf16.xpose.msra.mxu0 %v1167
      %1185 = vmatprep.subr.bf16.mxu0 0
      %1186 = vmatpush2.bf16.xpose.msra.mxu0 0
      %1187 = vmatprep.subr.bf16.mxu0 0
      %1188 = vmatpush2.bf16.xpose.msra.mxu0 0
      %1189 = vmatprep.subr.bf16.mxu0 0
      %1190 = vmatpush2.bf16.xpose.msra.mxu0 0
      %1191 = vmatprep.subr.bf16.mxu0 0
      %1192 = vmatpush2.bf16.xpose.msra.mxu0 0
      %1193 = vmatprep.subr.bf16.mxu0 0
      %1194 = vmatpush2.bf16.xpose.msra.mxu0 0
      %1195 = vmatprep.subr.bf16.mxu0 0
      %1196 = vmatpush2.bf16.xpose.msra.mxu0 0
      %1197 = vmatprep.subr.bf16.mxu0 0
      %1198 = vmatpush2.bf16.xpose.msra.mxu0 0
      %1199 = vmatprep.subr.bf16.mxu0 0
      %1200 = vmatpush2.bf16.xpose.msra.mxu0 0
      %1201 = vmatprep.mubr.bf16.mxu0 0
      %1202 = vmatmul.mubr.bf16.gmra.mxu0 %v1164
      %v1203 = vpop.f32.mrf.mxu0
      %v1204 = vadd.f32 0.0, %v1203
      %v1205 = vpop.f32.mrf.mxu0
      %v1206 = vpop.f32.mrf.mxu0
      %v1207 = vadd.f32 0.0, %v1206
      %v1208 = vpop.f32.mrf.mxu0
      %1209 = vdwg.mxu0
      %v1210 = vmul.f32 %v1204, 0.35355338
      %v1211 = vmul.f32 %v1207, 0.35355338
      %v1212 = vsel %vm665, %v1210, -1e+30
      %v1213 = vsel %vm665, %v1211, -1e+30
      %v1214 = vsel %vm668, %v1212, -inf
      %1215 = vmax.xlane.f32.xlu0 %v1214
      %v1216 = vpop.xlane.xlu0 %1215
      %v1217 = vsel %vm668, %v1213, -inf
      %1218 = vmax.xlane.f32.xlu0 %v1217
      %v1219 = vpop.xlane.xlu0 %1218
      %v1220 = vsub.f32 %v1212, %v1216
      %v1221 = vsub.f32 %v1213, %v1219
      %v1222 = vmul.f32 %v1220, 1.442695
      %v1223 = vpow.pop %v1222
      %v1224 = vmul.f32 %v1221, 1.442695
      %v1225 = vpow.pop %v1224
      %v1226 = vsel %vm668, %v1223, 0.0
      %1227 = vadd.xlane.f32.xlu0 %v1226
      %v1228 = vpop.xlane.xlu0 %1227
      %v1229 = vsel %vm668, %v1225, 0.0
      %1230 = vadd.xlane.f32.xlu0 %v1229
      %v1231 = vpop.xlane.xlu0 %1230
      %v1232 = vrcp.pop %v1228
      %v1233 = vrcp.pop %v1231
      %v1234 = vmul.f32 %v1223, %v1232
      %v1235 = vmul.f32 %v1225, %v1233
      %v1236 = vsel %vm665, %v1234, 0.0
      %v1237 = vsel %vm665, %v1235, 0.0
      %v1238 = vpack.c.bf16 %v1237, %v1236
      %1239 = vrot.lane.b32.xlu0 %v1157, 40
      %v1240 = vpop.permute.xlu0 %1239
      %v1243 = vsel %vm668, %v1238, 0
      %1245 = vmatprep.subr.bf16.mxu0 0
      %1246 = vmatpush1.bf16.msra.mxu0 0
      %1247 = vmatprep.subr.bf16.mxu0 0
      %1248 = vmatpush1.bf16.msra.mxu0 0
      %1249 = vmatprep.subr.bf16.mxu0 0
      %1250 = vmatpush1.bf16.msra.mxu0 0
      %1251 = vmatprep.subr.bf16.mxu0 0
      %1252 = vmatpush1.bf16.msra.mxu0 0
      %1253 = vmatprep.subr.bf16.mxu0 0
      %1254 = vmatpush1.bf16.msra.mxu0 0
      %1255 = vmatprep.subr.bf16.mxu0 0
      %1256 = vmatpush1.bf16.msra.mxu0 0
      %1257 = vmatprep.subr.bf16.mxu0 0
      %1258 = vmatpush1.bf16.msra.mxu0 0
      %1259 = vmatprep.subr.bf16.mxu0 0
      %1260 = vmatpush1.bf16.msra.mxu0 %v1240
      %1261 = vmatprep.subr.bf16.mxu0 0
      %1262 = vmatpush2.bf16.msra.mxu0 0
      %1263 = vmatprep.subr.bf16.mxu0 0
      %1264 = vmatpush2.bf16.msra.mxu0 0
      %1265 = vmatprep.subr.bf16.mxu0 0
      %1266 = vmatpush2.bf16.msra.mxu0 0
      %1267 = vmatprep.subr.bf16.mxu0 0
      %1268 = vmatpush2.bf16.msra.mxu0 0
      %1269 = vmatprep.subr.bf16.mxu0 0
      %1270 = vmatpush2.bf16.msra.mxu0 0
      %1271 = vmatprep.subr.bf16.mxu0 0
      %1272 = vmatpush2.bf16.msra.mxu0 0
      %1273 = vmatprep.subr.bf16.mxu0 0
      %1274 = vmatpush2.bf16.msra.mxu0 0
      %1275 = vmatprep.subr.bf16.mxu0 0
      %1276 = vmatpush2.bf16.msra.mxu0 0
      %1277 = vmatprep.mubr.bf16.mxu0 0
      %1278 = vmatmul.mubr.bf16.gmra.mxu0 %v1243
      %v1279 = vpop.f32.mrf.mxu0
      %v1280 = vadd.f32 0.0, %v1279
      %v1281 = vpop.f32.mrf.mxu0
      %v1282 = vpop.f32.mrf.mxu0
      %v1283 = vadd.f32 0.0, %v1282
      %v1284 = vpop.f32.mrf.mxu0
      %1285 = vdwg.mxu0
      %v1286 = vpack.c.bf16 %v1283, %v1280
      %s1287 = scalar_lea.vmem %s6, 12
      %v1288 = vld [vmem:[%s1287] sm:$0xf]
      %v1290 = vsel %vm610, %v1286, 0
      %v1293 = vsel %vm880, %v1288, 0
      %1295 = vmatprep.subr.bf16.mxu0 0
      %1296 = vmatpush1.bf16.msra.mxu0 0
      %1297 = vmatprep.subr.bf16.mxu0 0
      %1298 = vmatpush1.bf16.msra.mxu0 0
      %1299 = vmatprep.subr.bf16.mxu0 0
      %1300 = vmatpush1.bf16.msra.mxu0 0
      %1301 = vmatprep.subr.bf16.mxu0 0
      %1302 = vmatpush1.bf16.msra.mxu0 0
      %1303 = vmatprep.subr.bf16.mxu0 0
      %1304 = vmatpush1.bf16.msra.mxu0 0
      %1305 = vmatprep.subr.bf16.mxu0 0
      %1306 = vmatpush1.bf16.msra.mxu0 0
      %1307 = vmatprep.subr.bf16.mxu0 0
      %1308 = vmatpush1.bf16.msra.mxu0 0
      %1309 = vmatprep.subr.bf16.mxu0 0
      %1310 = vmatpush1.bf16.msra.mxu0 %v1293
      %1311 = vmatprep.subr.bf16.mxu0 0
      %1312 = vmatpush2.bf16.msra.mxu0 0
      %1313 = vmatprep.subr.bf16.mxu0 0
      %1314 = vmatpush2.bf16.msra.mxu0 0
      %1315 = vmatprep.subr.bf16.mxu0 0
      %1316 = vmatpush2.bf16.msra.mxu0 0
      %1317 = vmatprep.subr.bf16.mxu0 0
      %1318 = vmatpush2.bf16.msra.mxu0 0
      %1319 = vmatprep.subr.bf16.mxu0 0
      %1320 = vmatpush2.bf16.msra.mxu0 0
      %1321 = vmatprep.subr.bf16.mxu0 0
      %1322 = vmatpush2.bf16.msra.mxu0 0
      %1323 = vmatprep.subr.bf16.mxu0 0
      %1324 = vmatpush2.bf16.msra.mxu0 0
      %1325 = vmatprep.subr.bf16.mxu0 0
      %1326 = vmatpush2.bf16.msra.mxu0 0
      %1327 = vmatprep.mubr.bf16.mxu0 0
      %1328 = vmatmul.mubr.bf16.gmra.mxu0 %v1290
      %v1329 = vpop.f32.mrf.mxu0
      %v1330 = vadd.f32 0.0, %v1329
      %v1331 = vpop.f32.mrf.mxu0
      %v1332 = vpop.f32.mrf.mxu0
      %v1333 = vadd.f32 0.0, %v1332
      %v1334 = vpop.f32.mrf.mxu0
      %1335 = vdwg.mxu0
      %v1336 = vadd.f32 %v1153, %v1330
      %v1337 = vadd.f32 %v1154, %v1333
      %v1338 = vadd.f32 %v483, %v1336
      %v1339 = vadd.f32 %v484, %v1337
      %v1340 = vld [vmem:[%s7] sm:$0x1]
      %v1342 = vlaneseq
      %v1343 = vshrl.u32 %v1342, 7
      %v1344 = vsub.s32 0, %v1343
      %v1345 = vrot.slane %v1340, %v1344
      %v1347 = vadd.f32 %v1338, %v1345
      %v1348 = vadd.f32 %v1339, %v1345
      %v1349 = vld [vmem:[%s8] sm:$0x1]
      %v1350 = vld [vmem:[%s9] sm:$0x1]
      %v1351 = vsel %vm489, %v1347, 0.0
      %1352 = vadd.xlane.f32.xlu0 %v1351
      %v1353 = vpop.xlane.xlu0 %1352
      %v1354 = vsel %vm489, %v1348, 0.0
      %1355 = vadd.xlane.f32.xlu0 %v1354
      %v1356 = vpop.xlane.xlu0 %1355
      %v1357 = vmul.f32 %v1353, %v496
      %v1358 = vmul.f32 %v1356, %v496
      %v1359 = vsub.f32 %v1347, %v1357
      %v1360 = vsub.f32 %v1348, %v1358
      %v1361 = vmul.f32 %v1359, %v1359
      %v1362 = vmul.f32 %v1360, %v1360
      %v1363 = vsel %vm489, %v1361, 0.0
      %1364 = vadd.xlane.f32.xlu0 %v1363
      %v1365 = vpop.xlane.xlu0 %1364
      %v1366 = vsel %vm489, %v1362, 0.0
      %1367 = vadd.xlane.f32.xlu0 %v1366
      %v1368 = vpop.xlane.xlu0 %1367
      %v1369 = vmul.f32 %v1365, %v496
      %v1370 = vmul.f32 %v1368, %v496
      %v1371 = vadd.f32 %v1369, 1e-05
      %v1372 = vadd.f32 %v1370, 1e-05
      %v1373 = vrsqrt.pop %v1371
      %v1374 = vrsqrt.pop %v1372
      %v1375 = vmul.f32 %v1359, %v1373
      %v1376 = vmul.f32 %v1360, %v1374
      %v1378 = vlaneseq
      %v1379 = vshrl.u32 %v1378, 7
      %v1380 = vsub.s32 0, %v1379
      %v1381 = vrot.slane %v1349, %v1380
      %v1383 = vmul.f32 %v1375, %v1381
      %v1384 = vmul.f32 %v1376, %v1381
      %v1386 = vlaneseq
      %v1387 = vshrl.u32 %v1386, 7
      %v1388 = vsub.s32 0, %v1387
      %v1389 = vrot.slane %v1350, %v1388
      %v1391 = vadd.f32 %v1383, %v1389
      %v1392 = vadd.f32 %v1384, %v1389
      %v1393 = vpack.c.bf16 %v1392, %v1391
      %v1394 = vld [vmem:[%s10] sm:$0xf]
      %v1395 = vld [vmem:[%s10 + $0x4] sm:$0xf]
      %v1396 = vld [vmem:[%s10 + $0x8] sm:$0xf]
      %v1397 = vld [vmem:[%s10 + $0xc] sm:$0xf]
      %v1398 = vld [vmem:[%s11] sm:$0x1]
      %v1400 = vlaneseq
      %v1401 = vshrl.u32 %v1400, 7
      %v1402 = vsub.s32 0, %v1401
      %v1403 = vrot.slane %v1398, %v1402
      %v1409 = vunpack.c.l.b16 %v1394
      %v1410 = vunpack.c.l.b16 %v1395
      %v1411 = vunpack.c.l.b16 %v1396
      %v1412 = vunpack.c.l.b16 %v1397
      %v1413 = vpack.c.b16 %v1410, %v1409
      %v1414 = vpack.c.b16 %v1412, %v1411
      %v1418 = vsel %vm489, %v1393, 0
      %1420 = vmatprep.subr.bf16.mxu0 0
      %1421 = vmatpush1.bf16.msra.mxu0 0
      %1422 = vmatprep.subr.bf16.mxu0 0
      %1423 = vmatpush1.bf16.msra.mxu0 0
      %1424 = vmatprep.subr.bf16.mxu0 0
      %1425 = vmatpush1.bf16.msra.mxu0 0
      %1426 = vmatprep.subr.bf16.mxu0 0
      %1427 = vmatpush1.bf16.msra.mxu0 0
      %1428 = vmatprep.subr.bf16.mxu0 0
      %1429 = vmatpush1.bf16.msra.mxu0 0
      %1430 = vmatprep.subr.bf16.mxu0 0
      %1431 = vmatpush1.bf16.msra.mxu0 0
      %1432 = vmatprep.subr.bf16.mxu0 0
      %1433 = vmatpush1.bf16.msra.mxu0 %v1414
      %1434 = vmatprep.subr.bf16.mxu0 0
      %1435 = vmatpush1.bf16.msra.mxu0 %v1413
      %1436 = vmatprep.subr.bf16.mxu0 0
      %1437 = vmatpush2.bf16.msra.mxu0 0
      %1438 = vmatprep.subr.bf16.mxu0 0
      %1439 = vmatpush2.bf16.msra.mxu0 0
      %1440 = vmatprep.subr.bf16.mxu0 0
      %1441 = vmatpush2.bf16.msra.mxu0 0
      %1442 = vmatprep.subr.bf16.mxu0 0
      %1443 = vmatpush2.bf16.msra.mxu0 0
      %1444 = vmatprep.subr.bf16.mxu0 0
      %1445 = vmatpush2.bf16.msra.mxu0 0
      %1446 = vmatprep.subr.bf16.mxu0 0
      %1447 = vmatpush2.bf16.msra.mxu0 0
      %1448 = vmatprep.subr.bf16.mxu0 0
      %1449 = vmatpush2.bf16.msra.mxu0 0
      %1450 = vmatprep.subr.bf16.mxu0 0
      %1451 = vmatpush2.bf16.msra.mxu0 0
      %1452 = vmatprep.mubr.bf16.mxu0 0
      %1453 = vmatmul.mubr.bf16.gmra.mxu0 %v1418
      %v1454 = vpop.f32.mrf.mxu0
      %v1455 = vadd.f32 %v1403, %v1454
      %v1456 = vpop.f32.mrf.mxu0
      %v1457 = vpop.f32.mrf.mxu0
      %v1458 = vadd.f32 %v1403, %v1457
      %v1459 = vpop.f32.mrf.mxu0
      %1460 = vdwg.mxu0
      %v1461 = vmax.f32 %v1455, 0.0
      %v1462 = vmax.f32 %v1458, 0.0
      %v1463 = vpack.c.bf16 %v1462, %v1461
      %v1464 = vld [vmem:[%s12] sm:$0xf]
      %v1465 = vld [vmem:[%s12 + $0x4] sm:$0xf]
      %v1466 = vld [vmem:[%s12 + $0x8] sm:$0xf]
      %v1467 = vld [vmem:[%s12 + $0xc] sm:$0xf]
      %v1468 = vld [vmem:[%s12 + $0x10] sm:$0xf]
      %v1469 = vld [vmem:[%s12 + $0x14] sm:$0xf]
      %v1470 = vld [vmem:[%s12 + $0x18] sm:$0xf]
      %v1471 = vld [vmem:[%s12 + $0x1c] sm:$0xf]
      %v1472 = vld [vmem:[%s13] sm:$0x1]
      %v1474 = vlaneseq
      %v1475 = vshrl.u32 %v1474, 7
      %v1476 = vsub.s32 0, %v1475
      %v1477 = vrot.slane %v1472, %v1476
      %v1487 = vunpack.c.l.b16 %v1464
      %v1488 = vunpack.c.l.b16 %v1465
      %v1489 = vunpack.c.l.b16 %v1466
      %v1490 = vunpack.c.l.b16 %v1467
      %v1491 = vunpack.c.l.b16 %v1468
      %v1492 = vunpack.c.l.b16 %v1469
      %v1493 = vunpack.c.l.b16 %v1470
      %v1494 = vunpack.c.l.b16 %v1471
      %v1495 = vpack.c.b16 %v1488, %v1487
      %v1496 = vpack.c.b16 %v1490, %v1489
      %v1497 = vpack.c.b16 %v1492, %v1491
      %v1498 = vpack.c.b16 %v1494, %v1493
      %vm1503 = vcmask 523264
      %v1505 = vsel %vm1503, %v1463, 0
      %1507 = vmatprep.subr.bf16.mxu0 0
      %1508 = vmatpush1.bf16.msra.mxu0 0
      %1509 = vmatprep.subr.bf16.mxu0 0
      %1510 = vmatpush1.bf16.msra.mxu0 0
      %1511 = vmatprep.subr.bf16.mxu0 0
      %1512 = vmatpush1.bf16.msra.mxu0 0
      %1513 = vmatprep.subr.bf16.mxu0 0
      %1514 = vmatpush1.bf16.msra.mxu0 0
      %1515 = vmatprep.subr.bf16.mxu0 0
      %1516 = vmatpush1.bf16.msra.mxu0 %v1498
      %1517 = vmatprep.subr.bf16.mxu0 0
      %1518 = vmatpush1.bf16.msra.mxu0 %v1497
      %1519 = vmatprep.subr.bf16.mxu0 0
      %1520 = vmatpush1.bf16.msra.mxu0 %v1496
      %1521 = vmatprep.subr.bf16.mxu0 0
      %1522 = vmatpush1.bf16.msra.mxu0 %v1495
      %1523 = vmatprep.subr.bf16.mxu0 0
      %1524 = vmatpush2.bf16.msra.mxu0 0
      %1525 = vmatprep.subr.bf16.mxu0 0
      %1526 = vmatpush2.bf16.msra.mxu0 0
      %1527 = vmatprep.subr.bf16.mxu0 0
      %1528 = vmatpush2.bf16.msra.mxu0 0
      %1529 = vmatprep.subr.bf16.mxu0 0
      %1530 = vmatpush2.bf16.msra.mxu0 0
      %1531 = vmatprep.subr.bf16.mxu0 0
      %1532 = vmatpush2.bf16.msra.mxu0 0
      %1533 = vmatprep.subr.bf16.mxu0 0
      %1534 = vmatpush2.bf16.msra.mxu0 0
      %1535 = vmatprep.subr.bf16.mxu0 0
      %1536 = vmatpush2.bf16.msra.mxu0 0
      %1537 = vmatprep.subr.bf16.mxu0 0
      %1538 = vmatpush2.bf16.msra.mxu0 0
      %1539 = vmatprep.mubr.bf16.mxu0 0
      %1540 = vmatmul.mubr.bf16.gmra.mxu0 %v1505
      %v1541 = vpop.f32.mrf.mxu0
      %v1542 = vadd.f32 %v1477, %v1541
      %v1543 = vpop.f32.mrf.mxu0
      %v1544 = vpop.f32.mrf.mxu0
      %v1545 = vadd.f32 %v1477, %v1544
      %v1546 = vpop.f32.mrf.mxu0
      %1547 = vdwg.mxu0
      %v1548 = vadd.f32 %v1347, %v1542
      %v1549 = vadd.f32 %v1348, %v1545
      %1550 = vst.msk [vmem:[%s481] sm:$0xff] %vm489, %v1548
      %1551 = vst.msk [vmem:[%s481 + $0x8] sm:$0xff] %vm489, %v1549
      %p1552 = scmp.lt.s32.totalorder %s25, 1
      %s1553 = scalar_select %p1552, %s25, 1
      %s1554 = smul.addr %s1553, 2
      %s1555 = smul.addr %s1554, 8
      %s1556 = scalar_lea.vmem %s14, %s1555
      // Predicated region
      $region77: #{encoder_forward.9} parent=75 // pred_check
        %p1557 = pneg %p347
      $region78: #{encoder_forward.9} parent=75 // pred_check_branch
        %1559 = sbr.rel (%p1557) target = $region80
      $region79: #{encoder_forward.9} parent=75 // pred_region
        _
      $region80: #{encoder_forward.9} parent=75 // pred_fallthru
        _
    $region76: #{encoder_forward.9} parent=5 // pred_fallthru
      _
    %p1560 = scmp.le.s32.totalorder 2, %s20
    // Predicated region
    $region81: #{encoder_forward.9} parent=5 // pred_check
      %p1561 = pneg %p1560
    $region82: #{encoder_forward.9} parent=5 // pred_check_branch
      %1563 = sbr.rel (%p1561) target = $region84
    $region83: #{encoder_forward.9} parent=5 // pred_region
      %s1564 = ssub.s32 %s20, 2
      // Predicated region
      $region85: #{encoder_forward.9} parent=83 // pred_check
        %p1565 = pneg %p353
      $region86: #{encoder_forward.9} parent=83 // pred_check_branch
        %1567 = sbr.rel (%p1565) target = $region88
      $region87: #{encoder_forward.9} parent=83 // pred_region
        %p1568 = scmp.lt.s32.totalorder %s26, 1
        %s1569 = scalar_select %p1568, %s26, 1
        %s1570 = smul.addr %s1569, 2
        %s1571 = smul.addr %s1570, 8
        %s1572 = scalar_lea.vmem %s14, %s1571
      $region88: #{encoder_forward.9} parent=83 // pred_fallthru
        _
    $region84: #{encoder_forward.9} parent=5 // pred_fallthru
      _
  $region6: #{encoder_forward.9} parent=0 // loop_footer
    %s24 = sadd.s32 1, %s20
  $region7: #{encoder_forward.9} parent=0 // loop_footer_branch
    %19 = sbr.rel target = $region3
  $region8: #{encoder_forward.9} parent=0 // loop_exit
    _

</llo_original>
